<compile_context>
chip_gen: v5e
topology: v5e:2x2
jax: 0.10.0
libtpu: 0.0.40
codegen_flags: <defaults>
</compile_context>

<pallas_src>
import functools
import math

import jax
import jax.numpy as jnp
from jax.experimental import pallas as pl
from jax.experimental.pallas import tpu as pltpu


def _choose_tile(n, target, quantum):
    """Largest divisor of n that is a multiple of `quantum` and <= target, else n."""
    for d in range(min(n, target), quantum - 1, -1):
        if n % d == 0 and d % quantum == 0:
            return d
    return n


# ----------------------------------------------------------------------------
# Pallas kernel: conv1d ('same', stride 1, dilation 1, no bias) with BN scale
# pre-folded into the weights, + BN shift, optional fused 1x1-conv residual
# branch (+ its BN shift) and optional Hardtanh(0, 20).
# ----------------------------------------------------------------------------
def _conv_bn_kernel(*refs, TT, K, pad, HR, apply_act, has_halo, has_res):
    it = iter(refs)
    x_ref = next(it)
    lo_ref = next(it) if has_halo else None
    hi_ref = next(it) if has_halo else None
    w_ref = next(it)
    shift_ref = next(it)
    if has_res:
        xr_ref, wr_ref, shiftr_ref = next(it), next(it), next(it)
    out_ref = next(it)
    win_ref = next(it) if pad > 0 else None

    xc = x_ref[0]  # (TT, Ci) in compute dtype

    if pad > 0:
        t = pl.program_id(2)
        zeros = jnp.zeros((HR,) + xc.shape[1:], xc.dtype)
        if has_halo:
            lo = jnp.where(t == 0, zeros, lo_ref[0])
            hi = jnp.where(t == pl.num_programs(2) - 1, zeros, hi_ref[0])
        else:
            lo = zeros
            hi = zeros
        # Assemble the haloed window [HR | TT | HR] in VMEM scratch (aligned pieces).
        win_ref[0:HR] = lo
        win_ref[HR:HR + TT] = xc
        win_ref[HR + TT:HR + TT + HR] = hi
        off = HR - pad
        tap = lambda k: win_ref[off + k: off + k + TT, :]
    else:
        tap = lambda k: xc

    # Conv as a sum of K (TT, Ci) @ (Ci, TCo) MXU matmuls with f32 accumulation.
    acc = jnp.dot(tap(0), w_ref[0], preferred_element_type=jnp.float32)
    for k in range(1, K):
        acc = acc + jnp.dot(tap(k), w_ref[k], preferred_element_type=jnp.float32)

    # BatchNorm1d (eval): scale already folded into the weights -> only shift.
    y = acc + shift_ref[...]

    if has_res:
        # Fused residual branch: 1x1 conv + BN shift, then joint activation below.
        y = y + jnp.dot(xr_ref[0], wr_ref[...], preferred_element_type=jnp.float32)
        y = y + shiftr_ref[...]

    if apply_act:
        y = jnp.clip(y, 0.0, 20.0)  # nn.Hardtanh(min_val=0.0, max_val=20.0)

    out_ref[0] = y.astype(out_ref.dtype)


def conv_bn_act_pallas(x, w_folded, shift, *, apply_act, res=None, out_dtype=None,
                       time_tile=256, co_tile=256):
    """Fused MaskedConv1d('same', stride 1) + BatchNorm1d(eval) [+ fused 1x1-conv
    residual branch] [+ Hardtanh(0,20)].

    x:        (B, T, Ci)   activations in the compute dtype (e.g. bf16)
    w_folded: (K, Ci, Co)  conv weights with the BN scale folded in
    shift:    (Co,)        BN shift, kept in f32
    res:      optional (xr (B,T,Cr), wr (Cr,Co) folded, shiftr (Co,)) 1x1 branch
    """
    B, T, Ci = x.shape
    K, _, Co = w_folded.shape
    pad = K // 2
    cdt = x.dtype
    out_dtype = out_dtype or cdt

    w_folded = w_folded.astype(cdt)
    shift2 = shift.reshape(1, Co).astype(jnp.float32)

    # Halo rows rounded up to 16 so the scratch-window pieces stay tile-aligned
    # even for packed bf16 sublanes.
    HR = ((pad + 15) // 16) * 16 if pad > 0 else 0
    TT = _choose_tile(T, time_tile, max(HR, 16))
    nT = T // TT
    TCo = _choose_tile(Co, co_tile, 128)
    nCo = Co // TCo
    has_halo = (pad > 0) and (nT > 1)
    has_res = res is not None

    grid = (B, nCo, nT)  # T innermost -> (K, Ci, TCo) weight slab resident in VMEM

    in_specs = [pl.BlockSpec((1, TT, Ci), lambda b, c, t: (b, t, 0))]
    args = [x]
    if has_halo:
        tpb = TT // HR        # halo blocks per time tile
        last_hb = T // HR - 1  # last valid halo-block index
        in_specs += [
            pl.BlockSpec((1, HR, Ci),
                         lambda b, c, t: (b, jnp.maximum(t * tpb - 1, 0), 0)),
            pl.BlockSpec((1, HR, Ci),
                         lambda b, c, t: (b, jnp.minimum((t + 1) * tpb, last_hb), 0)),
        ]
        args += [x, x]  # same array, neighbour-tile views (zero-masked at edges)
    in_specs += [
        pl.BlockSpec((K, Ci, TCo), lambda b, c, t: (0, 0, c)),
        pl.BlockSpec((1, TCo), lambda b, c, t: (0, c)),
    ]
    args += [w_folded, shift2]

    Cr = 0
    if has_res:
        xr, wr, shiftr = res
        Cr = xr.shape[-1]
        xr = xr.astype(cdt)
        wr = wr.astype(cdt)
        in_specs += [
            pl.BlockSpec((1, TT, Cr), lambda b, c, t: (b, t, 0)),
            pl.BlockSpec((Cr, TCo), lambda b, c, t: (0, c)),
            pl.BlockSpec((1, TCo), lambda b, c, t: (0, c)),
        ]
        args += [xr, wr, shiftr.reshape(1, Co).astype(jnp.float32)]

    out_spec = pl.BlockSpec((1, TT, TCo), lambda b, c, t: (b, t, c))

    scratch_shapes = []
    if pad > 0:
        scratch_shapes.append(pltpu.VMEM((TT + 2 * HR, Ci), cdt))

    # VMEM budget (double-buffered blocks + scratch) with explicit headroom.
    esz = lambda shape, dt: math.prod(shape) * jnp.dtype(dt).itemsize
    blk_bytes = (esz((1, TT, Ci), cdt) + esz((K, Ci, TCo), cdt)
                 + esz((1, TCo), jnp.float32) + esz((1, TT, TCo), out_dtype))
    if has_halo:
        blk_bytes += 2 * esz((1, HR, Ci), cdt)
    if has_res:
        blk_bytes += (esz((1, TT, Cr), cdt) + esz((Cr, TCo), cdt)
                      + esz((1, TCo), jnp.float32))
    vmem_need = 2 * blk_bytes + (esz((TT + 2 * HR, Ci), cdt) if pad > 0 else 0)
    vmem_limit = int(min(max(int(vmem_need * 1.3) + (2 << 20), 32 << 20), 112 << 20))

    flops = 2 * B * T * K * Ci * Co
    bytes_accessed = (x.size * x.dtype.itemsize + w_folded.size * w_folded.dtype.itemsize
                      + B * T * Co * jnp.dtype(out_dtype).itemsize)
    if has_res:
        flops += 2 * B * T * Cr * Co
        bytes_accessed += args[-3].size * cdt.itemsize + args[-2].size * cdt.itemsize

    kernel = functools.partial(
        _conv_bn_kernel, TT=TT, K=K, pad=pad, HR=HR,
        apply_act=apply_act, has_halo=has_halo, has_res=has_res)

    return pl.pallas_call(
        kernel,
        out_shape=jax.ShapeDtypeStruct((B, T, Co), out_dtype),
        grid=grid,
        in_specs=in_specs,
        out_specs=out_spec,
        scratch_shapes=scratch_shapes,
        compiler_params=pltpu.CompilerParams(
            dimension_semantics=("parallel", "parallel", "parallel"),
            vmem_limit_bytes=vmem_limit),
        cost_estimate=pl.CostEstimate(
            flops=int(flops), transcendentals=0, bytes_accessed=int(bytes_accessed)),
    )(*args)


# ----------------------------------------------------------------------------
# Parameter construction (deterministic, synthetic; BN pre-folded for the kernel)
# ----------------------------------------------------------------------------
def make_conv_bn_params(key, cin, cout, k):
    kw, kg, kb, km, kv = jax.random.split(key, 5)
    w = jax.random.normal(kw, (cout, cin, k), jnp.float32) / math.sqrt(cin * k)
    gamma = 1.0 + 0.1 * jax.random.normal(kg, (cout,), jnp.float32)
    beta = 0.2 * jax.random.normal(kb, (cout,), jnp.float32)
    mean = 0.2 * jax.random.normal(km, (cout,), jnp.float32)
    var = jnp.abs(jax.random.normal(kv, (cout,), jnp.float32)) + 0.5
    eps = 0.001
    scale = gamma / jnp.sqrt(var + eps)          # eval-mode BN folded to affine
    shift = beta - mean * scale
    w_kico = jnp.transpose(w, (2, 1, 0))         # (K, Ci, Co) for the kernel
    return {
        "w": w, "gamma": gamma, "beta": beta, "mean": mean, "var": var, "eps": eps,
        "w_folded": w_kico * scale[None, None, :],  # BN scale folded into conv
        "shift": shift,
    }


# ----------------------------------------------------------------------------
# JasperBlock forward (Pallas) and pure-JAX reference
# ----------------------------------------------------------------------------
def jasper_block_forward(xs, conv_params, res_params, *, compute_dtype=jnp.bfloat16,
                         time_tile=256, co_tile=256):
    # xs: dense-residual input list of (B, C, T) tensors (PyTorch NCW layout).
    # Transpose to (B, T, C) once at the block boundary; everything stays BTC.
    orig_dtype = xs[-1].dtype
    h = jnp.transpose(xs[-1], (0, 2, 1)).astype(compute_dtype)
    for p in conv_params[:-1]:
        h = conv_bn_act_pallas(h, p["w_folded"], p["shift"], apply_act=True,
                               time_tile=time_tile, co_tile=co_tile)
    # Last main-chain conv+BN fused with the 1x1-conv+BN residual branch
    # (residual_panes=[inplanes] -> one pane), the add and the block-output
    # Hardtanh (self.out).
    rp = res_params[0]
    x0 = jnp.transpose(xs[0], (0, 2, 1)).astype(compute_dtype)
    p = conv_params[-1]
    out = conv_bn_act_pallas(h, p["w_folded"], p["shift"], apply_act=True,
                             out_dtype=orig_dtype,
                             res=(x0, rp["w_folded"][0], rp["shift"]),
                             time_tile=time_tile, co_tile=co_tile)
    # TODO(synk): nn.Dropout(p=0.2) is identity in eval mode; training-mode dropout
    # RNG, training-mode BatchNorm batch stats and the use_conv_mask=True length
    # masking path are not implemented (module is instantiated without them).
    out_ncw = jnp.transpose(out, (0, 2, 1))
    return xs + [out_ncw]  # dense_residual=True path of the PyTorch module


def reference_forward(xs, conv_params, res_params):
    def conv1d_ncw(x, w, pad):
        return jax.lax.conv_general_dilated(
            x, w, window_strides=(1,), padding=[(pad, pad)],
            dimension_numbers=("NCH", "OIH", "NCH"),
            precision=jax.lax.Precision.HIGHEST)

    def bn(x, p):
        inv = 1.0 / jnp.sqrt(p["var"] + p["eps"])
        return ((x - p["mean"][None, :, None]) * inv[None, :, None]
                * p["gamma"][None, :, None] + p["beta"][None, :, None])

    out = xs[-1]
    n = len(conv_params)
    for i, p in enumerate(conv_params):
        out = bn(conv1d_ncw(out, p["w"], p["w"].shape[-1] // 2), p)
        if i < n - 1:
            out = jnp.clip(out, 0.0, 20.0)
    for i, rp in enumerate(res_params):
        out = out + bn(conv1d_ncw(xs[i], rp["w"], 0), rp)
    out = jnp.clip(out, 0.0, 20.0)
    return out


if __name__ == "__main__":
    B, Cin, Cout, T = 2, 64, 256, 512
    K, repeat = 11, 3

    key = jax.random.PRNGKey(0)
    keys = jax.random.split(key, repeat + 2)

    # Main chain: repeat x (conv k=11 + BN), inplanes -> planes -> ... -> planes.
    conv_params = []
    cin_loop = Cin
    for r in range(repeat):
        conv_params.append(make_conv_bn_params(keys[r], cin_loop, Cout, K))
        cin_loop = Cout
    # Residual branch for residual_panes=[inplanes]: 1x1 conv + BN.
    res_params = [make_conv_bn_params(keys[repeat], Cin, Cout, 1)]

    x = jax.random.normal(keys[repeat + 1], (B, Cin, T), jnp.float32)
    xs = [x]

    ref = reference_forward(xs, conv_params, res_params)

    # 1) Same kernels run in f32 compute: tight semantic check (padding, halos,
    #    BN fold, residual ordering, Hardtanh).
    out32 = jasper_block_forward(xs, conv_params, res_params,
                                 compute_dtype=jnp.float32)[-1]
    jax.block_until_ready(out32)
    assert out32.shape == (B, Cout, T)
    err32 = float(jnp.max(jnp.abs(out32 - ref)))
    assert jnp.allclose(out32, ref, atol=5e-3, rtol=5e-3), err32

    # 2) Performance path: bf16 activations/weights with f32 MXU accumulation;
    #    smaller tiles so the T- and Co-tiling grid axes are both exercised.
    out16 = jasper_block_forward(xs, conv_params, res_params,
                                 compute_dtype=jnp.bfloat16,
                                 time_tile=128, co_tile=128)[-1]
    jax.block_until_ready(out16)
    out16 = out16.astype(jnp.float32)
    err16 = float(jnp.max(jnp.abs(out16 - ref)))
    assert jnp.allclose(out16, ref, atol=0.1, rtol=0.05), err16

    print("KERNEL_OK")
</pallas_src>

<mosaic_0001>
module attributes {stable_mosaic.version = 11 : i64} {
  func.func @_conv_bn_kernel(%arg0: i32, %arg1: i32, %arg2: i32, %arg3: memref<1x256x64xf32, #tpu.memory_space<vmem>>, %arg4: memref<1x16x64xf32, #tpu.memory_space<vmem>>, %arg5: memref<1x16x64xf32, #tpu.memory_space<vmem>>, %arg6: memref<11x64x256xf32, #tpu.memory_space<vmem>>, %arg7: memref<1x256xf32, #tpu.memory_space<vmem>>, %arg8: memref<1x256x256xf32, #tpu.memory_space<vmem>>, %arg9: memref<288x64xf32, #tpu.memory_space<vmem>>) attributes {dimension_semantics = [#tpu.dimension_semantics<parallel>, #tpu.dimension_semantics<parallel>, #tpu.dimension_semantics<parallel>], iteration_bounds = array<i64: 2, 1, 2>, scalar_prefetch = 0 : i64, scratch_operands = 1 : i64, tpu.core_type = #tpu.core_type<tc>, window_params = [{transform_indices = @transform_0, window_bounds = array<i64: 1, 256, 64>}, {transform_indices = @transform_1, window_bounds = array<i64: 1, 16, 64>}, {transform_indices = @transform_2, window_bounds = array<i64: 1, 16, 64>}, {transform_indices = @transform_3, window_bounds = array<i64: 11, 64, 256>}, {transform_indices = @transform_4, window_bounds = array<i64: 1, 256>}, {transform_indices = @transform_5, window_bounds = array<i64: 1, 256, 256>}]} {
    %c0 = arith.constant 0 : index
    %c0_0 = arith.constant 0 : index
    %c0_1 = arith.constant 0 : index
    %0 = vector.load %arg3[%c0, %c0_0, %c0_1] : memref<1x256x64xf32, #tpu.memory_space<vmem>>, vector<1x256x64xf32>
    %1 = vector.shape_cast %0 : vector<1x256x64xf32> to vector<256x64xf32>
    %cst = arith.constant 0.000000e+00 : f32
    %2 = vector.broadcast %cst : f32 to vector<16x64xf32>
    %c0_i32 = arith.constant 0 : i32
    %3 = arith.cmpi eq, %arg2, %c0_i32 : i32
    %c0_2 = arith.constant 0 : index
    %c0_3 = arith.constant 0 : index
    %c0_4 = arith.constant 0 : index
    %4 = vector.load %arg4[%c0_2, %c0_3, %c0_4] : memref<1x16x64xf32, #tpu.memory_space<vmem>>, vector<1x16x64xf32>
    %5 = vector.shape_cast %4 : vector<1x16x64xf32> to vector<16x64xf32>
    %6 = arith.select %3, %2, %5 : vector<16x64xf32>
    %c1_i32 = arith.constant 1 : i32
    %7 = arith.cmpi eq, %arg2, %c1_i32 : i32
    %c0_5 = arith.constant 0 : index
    %c0_6 = arith.constant 0 : index
    %c0_7 = arith.constant 0 : index
    %8 = vector.load %arg5[%c0_5, %c0_6, %c0_7] : memref<1x16x64xf32, #tpu.memory_space<vmem>>, vector<1x16x64xf32>
    %9 = vector.shape_cast %8 : vector<1x16x64xf32> to vector<16x64xf32>
    %10 = arith.select %7, %2, %9 : vector<16x64xf32>
    %c0_8 = arith.constant 0 : index
    %c0_9 = arith.constant 0 : index
    %11 = vector.load %arg9[%c0_8, %c0_9] : memref<288x64xf32, #tpu.memory_space<vmem>>, vector<16x64xf32>
    tpu.vector_store %arg9[%c0_8, %c0_9], %6 {strides = array<i32>} : memref<288x64xf32, #tpu.memory_space<vmem>>, vector<16x64xf32>,
    %c16 = arith.constant 16 : index
    %c0_10 = arith.constant 0 : index
    %12 = vector.load %arg9[%c16, %c0_10] : memref<288x64xf32, #tpu.memory_space<vmem>>, vector<256x64xf32>
    tpu.vector_store %arg9[%c16, %c0_10], %1 {strides = array<i32>} : memref<288x64xf32, #tpu.memory_space<vmem>>, vector<256x64xf32>,
    %c272 = arith.constant 272 : index
    %c0_11 = arith.constant 0 : index
    %13 = vector.load %arg9[%c272, %c0_11] : memref<288x64xf32, #tpu.memory_space<vmem>>, vector<16x64xf32>
    tpu.vector_store %arg9[%c272, %c0_11], %10 {strides = array<i32>} : memref<288x64xf32, #tpu.memory_space<vmem>>, vector<16x64xf32>,
    %c11 = arith.constant 11 : index
    %c0_12 = arith.constant 0 : index
    %14 = vector.load %arg9[%c11, %c0_12] : memref<288x64xf32, #tpu.memory_space<vmem>>, vector<256x64xf32>
    %c0_13 = arith.constant 0 : index
    %c0_14 = arith.constant 0 : index
    %c0_15 = arith.constant 0 : index
    %15 = vector.load %arg6[%c0_13, %c0_14, %c0_15] : memref<11x64x256xf32, #tpu.memory_space<vmem>>, vector<1x64x256xf32>
    %16 = vector.shape_cast %15 : vector<1x64x256xf32> to vector<64x256xf32>
    %cst_16 = arith.constant dense<0.000000e+00> : vector<256x256xf32>
    %17 = tpu.matmul %14, %16, %cst_16 {dimension_numbers = #tpu.dot_dimension_numbers<[1], [0], [0], [1], [0, 0, 1, 1], [], []>} : vector<256x64xf32>, vector<64x256xf32>, vector<256x256xf32> -> vector<256x256xf32>
    %c12 = arith.constant 12 : index
    %c0_17 = arith.constant 0 : index
    %18 = vector.load %arg9[%c12, %c0_17] : memref<288x64xf32, #tpu.memory_space<vmem>>, vector<256x64xf32>
    %c1 = arith.constant 1 : index
    %c0_18 = arith.constant 0 : index
    %c0_19 = arith.constant 0 : index
    %19 = vector.load %arg6[%c1, %c0_18, %c0_19] : memref<11x64x256xf32, #tpu.memory_space<vmem>>, vector<1x64x256xf32>
    %20 = vector.shape_cast %19 : vector<1x64x256xf32> to vector<64x256xf32>
    %cst_20 = arith.constant dense<0.000000e+00> : vector<256x256xf32>
    %21 = tpu.matmul %18, %20, %cst_20 {dimension_numbers = #tpu.dot_dimension_numbers<[1], [0], [0], [1], [0, 0, 1, 1], [], []>} : vector<256x64xf32>, vector<64x256xf32>, vector<256x256xf32> -> vector<256x256xf32>
    %22 = arith.addf %17, %21 : vector<256x256xf32>
    %c13 = arith.constant 13 : index
    %c0_21 = arith.constant 0 : index
    %23 = vector.load %arg9[%c13, %c0_21] : memref<288x64xf32, #tpu.memory_space<vmem>>, vector<256x64xf32>
    %c2 = arith.constant 2 : index
    %c0_22 = arith.constant 0 : index
    %c0_23 = arith.constant 0 : index
    %24 = vector.load %arg6[%c2, %c0_22, %c0_23] : memref<11x64x256xf32, #tpu.memory_space<vmem>>, vector<1x64x256xf32>
    %25 = vector.shape_cast %24 : vector<1x64x256xf32> to vector<64x256xf32>
    %cst_24 = arith.constant dense<0.000000e+00> : vector<256x256xf32>
    %26 = tpu.matmul %23, %25, %cst_24 {dimension_numbers = #tpu.dot_dimension_numbers<[1], [0], [0], [1], [0, 0, 1, 1], [], []>} : vector<256x64xf32>, vector<64x256xf32>, vector<256x256xf32> -> vector<256x256xf32>
    %27 = arith.addf %22, %26 : vector<256x256xf32>
    %c14 = arith.constant 14 : index
    %c0_25 = arith.constant 0 : index
    %28 = vector.load %arg9[%c14, %c0_25] : memref<288x64xf32, #tpu.memory_space<vmem>>, vector<256x64xf32>
    %c3 = arith.constant 3 : index
    %c0_26 = arith.constant 0 : index
    %c0_27 = arith.constant 0 : index
    %29 = vector.load %arg6[%c3, %c0_26, %c0_27] : memref<11x64x256xf32, #tpu.memory_space<vmem>>, vector<1x64x256xf32>
    %30 = vector.shape_cast %29 : vector<1x64x256xf32> to vector<64x256xf32>
    %cst_28 = arith.constant dense<0.000000e+00> : vector<256x256xf32>
    %31 = tpu.matmul %28, %30, %cst_28 {dimension_numbers = #tpu.dot_dimension_numbers<[1], [0], [0], [1], [0, 0, 1, 1], [], []>} : vector<256x64xf32>, vector<64x256xf32>, vector<256x256xf32> -> vector<256x256xf32>
    %32 = arith.addf %27, %31 : vector<256x256xf32>
    %c15 = arith.constant 15 : index
    %c0_29 = arith.constant 0 : index
    %33 = vector.load %arg9[%c15, %c0_29] : memref<288x64xf32, #tpu.memory_space<vmem>>, vector<256x64xf32>
    %c4 = arith.constant 4 : index
    %c0_30 = arith.constant 0 : index
    %c0_31 = arith.constant 0 : index
    %34 = vector.load %arg6[%c4, %c0_30, %c0_31] : memref<11x64x256xf32, #tpu.memory_space<vmem>>, vector<1x64x256xf32>
    %35 = vector.shape_cast %34 : vector<1x64x256xf32> to vector<64x256xf32>
    %cst_32 = arith.constant dense<0.000000e+00> : vector<256x256xf32>
    %36 = tpu.matmul %33, %35, %cst_32 {dimension_numbers = #tpu.dot_dimension_numbers<[1], [0], [0], [1], [0, 0, 1, 1], [], []>} : vector<256x64xf32>, vector<64x256xf32>, vector<256x256xf32> -> vector<256x256xf32>
    %37 = arith.addf %32, %36 : vector<256x256xf32>
    %c16_33 = arith.constant 16 : index
    %c0_34 = arith.constant 0 : index
    %38 = vector.load %arg9[%c16_33, %c0_34] : memref<288x64xf32, #tpu.memory_space<vmem>>, vector<256x64xf32>
    %c5 = arith.constant 5 : index
    %c0_35 = arith.constant 0 : index
    %c0_36 = arith.constant 0 : index
    %39 = vector.load %arg6[%c5, %c0_35, %c0_36] : memref<11x64x256xf32, #tpu.memory_space<vmem>>, vector<1x64x256xf32>
    %40 = vector.shape_cast %39 : vector<1x64x256xf32> to vector<64x256xf32>
    %cst_37 = arith.constant dense<0.000000e+00> : vector<256x256xf32>
    %41 = tpu.matmul %38, %40, %cst_37 {dimension_numbers = #tpu.dot_dimension_numbers<[1], [0], [0], [1], [0, 0, 1, 1], [], []>} : vector<256x64xf32>, vector<64x256xf32>, vector<256x256xf32> -> vector<256x256xf32>
    %42 = arith.addf %37, %41 : vector<256x256xf32>
    %c17 = arith.constant 17 : index
    %c0_38 = arith.constant 0 : index
    %43 = vector.load %arg9[%c17, %c0_38] : memref<288x64xf32, #tpu.memory_space<vmem>>, vector<256x64xf32>
    %c6 = arith.constant 6 : index
    %c0_39 = arith.constant 0 : index
    %c0_40 = arith.constant 0 : index
    %44 = vector.load %arg6[%c6, %c0_39, %c0_40] : memref<11x64x256xf32, #tpu.memory_space<vmem>>, vector<1x64x256xf32>
    %45 = vector.shape_cast %44 : vector<1x64x256xf32> to vector<64x256xf32>
    %cst_41 = arith.constant dense<0.000000e+00> : vector<256x256xf32>
    %46 = tpu.matmul %43, %45, %cst_41 {dimension_numbers = #tpu.dot_dimension_numbers<[1], [0], [0], [1], [0, 0, 1, 1], [], []>} : vector<256x64xf32>, vector<64x256xf32>, vector<256x256xf32> -> vector<256x256xf32>
    %47 = arith.addf %42, %46 : vector<256x256xf32>
    %c18 = arith.constant 18 : index
    %c0_42 = arith.constant 0 : index
    %48 = vector.load %arg9[%c18, %c0_42] : memref<288x64xf32, #tpu.memory_space<vmem>>, vector<256x64xf32>
    %c7 = arith.constant 7 : index
    %c0_43 = arith.constant 0 : index
    %c0_44 = arith.constant 0 : index
    %49 = vector.load %arg6[%c7, %c0_43, %c0_44] : memref<11x64x256xf32, #tpu.memory_space<vmem>>, vector<1x64x256xf32>
    %50 = vector.shape_cast %49 : vector<1x64x256xf32> to vector<64x256xf32>
    %cst_45 = arith.constant dense<0.000000e+00> : vector<256x256xf32>
    %51 = tpu.matmul %48, %50, %cst_45 {dimension_numbers = #tpu.dot_dimension_numbers<[1], [0], [0], [1], [0, 0, 1, 1], [], []>} : vector<256x64xf32>, vector<64x256xf32>, vector<256x256xf32> -> vector<256x256xf32>
    %52 = arith.addf %47, %51 : vector<256x256xf32>
    %c19 = arith.constant 19 : index
    %c0_46 = arith.constant 0 : index
    %53 = vector.load %arg9[%c19, %c0_46] : memref<288x64xf32, #tpu.memory_space<vmem>>, vector<256x64xf32>
    %c8 = arith.constant 8 : index
    %c0_47 = arith.constant 0 : index
    %c0_48 = arith.constant 0 : index
    %54 = vector.load %arg6[%c8, %c0_47, %c0_48] : memref<11x64x256xf32, #tpu.memory_space<vmem>>, vector<1x64x256xf32>
    %55 = vector.shape_cast %54 : vector<1x64x256xf32> to vector<64x256xf32>
    %cst_49 = arith.constant dense<0.000000e+00> : vector<256x256xf32>
    %56 = tpu.matmul %53, %55, %cst_49 {dimension_numbers = #tpu.dot_dimension_numbers<[1], [0], [0], [1], [0, 0, 1, 1], [], []>} : vector<256x64xf32>, vector<64x256xf32>, vector<256x256xf32> -> vector<256x256xf32>
    %57 = arith.addf %52, %56 : vector<256x256xf32>
    %c20 = arith.constant 20 : index
    %c0_50 = arith.constant 0 : index
    %58 = vector.load %arg9[%c20, %c0_50] : memref<288x64xf32, #tpu.memory_space<vmem>>, vector<256x64xf32>
    %c9 = arith.constant 9 : index
    %c0_51 = arith.constant 0 : index
    %c0_52 = arith.constant 0 : index
    %59 = vector.load %arg6[%c9, %c0_51, %c0_52] : memref<11x64x256xf32, #tpu.memory_space<vmem>>, vector<1x64x256xf32>
    %60 = vector.shape_cast %59 : vector<1x64x256xf32> to vector<64x256xf32>
    %cst_53 = arith.constant dense<0.000000e+00> : vector<256x256xf32>
    %61 = tpu.matmul %58, %60, %cst_53 {dimension_numbers = #tpu.dot_dimension_numbers<[1], [0], [0], [1], [0, 0, 1, 1], [], []>} : vector<256x64xf32>, vector<64x256xf32>, vector<256x256xf32> -> vector<256x256xf32>
    %62 = arith.addf %57, %61 : vector<256x256xf32>
    %c21 = arith.constant 21 : index
    %c0_54 = arith.constant 0 : index
    %63 = vector.load %arg9[%c21, %c0_54] : memref<288x64xf32, #tpu.memory_space<vmem>>, vector<256x64xf32>
    %c10 = arith.constant 10 : index
    %c0_55 = arith.constant 0 : index
    %c0_56 = arith.constant 0 : index
    %64 = vector.load %arg6[%c10, %c0_55, %c0_56] : memref<11x64x256xf32, #tpu.memory_space<vmem>>, vector<1x64x256xf32>
    %65 = vector.shape_cast %64 : vector<1x64x256xf32> to vector<64x256xf32>
    %cst_57 = arith.constant dense<0.000000e+00> : vector<256x256xf32>
    %66 = tpu.matmul %63, %65, %cst_57 {dimension_numbers = #tpu.dot_dimension_numbers<[1], [0], [0], [1], [0, 0, 1, 1], [], []>} : vector<256x64xf32>, vector<64x256xf32>, vector<256x256xf32> -> vector<256x256xf32>
    %67 = arith.addf %62, %66 : vector<256x256xf32>
    %c0_58 = arith.constant 0 : index
    %c0_59 = arith.constant 0 : index
    %68 = vector.load %arg7[%c0_58, %c0_59] : memref<1x256xf32, #tpu.memory_space<vmem>>, vector<1x256xf32>
    %69 = vector.broadcast %68 : vector<1x256xf32> to vector<256x256xf32>
    %70 = arith.addf %67, %69 : vector<256x256xf32>
    %cst_60 = arith.constant 0.000000e+00 : f32
    %cst_61 = arith.constant 2.000000e+01 : f32
    %71 = vector.broadcast %cst_60 : f32 to vector<256x256xf32>
    %72 = arith.maximumf %71, %70 : vector<256x256xf32>
    %73 = vector.broadcast %cst_61 : f32 to vector<256x256xf32>
    %74 = arith.minimumf %73, %72 : vector<256x256xf32>
    %c0_62 = arith.constant 0 : index
    %c0_63 = arith.constant 0 : index
    %c0_64 = arith.constant 0 : index
    %75 = vector.load %arg8[%c0_62, %c0_63, %c0_64] : memref<1x256x256xf32, #tpu.memory_space<vmem>>, vector<1x256x256xf32>
    %76 = vector.shape_cast %75 : vector<1x256x256xf32> to vector<256x256xf32>
    %77 = vector.shape_cast %74 : vector<256x256xf32> to vector<1x256x256xf32>
    tpu.vector_store %arg8[%c0_62, %c0_63, %c0_64], %77 {strides = array<i32>} : memref<1x256x256xf32, #tpu.memory_space<vmem>>, vector<1x256x256xf32>,
    return
  }
  func.func @transform_0(%arg0: i32, %arg1: i32, %arg2: i32) -> (i32, i32, i32) {
    %c0_i32 = arith.constant 0 : i32
    %c0_i32_0 = arith.constant 0 : i32
    return %arg0, %arg2, %c0_i32 : i32, i32, i32
  }
  func.func @transform_1(%arg0: i32, %arg1: i32, %arg2: i32) -> (i32, i32, i32) {
    %c16_i32 = arith.constant 16 : i32
    %0 = arith.muli %arg2, %c16_i32 : i32
    %c1_i32 = arith.constant 1 : i32
    %1 = arith.subi %0, %c1_i32 : i32
    %c0_i32 = arith.constant 0 : i32
    %2 = arith.maxsi %1, %c0_i32 : i32
    %c0_i32_0 = arith.constant 0 : i32
    %c0_i32_1 = arith.constant 0 : i32
    return %arg0, %2, %c0_i32_0 : i32, i32, i32
  }
  func.func @transform_2(%arg0: i32, %arg1: i32, %arg2: i32) -> (i32, i32, i32) {
    %c1_i32 = arith.constant 1 : i32
    %0 = arith.addi %arg2, %c1_i32 : i32
    %c16_i32 = arith.constant 16 : i32
    %1 = arith.muli %0, %c16_i32 : i32
    %c31_i32 = arith.constant 31 : i32
    %2 = arith.minsi %1, %c31_i32 : i32
    %c0_i32 = arith.constant 0 : i32
    %c0_i32_0 = arith.constant 0 : i32
    return %arg0, %2, %c0_i32 : i32, i32, i32
  }
  func.func @transform_3(%arg0: i32, %arg1: i32, %arg2: i32) -> (i32, i32, i32) {
    %c0_i32 = arith.constant 0 : i32
    %c0_i32_0 = arith.constant 0 : i32
    %c0_i32_1 = arith.constant 0 : i32
    return %c0_i32, %c0_i32_0, %arg1 : i32, i32, i32
  }
  func.func @transform_4(%arg0: i32, %arg1: i32, %arg2: i32) -> (i32, i32) {
    %c0_i32 = arith.constant 0 : i32
    %c0_i32_0 = arith.constant 0 : i32
    return %c0_i32, %arg1 : i32, i32
  }
  func.func @transform_5(%arg0: i32, %arg1: i32, %arg2: i32) -> (i32, i32, i32) {
    %c0_i32 = arith.constant 0 : i32
    return %arg0, %arg2, %arg1 : i32, i32, i32
  }
}

</mosaic_0001>

<llo_original>
// kernel: tpu_custom_call.1
$region0: #{tpu_custom_call.1}
  #allocation0 [shape = 'u32[]', space=smem, size = 0x4, offset = 0x4, fixed_abs, tag = 'smem constant byte address 0x4 - core index']
  #allocation1 [shape = 'u32[72,128]{1,0:T(1,128)}', space=vmem, size = 0x9000, scoped, tag = 'internal scratch']
  #allocation2 [shape = 'f32[288,64]{1,0:T(8,128)}', space=vmem, size = 0x24000, scoped, tag = 'scratch operand']
  %s0 = inlined_call_operand.vmem [shape: f32[2,512,64], index: 0, kind: input, shape index: {}]
  %s1 = inlined_call_operand.vmem [shape: f32[2,512,64], index: 1, kind: input, shape index: {}]
  %s2 = inlined_call_operand.vmem [shape: f32[2,512,64], index: 2, kind: input, shape index: {}]
  %s3 = inlined_call_operand.vmem [shape: f32[11,64,256], index: 3, kind: input, shape index: {}]
  %s4 = inlined_call_operand.vmem [shape: f32[1,256], index: 4, kind: input, shape index: {}]
  %s5 = inlined_call_operand.hbm [shape: f32[2,512,256], index: 5, kind: output, shape index: {}]
  %s6 = sld [smem:[#allocation0]]
  $region53: #{tpu_custom_call.1} parent=0
    _
  %s8 = ssub.s32 1, %s6
  %s9 = scalar_select 0, %s8, %s6
  $region1: #{tpu_custom_call.1} parent=0
    #allocation3 [shape = 'u8[524288]{0}', space=vmem, size = 0x80000, scoped, tag = 'output window, operand 0']
    #allocation4 [shape = 's32[2]{0}', space=sflag, size = 0x8, scoped, tag = 'scoped memory for tpu_custom_call.1']
    %10 = vsyncpa [#allocation4], 0
    %s11 = scalar_lea.sflag [#allocation4], 1
    %12 = vsyncpa %s11, 0
    loop: start=0, step=1, limit=6
    $region2: #{tpu_custom_call.1} parent=1 // loop_pre_header
      _
    $region3: #{tpu_custom_call.1} parent=1 // loop_header
      %s14 = sphi 0, %s18
      %p15 = scmp.ge.s32.totalorder %s14, 6
      %s21 = sphi 0, %s40
      %s22 = sphi 0, %s36
      %s23 = sphi 0, %s32
      %s24 = sphi 0, %s21
      %s25 = sphi 0, %s22
      %s26 = sphi 0, %s23
      %s27 = sphi 0, %s24
      %s28 = sphi 0, %s25
      %s29 = sphi 0, %s26
      %s45 = sphi 0, %s47
      %s48 = sphi 0, %s45
      %s49 = sphi 0, %s48
      %s65 = sphi 0, %s49
      %s81 = sphi 0, %s83
      %s84 = sphi 0, %s81
      %s85 = sphi 0, %s84
      %s101 = sphi 0, %s85
      %s117 = sphi 0, %s119
      %s120 = sphi 0, %s117
      %s121 = sphi 0, %s120
      %s137 = sphi 0, %s121
      %s143 = sphi 0, %s145
      %s146 = sphi 0, %s143
      %s147 = sphi 0, %s146
      %s163 = sphi 0, %s147
      %s169 = sphi 0, %s171
      %s172 = sphi 0, %s169
      %s173 = sphi 0, %s172
      %s189 = sphi 0, %s173
      %s199 = sphi 0, %s201
      %s202 = sphi 0, %s199
      %s203 = sphi 0, %s202
      %s219 = sphi 0, %s203
    $region4: #{tpu_custom_call.1} parent=1 // loop_header_branch
      %17 = sbr.rel (%p15) target = $region8
    $region5: #{tpu_custom_call.1} parent=1 // loop_body
      %s19 = ssub.s32 %s14, 1
      %s20 = ssub.s32 %s14, 2
      %s30 = sadd.s32 1, %s23
      %p31 = scmp.ge.s32.totalorder %s30, 2
      %s32 = scalar_select %p31, 0, %s30
      %s33 = sadd.s32 1, %s22
      %s34 = scalar_select %p31, %s33, %s22
      %p35 = scmp.ge.s32.totalorder %s34, 1
      %s36 = scalar_select %p35, 0, %s34
      %s37 = sadd.s32 1, %s21
      %s38 = scalar_select %p35, %s37, %s21
      %p39 = scmp.ge.s32.totalorder %s38, 2
      %s40 = scalar_select %p39, 0, %s38
      %s41 = ssub.s32 %s21, %s40
      %s42 = ssub.s32 %s23, %s32
      %s43 = sor.u32 %s41, %s42
      %p44 = scmp.eq.s32.totalorder %s43, 0
      %s46 = sadd.s32 %s45, 1
      %s47 = scalar_select %p44, %s45, %s46
      %p50 = pneg %p44
      %p51 = scmp.eq.s32.totalorder %s14, 3
      %p52 = por %p50, %p51
      %p53 = scmp.ne.s32.totalorder %s45, %s48
      %p54 = scmp.eq.s32.totalorder %s14, 0
      %p55 = por %p53, %p54
      %p56 = scmp.ne.s32.totalorder %s45, %s48
      %p57 = scmp.eq.s32.totalorder %s19, 3
      %p58 = por %p56, %p57
      %p59 = scmp.ne.s32.totalorder %s48, %s49
      %p60 = scmp.eq.s32.totalorder %s19, 0
      %p61 = por %p59, %p60
      %p62 = scmp.ne.s32.totalorder %s48, %s49
      %p63 = scmp.eq.s32.totalorder %s20, 3
      %p64 = por %p62, %p63
      %p66 = scmp.ne.s32.totalorder %s49, %s65
      %p67 = scmp.eq.s32.totalorder %s20, 0
      %p68 = por %p66, %p67
      %s69 = smul.u32 %s23, 16
      %s70 = ssub.s32 %s69, 1
      %p71 = scmp.gt.s32.totalorder %s70, 0
      %s72 = scalar_select %p71, %s70, 0
      %s73 = smul.u32 %s32, 16
      %s74 = ssub.s32 %s73, 1
      %p75 = scmp.gt.s32.totalorder %s74, 0
      %s76 = scalar_select %p75, %s74, 0
      %s77 = ssub.s32 %s21, %s40
      %s78 = ssub.s32 %s72, %s76
      %s79 = sor.u32 %s77, %s78
      %p80 = scmp.eq.s32.totalorder %s79, 0
      %s82 = sadd.s32 %s81, 1
      %s83 = scalar_select %p80, %s81, %s82
      %p86 = pneg %p80
      %p87 = scmp.eq.s32.totalorder %s14, 3
      %p88 = por %p86, %p87
      %p89 = scmp.ne.s32.totalorder %s81, %s84
      %p90 = scmp.eq.s32.totalorder %s14, 0
      %p91 = por %p89, %p90
      %p92 = scmp.ne.s32.totalorder %s81, %s84
      %p93 = scmp.eq.s32.totalorder %s19, 3
      %p94 = por %p92, %p93
      %p95 = scmp.ne.s32.totalorder %s84, %s85
      %p96 = scmp.eq.s32.totalorder %s19, 0
      %p97 = por %p95, %p96
      %p98 = scmp.ne.s32.totalorder %s84, %s85
      %p99 = scmp.eq.s32.totalorder %s20, 3
      %p100 = por %p98, %p99
      %p102 = scmp.ne.s32.totalorder %s85, %s101
      %p103 = scmp.eq.s32.totalorder %s20, 0
      %p104 = por %p102, %p103
      %s105 = sadd.s32 %s23, 1
      %s106 = smul.u32 %s105, 16
      %p107 = scmp.lt.s32.totalorder %s106, 31
      %s108 = scalar_select %p107, %s106, 31
      %s109 = sadd.s32 %s32, 1
      %s110 = smul.u32 %s109, 16
      %p111 = scmp.lt.s32.totalorder %s110, 31
      %s112 = scalar_select %p111, %s110, 31
      %s113 = ssub.s32 %s21, %s40
      %s114 = ssub.s32 %s108, %s112
      %s115 = sor.u32 %s113, %s114
      %p116 = scmp.eq.s32.totalorder %s115, 0
      %s118 = sadd.s32 %s117, 1
      %s119 = scalar_select %p116, %s117, %s118
      %p122 = pneg %p116
      %p123 = scmp.eq.s32.totalorder %s14, 3
      %p124 = por %p122, %p123
      %p125 = scmp.ne.s32.totalorder %s117, %s120
      %p126 = scmp.eq.s32.totalorder %s14, 0
      %p127 = por %p125, %p126
      %p128 = scmp.ne.s32.totalorder %s117, %s120
      %p129 = scmp.eq.s32.totalorder %s19, 3
      %p130 = por %p128, %p129
      %p131 = scmp.ne.s32.totalorder %s120, %s121
      %p132 = scmp.eq.s32.totalorder %s19, 0
      %p133 = por %p131, %p132
      %p134 = scmp.ne.s32.totalorder %s120, %s121
      %p135 = scmp.eq.s32.totalorder %s20, 3
      %p136 = por %p134, %p135
      %p138 = scmp.ne.s32.totalorder %s121, %s137
      %p139 = scmp.eq.s32.totalorder %s20, 0
      %p140 = por %p138, %p139
      %s141 = ssub.s32 %s22, %s36
      %p142 = scmp.eq.s32.totalorder %s141, 0
      %s144 = sadd.s32 %s143, 1
      %s145 = scalar_select %p142, %s143, %s144
      %p148 = pneg %p142
      %p149 = scmp.eq.s32.totalorder %s14, 3
      %p150 = por %p148, %p149
      %p151 = scmp.ne.s32.totalorder %s143, %s146
      %p152 = scmp.eq.s32.totalorder %s14, 0
      %p153 = por %p151, %p152
      %p154 = scmp.ne.s32.totalorder %s143, %s146
      %p155 = scmp.eq.s32.totalorder %s19, 3
      %p156 = por %p154, %p155
      %p157 = scmp.ne.s32.totalorder %s146, %s147
      %p158 = scmp.eq.s32.totalorder %s19, 0
      %p159 = por %p157, %p158
      %p160 = scmp.ne.s32.totalorder %s146, %s147
      %p161 = scmp.eq.s32.totalorder %s20, 3
      %p162 = por %p160, %p161
      %p164 = scmp.ne.s32.totalorder %s147, %s163
      %p165 = scmp.eq.s32.totalorder %s20, 0
      %p166 = por %p164, %p165
      %s167 = ssub.s32 %s22, %s36
      %p168 = scmp.eq.s32.totalorder %s167, 0
      %s170 = sadd.s32 %s169, 1
      %s171 = scalar_select %p168, %s169, %s170
      %p174 = pneg %p168
      %p175 = scmp.eq.s32.totalorder %s14, 3
      %p176 = por %p174, %p175
      %p177 = scmp.ne.s32.totalorder %s169, %s172
      %p178 = scmp.eq.s32.totalorder %s14, 0
      %p179 = por %p177, %p178
      %p180 = scmp.ne.s32.totalorder %s169, %s172
      %p181 = scmp.eq.s32.totalorder %s19, 3
      %p182 = por %p180, %p181
      %p183 = scmp.ne.s32.totalorder %s172, %s173
      %p184 = scmp.eq.s32.totalorder %s19, 0
      %p185 = por %p183, %p184
      %p186 = scmp.ne.s32.totalorder %s172, %s173
      %p187 = scmp.eq.s32.totalorder %s20, 3
      %p188 = por %p186, %p187
      %p190 = scmp.ne.s32.totalorder %s173, %s189
      %p191 = scmp.eq.s32.totalorder %s20, 0
      %p192 = por %p190, %p191
      %s193 = ssub.s32 %s21, %s40
      %s194 = ssub.s32 %s23, %s32
      %s195 = sor.u32 %s193, %s194
      %s196 = ssub.s32 %s22, %s36
      %s197 = sor.u32 %s195, %s196
      %p198 = scmp.eq.s32.totalorder %s197, 0
      %s200 = sadd.s32 %s199, 1
      %s201 = scalar_select %p198, %s199, %s200
      %p204 = pneg %p198
      %p205 = scmp.eq.s32.totalorder %s14, 3
      %p206 = por %p204, %p205
      %p207 = scmp.ne.s32.totalorder %s199, %s202
      %p208 = scmp.eq.s32.totalorder %s14, 0
      %p209 = por %p207, %p208
      %p210 = scmp.ne.s32.totalorder %s199, %s202
      %p211 = scmp.eq.s32.totalorder %s19, 3
      %p212 = por %p210, %p211
      %p213 = scmp.ne.s32.totalorder %s202, %s203
      %p214 = scmp.eq.s32.totalorder %s19, 0
      %p215 = por %p213, %p214
      %p216 = scmp.ne.s32.totalorder %s202, %s203
      %p217 = scmp.eq.s32.totalorder %s20, 3
      %p218 = por %p216, %p217
      %p220 = scmp.ne.s32.totalorder %s203, %s219
      %p221 = scmp.eq.s32.totalorder %s20, 0
      %p222 = por %p220, %p221
      %p223 = scmp.le.s32.totalorder 1, %s14
      %p224 = scmp.lt.s32.totalorder %s14, 5
      %p225 = pnand %p223, %p224
      %p226 = pneg %p225
      // Predicated region
      $region9: #{tpu_custom_call.1} parent=5 // pred_check
        _
      $region10: #{tpu_custom_call.1} parent=5 // pred_check_branch
        %228 = sbr.rel (%p225) target = $region12
      $region11: #{tpu_custom_call.1} parent=5 // pred_region
        %s229 = ssub.s32 %s14, 1
        // Predicated region
        $region13: #{tpu_custom_call.1} parent=11 // pred_check
          %p230 = pneg %p159
        $region14: #{tpu_custom_call.1} parent=11 // pred_check_branch
          %232 = sbr.rel (%p230) target = $region16
        $region15: #{tpu_custom_call.1} parent=11 // pred_region
          %s233 = smul.u32 2, %s25
          %p234 = scmp.lt.s32.totalorder %s233, 1
          %s235 = scalar_select %p234, %s233, 1
          %s236 = smul.addr %s235, 8
          %s237 = scalar_lea.vmem %s3, %s236
          %s238 = smul.u32 2, %s25
        $region16: #{tpu_custom_call.1} parent=11 // pred_fallthru
          _
        // Predicated region
        $region17: #{tpu_custom_call.1} parent=11 // pred_check
          %p239 = pneg %p185
        $region18: #{tpu_custom_call.1} parent=11 // pred_check_branch
          %241 = sbr.rel (%p239) target = $region20
        $region19: #{tpu_custom_call.1} parent=11 // pred_region
          %s242 = smul.u32 2, %s25
          %p243 = scmp.lt.s32.totalorder %s242, 1
          %s244 = scalar_select %p243, %s242, 1
          %s245 = scalar_lea.vmem %s4, %s244
          %s246 = smul.u32 2, %s25
        $region20: #{tpu_custom_call.1} parent=11 // pred_fallthru
          _
      $region12: #{tpu_custom_call.1} parent=5 // pred_fallthru
        _
      %p247 = scmp.lt.s32.totalorder %s14, 4
      // Predicated region
      $region21: #{tpu_custom_call.1} parent=5 // pred_check
        %p248 = pneg %p247
      $region22: #{tpu_custom_call.1} parent=5 // pred_check_branch
        %250 = sbr.rel (%p248) target = $region24
      $region23: #{tpu_custom_call.1} parent=5 // pred_region
        // Predicated region
        $region25: #{tpu_custom_call.1} parent=23 // pred_check
          %p251 = pneg %p55
        $region26: #{tpu_custom_call.1} parent=23 // pred_check_branch
          %253 = sbr.rel (%p251) target = $region28
        $region27: #{tpu_custom_call.1} parent=23 // pred_region
          %s254 = smul.u32 32, %s23
          %p255 = scmp.lt.s32.totalorder %s21, 1
          %s256 = scalar_select %p255, %s21, 1
          %p257 = scmp.lt.s32.totalorder %s254, 63
          %s258 = scalar_select %p257, %s254, 63
          %s259 = smul.addr %s256, 64
          %s260 = sadd.s32 %s258, %s259
          %s261 = smul.addr %s260, 8
          %s262 = scalar_lea.vmem %s0, %s261
          %s263 = smul.u32 32, %s23
        $region28: #{tpu_custom_call.1} parent=23 // pred_fallthru
          _
        // Predicated region
        $region29: #{tpu_custom_call.1} parent=23 // pred_check
          %p264 = pneg %p91
        $region30: #{tpu_custom_call.1} parent=23 // pred_check_branch
          %266 = sbr.rel (%p264) target = $region32
        $region31: #{tpu_custom_call.1} parent=23 // pred_region
          %s267 = smul.u32 %s23, 16
          %s268 = ssub.s32 %s267, 1
          %p269 = scmp.gt.s32.totalorder %s268, 0
          %s270 = scalar_select %p269, %s268, 0
          %s271 = smul.u32 2, %s270
          %p272 = scmp.lt.s32.totalorder %s21, 1
          %s273 = scalar_select %p272, %s21, 1
          %p274 = scmp.lt.s32.totalorder %s271, 63
          %s275 = scalar_select %p274, %s271, 63
          %s276 = smul.addr %s273, 64
          %s277 = sadd.s32 %s275, %s276
          %s278 = smul.addr %s277, 8
          %s279 = scalar_lea.vmem %s1, %s278
          %s280 = smul.u32 %s23, 16
          %s281 = ssub.s32 %s280, 1
          %p282 = scmp.gt.s32.totalorder %s281, 0
          %s283 = scalar_select %p282, %s281, 0
          %s284 = smul.u32 2, %s283
        $region32: #{tpu_custom_call.1} parent=23 // pred_fallthru
          _
        // Predicated region
        $region33: #{tpu_custom_call.1} parent=23 // pred_check
          %p285 = pneg %p127
        $region34: #{tpu_custom_call.1} parent=23 // pred_check_branch
          %287 = sbr.rel (%p285) target = $region36
        $region35: #{tpu_custom_call.1} parent=23 // pred_region
          %s288 = sadd.s32 %s23, 1
          %s289 = smul.u32 %s288, 16
          %p290 = scmp.lt.s32.totalorder %s289, 31
          %s291 = scalar_select %p290, %s289, 31
          %s292 = smul.u32 2, %s291
          %p293 = scmp.lt.s32.totalorder %s21, 1
          %s294 = scalar_select %p293, %s21, 1
          %p295 = scmp.lt.s32.totalorder %s292, 63
          %s296 = scalar_select %p295, %s292, 63
          %s297 = smul.addr %s294, 64
          %s298 = sadd.s32 %s296, %s297
          %s299 = smul.addr %s298, 8
          %s300 = scalar_lea.vmem %s2, %s299
          %s301 = sadd.s32 %s23, 1
          %s302 = smul.u32 %s301, 16
          %p303 = scmp.lt.s32.totalorder %s302, 31
          %s304 = scalar_select %p303, %s302, 31
          %s305 = smul.u32 2, %s304
        $region36: #{tpu_custom_call.1} parent=23 // pred_fallthru
          _
      $region24: #{tpu_custom_call.1} parent=5 // pred_fallthru
        _
      %p306 = scmp.le.s32.totalorder 1, %s14
      %p307 = scmp.lt.s32.totalorder %s14, 5
      %p308 = pnand %p306, %p307
      %p309 = pneg %p308
      // Predicated region
      $region37: #{tpu_custom_call.1} parent=5 // pred_check
        _
      $region38: #{tpu_custom_call.1} parent=5 // pred_check_branch
        %311 = sbr.rel (%p308) target = $region40
      $region39: #{tpu_custom_call.1} parent=5 // pred_region
        %s312 = ssub.s32 %s14, 1
        %s313 = smul.u32 32, %s26
        %p314 = scmp.lt.s32.totalorder %s24, 1
        %s315 = scalar_select %p314, %s24, 1
        %p316 = scmp.lt.s32.totalorder %s313, 63
        %s317 = scalar_select %p316, %s313, 63
        %s318 = smul.addr %s315, 64
        %s319 = sadd.s32 %s317, %s318
        %s320 = smul.addr %s319, 8
        %s321 = scalar_lea.vmem %s0, %s320
        %p322 = pneg %p61
        %p323 = pneg %p58
        %s324 = smul.u32 %s26, 16
        %s325 = ssub.s32 %s324, 1
        %p326 = scmp.gt.s32.totalorder %s325, 0
        %s327 = scalar_select %p326, %s325, 0
        %s328 = smul.u32 2, %s327
        %p329 = scmp.lt.s32.totalorder %s24, 1
        %s330 = scalar_select %p329, %s24, 1
        %p331 = scmp.lt.s32.totalorder %s328, 63
        %s332 = scalar_select %p331, %s328, 63
        %s333 = smul.addr %s330, 64
        %s334 = sadd.s32 %s332, %s333
        %s335 = smul.addr %s334, 8
        %s336 = scalar_lea.vmem %s1, %s335
        %p337 = pneg %p97
        %p338 = pneg %p94
        %s339 = sadd.s32 %s26, 1
        %s340 = smul.u32 %s339, 16
        %p341 = scmp.lt.s32.totalorder %s340, 31
        %s342 = scalar_select %p341, %s340, 31
        %s343 = smul.u32 2, %s342
        %p344 = scmp.lt.s32.totalorder %s24, 1
        %s345 = scalar_select %p344, %s24, 1
        %p346 = scmp.lt.s32.totalorder %s343, 63
        %s347 = scalar_select %p346, %s343, 63
        %s348 = smul.addr %s345, 64
        %s349 = sadd.s32 %s347, %s348
        %s350 = smul.addr %s349, 8
        %s351 = scalar_lea.vmem %s2, %s350
        %p352 = pneg %p133
        %p353 = pneg %p130
        %s354 = smul.u32 2, %s25
        %p355 = scmp.lt.s32.totalorder %s354, 1
        %s356 = scalar_select %p355, %s354, 1
        %s357 = smul.addr %s356, 8
        %s358 = scalar_lea.vmem %s3, %s357
        %p359 = pneg %p159
        %p360 = pneg %p156
        %s361 = smul.u32 2, %s25
        %p362 = scmp.lt.s32.totalorder %s361, 1
        %s363 = scalar_select %p362, %s361, 1
        %s364 = scalar_lea.vmem %s4, %s363
        %p365 = pneg %p185
        %p366 = pneg %p182
        %p367 = pneg %p215
        %p368 = pneg %p212
        %s369 = sand.u32 %s202, 1
        %s370 = scalar_lea.sflag [#allocation4], %s369
        %s371 = sand.u32 %s202, 1
        %s372 = smul.addr %s371, 512
        %s373 = scalar_lea.vmem [#allocation3], %s372
        %s374 = smul.u32 32, %s26
        %p375 = scmp.lt.s32.totalorder %s24, 1
        %s376 = scalar_select %p375, %s24, 1
        %p377 = scmp.lt.s32.totalorder %s374, 63
        %s378 = scalar_select %p377, %s374, 63
        %s379 = smul.addr %s376, 64
        %s380 = sadd.s32 %s378, %s379
        %s381 = smul.addr %s380, 8
        %s382 = scalar_lea.vmem %s0, %s381
        %s383 = smul.u32 32, %s26
        %s384 = smul.u32 %s26, 16
        %s385 = ssub.s32 %s384, 1
        %p386 = scmp.gt.s32.totalorder %s385, 0
        %s387 = scalar_select %p386, %s385, 0
        %s388 = smul.u32 2, %s387
        %p389 = scmp.lt.s32.totalorder %s24, 1
        %s390 = scalar_select %p389, %s24, 1
        %p391 = scmp.lt.s32.totalorder %s388, 63
        %s392 = scalar_select %p391, %s388, 63
        %s393 = smul.addr %s390, 64
        %s394 = sadd.s32 %s392, %s393
        %s395 = smul.addr %s394, 8
        %s396 = scalar_lea.vmem %s1, %s395
        %s397 = smul.u32 %s26, 16
        %s398 = ssub.s32 %s397, 1
        %p399 = scmp.gt.s32.totalorder %s398, 0
        %s400 = scalar_select %p399, %s398, 0
        %s401 = smul.u32 2, %s400
        %s402 = sadd.s32 %s26, 1
        %s403 = smul.u32 %s402, 16
        %p404 = scmp.lt.s32.totalorder %s403, 31
        %s405 = scalar_select %p404, %s403, 31
        %s406 = smul.u32 2, %s405
        %p407 = scmp.lt.s32.totalorder %s24, 1
        %s408 = scalar_select %p407, %s24, 1
        %p409 = scmp.lt.s32.totalorder %s406, 63
        %s410 = scalar_select %p409, %s406, 63
        %s411 = smul.addr %s408, 64
        %s412 = sadd.s32 %s410, %s411
        %s413 = smul.addr %s412, 8
        %s414 = scalar_lea.vmem %s2, %s413
        %s415 = sadd.s32 %s26, 1
        %s416 = smul.u32 %s415, 16
        %p417 = scmp.lt.s32.totalorder %s416, 31
        %s418 = scalar_select %p417, %s416, 31
        %s419 = smul.u32 2, %s418
        %s420 = smul.u32 2, %s25
        %p421 = scmp.lt.s32.totalorder %s420, 1
        %s422 = scalar_select %p421, %s420, 1
        %s423 = smul.addr %s422, 8
        %s424 = scalar_lea.vmem %s3, %s423
        %s425 = smul.u32 2, %s25
        %s426 = smul.u32 2, %s25
        %p427 = scmp.lt.s32.totalorder %s426, 1
        %s428 = scalar_select %p427, %s426, 1
        %s429 = scalar_lea.vmem %s4, %s428
        %s430 = smul.u32 2, %s25
        %s431 = smul.u32 32, %s26
        %s432 = smul.u32 2, %s25
        %v433 = vld [vmem:[%s382] sm:$0xff]
        %v434 = vld [vmem:[%s382 + $0x8] sm:$0xff]
        %v435 = vld [vmem:[%s382 + $0x10] sm:$0xff]
        %v436 = vld [vmem:[%s382 + $0x18] sm:$0xff]
        %v437 = vld [vmem:[%s382 + $0x20] sm:$0xff]
        %v438 = vld [vmem:[%s382 + $0x28] sm:$0xff]
        %v439 = vld [vmem:[%s382 + $0x30] sm:$0xff]
        %v440 = vld [vmem:[%s382 + $0x38] sm:$0xff]
        %v441 = vld [vmem:[%s382 + $0x40] sm:$0xff]
        %v442 = vld [vmem:[%s382 + $0x48] sm:$0xff]
        %v443 = vld [vmem:[%s382 + $0x50] sm:$0xff]
        %v444 = vld [vmem:[%s382 + $0x58] sm:$0xff]
        %v445 = vld [vmem:[%s382 + $0x60] sm:$0xff]
        %v446 = vld [vmem:[%s382 + $0x68] sm:$0xff]
        %v447 = vld [vmem:[%s382 + $0x70] sm:$0xff]
        %v448 = vld [vmem:[%s382 + $0x78] sm:$0xff]
        %v449 = vld [vmem:[%s382 + $0x80] sm:$0xff]
        %v450 = vld [vmem:[%s382 + $0x88] sm:$0xff]
        %v451 = vld [vmem:[%s382 + $0x90] sm:$0xff]
        %v452 = vld [vmem:[%s382 + $0x98] sm:$0xff]
        %v453 = vld [vmem:[%s382 + $0xa0] sm:$0xff]
        %v454 = vld [vmem:[%s382 + $0xa8] sm:$0xff]
        %v455 = vld [vmem:[%s382 + $0xb0] sm:$0xff]
        %v456 = vld [vmem:[%s382 + $0xb8] sm:$0xff]
        %v457 = vld [vmem:[%s382 + $0xc0] sm:$0xff]
        %v458 = vld [vmem:[%s382 + $0xc8] sm:$0xff]
        %v459 = vld [vmem:[%s382 + $0xd0] sm:$0xff]
        %v460 = vld [vmem:[%s382 + $0xd8] sm:$0xff]
        %v461 = vld [vmem:[%s382 + $0xe0] sm:$0xff]
        %v462 = vld [vmem:[%s382 + $0xe8] sm:$0xff]
        %v463 = vld [vmem:[%s382 + $0xf0] sm:$0xff]
        %v464 = vld [vmem:[%s382 + $0xf8] sm:$0xff]
        %p465 = scmp.eq.s32.totalorder %s26, 0
        %v466 = vld [vmem:[%s396] sm:$0xff]
        %v467 = vld [vmem:[%s396 + $0x8] sm:$0xff]
        %s468 = scalar_select %p465, 1, 0
        %v469 = vstv %s468
        %vm470 = vcmp.eq.s32.totalorder %v469, 1
        %v471 = vsel %vm470, 0.0, %v466
        %v472 = vsel %vm470, 0.0, %v467
        %p473 = scmp.eq.s32.totalorder %s26, 1
        %v474 = vld [vmem:[%s414] sm:$0xff]
        %v475 = vld [vmem:[%s414 + $0x8] sm:$0xff]
        %s476 = scalar_select %p473, 1, 0
        %v477 = vstv %s476
        %vm478 = vcmp.eq.s32.totalorder %v477, 1
        %v479 = vsel %vm478, 0.0, %v474
        %v480 = vsel %vm478, 0.0, %v475
        %vm481 = vcmask 523264
        %482 = vst.msk [vmem:[#allocation2] sm:$0xff] %vm481, %v471
        %483 = vst.msk [vmem:[#allocation2 + $0x8] sm:$0xff] %vm481, %v472
        %484 = vst.msk [vmem:[#allocation2 + $0x10] sm:$0xff] %vm481, %v433
        %485 = vst.msk [vmem:[#allocation2 + $0x18] sm:$0xff] %vm481, %v434
        %486 = vst.msk [vmem:[#allocation2 + $0x20] sm:$0xff] %vm481, %v435
        %487 = vst.msk [vmem:[#allocation2 + $0x28] sm:$0xff] %vm481, %v436
        %488 = vst.msk [vmem:[#allocation2 + $0x30] sm:$0xff] %vm481, %v437
        %489 = vst.msk [vmem:[#allocation2 + $0x38] sm:$0xff] %vm481, %v438
        %490 = vst.msk [vmem:[#allocation2 + $0x40] sm:$0xff] %vm481, %v439
        %491 = vst.msk [vmem:[#allocation2 + $0x48] sm:$0xff] %vm481, %v440
        %492 = vst.msk [vmem:[#allocation2 + $0x50] sm:$0xff] %vm481, %v441
        %493 = vst.msk [vmem:[#allocation2 + $0x58] sm:$0xff] %vm481, %v442
        %494 = vst.msk [vmem:[#allocation2 + $0x60] sm:$0xff] %vm481, %v443
        %495 = vst.msk [vmem:[#allocation2 + $0x68] sm:$0xff] %vm481, %v444
        %496 = vst.msk [vmem:[#allocation2 + $0x70] sm:$0xff] %vm481, %v445
        %497 = vst.msk [vmem:[#allocation2 + $0x78] sm:$0xff] %vm481, %v446
        %498 = vst.msk [vmem:[#allocation2 + $0x80] sm:$0xff] %vm481, %v447
        %499 = vst.msk [vmem:[#allocation2 + $0x88] sm:$0xff] %vm481, %v448
        %500 = vst.msk [vmem:[#allocation2 + $0x90] sm:$0xff] %vm481, %v449
        %501 = vst.msk [vmem:[#allocation2 + $0x98] sm:$0xff] %vm481, %v450
        %502 = vst.msk [vmem:[#allocation2 + $0xa0] sm:$0xff] %vm481, %v451
        %503 = vst.msk [vmem:[#allocation2 + $0xa8] sm:$0xff] %vm481, %v452
        %504 = vst.msk [vmem:[#allocation2 + $0xb0] sm:$0xff] %vm481, %v453
        %505 = vst.msk [vmem:[#allocation2 + $0xb8] sm:$0xff] %vm481, %v454
        %506 = vst.msk [vmem:[#allocation2 + $0xc0] sm:$0xff] %vm481, %v455
        %507 = vst.msk [vmem:[#allocation2 + $0xc8] sm:$0xff] %vm481, %v456
        %508 = vst.msk [vmem:[#allocation2 + $0xd0] sm:$0xff] %vm481, %v457
        %509 = vst.msk [vmem:[#allocation2 + $0xd8] sm:$0xff] %vm481, %v458
        %510 = vst.msk [vmem:[#allocation2 + $0xe0] sm:$0xff] %vm481, %v459
        %511 = vst.msk [vmem:[#allocation2 + $0xe8] sm:$0xff] %vm481, %v460
        %512 = vst.msk [vmem:[#allocation2 + $0xf0] sm:$0xff] %vm481, %v461
        %513 = vst.msk [vmem:[#allocation2 + $0xf8] sm:$0xff] %vm481, %v462
        %514 = vst.msk [vmem:[#allocation2 + $0x100] sm:$0xff] %vm481, %v463
        %515 = vst.msk [vmem:[#allocation2 + $0x108] sm:$0xff] %vm481, %v464
        %516 = vst.msk [vmem:[#allocation2 + $0x110] sm:$0xff] %vm481, %v479
        %517 = vst.msk [vmem:[#allocation2 + $0x118] sm:$0xff] %vm481, %v480
        %v518 = vld [vmem:[#allocation2 + $0xb] sm:$0xff]
        %v519 = vld [vmem:[#allocation2 + $0x13] sm:$0xff]
        %v520 = vld [vmem:[#allocation2 + $0x1b] sm:$0xff]
        %v521 = vld [vmem:[#allocation2 + $0x23] sm:$0xff]
        %v522 = vld [vmem:[#allocation2 + $0x2b] sm:$0xff]
        %v523 = vld [vmem:[#allocation2 + $0x33] sm:$0xff]
        %v524 = vld [vmem:[#allocation2 + $0x3b] sm:$0xff]
        %v525 = vld [vmem:[#allocation2 + $0x43] sm:$0xff]
        %v526 = vld [vmem:[#allocation2 + $0x4b] sm:$0xff]
        %v527 = vld [vmem:[#allocation2 + $0x53] sm:$0xff]
        %v528 = vld [vmem:[#allocation2 + $0x5b] sm:$0xff]
        %v529 = vld [vmem:[#allocation2 + $0x63] sm:$0xff]
        %v530 = vld [vmem:[#allocation2 + $0x6b] sm:$0xff]
        %v531 = vld [vmem:[#allocation2 + $0x73] sm:$0xff]
        %v532 = vld [vmem:[#allocation2 + $0x7b] sm:$0xff]
        %v533 = vld [vmem:[#allocation2 + $0x83] sm:$0xff]
        %v534 = vld [vmem:[#allocation2 + $0x8b] sm:$0xff]
        %v535 = vld [vmem:[#allocation2 + $0x93] sm:$0xff]
        %v536 = vld [vmem:[#allocation2 + $0x9b] sm:$0xff]
        %v537 = vld [vmem:[#allocation2 + $0xa3] sm:$0xff]
        %v538 = vld [vmem:[#allocation2 + $0xab] sm:$0xff]
        %v539 = vld [vmem:[#allocation2 + $0xb3] sm:$0xff]
        %v540 = vld [vmem:[#allocation2 + $0xbb] sm:$0xff]
        %v541 = vld [vmem:[#allocation2 + $0xc3] sm:$0xff]
        %v542 = vld [vmem:[#allocation2 + $0xcb] sm:$0xff]
        %v543 = vld [vmem:[#allocation2 + $0xd3] sm:$0xff]
        %v544 = vld [vmem:[#allocation2 + $0xdb] sm:$0xff]
        %v545 = vld [vmem:[#allocation2 + $0xe3] sm:$0xff]
        %v546 = vld [vmem:[#allocation2 + $0xeb] sm:$0xff]
        %v547 = vld [vmem:[#allocation2 + $0xf3] sm:$0xff]
        %v548 = vld [vmem:[#allocation2 + $0xfb] sm:$0xff]
        %v549 = vld [vmem:[#allocation2 + $0x103] sm:$0xff]
        %v550 = vld [vmem:[%s424] sm:$0xff]
        %v551 = vld [vmem:[%s424 + $0x8] sm:$0xff]
        %v552 = vld [vmem:[%s424 + $0x10] sm:$0xff]
        %v553 = vld [vmem:[%s424 + $0x18] sm:$0xff]
        %v554 = vld [vmem:[%s424 + $0x20] sm:$0xff]
        %v555 = vld [vmem:[%s424 + $0x28] sm:$0xff]
        %v556 = vld [vmem:[%s424 + $0x30] sm:$0xff]
        %v557 = vld [vmem:[%s424 + $0x38] sm:$0xff]
        %v558 = vld [vmem:[%s424 + $0x40] sm:$0xff]
        %v559 = vld [vmem:[%s424 + $0x48] sm:$0xff]
        %v560 = vld [vmem:[%s424 + $0x50] sm:$0xff]
        %v561 = vld [vmem:[%s424 + $0x58] sm:$0xff]
        %v562 = vld [vmem:[%s424 + $0x60] sm:$0xff]
        %v563 = vld [vmem:[%s424 + $0x68] sm:$0xff]
        %v564 = vld [vmem:[%s424 + $0x70] sm:$0xff]
        %v565 = vld [vmem:[%s424 + $0x78] sm:$0xff]
        %v566 = vld [vmem:[#allocation2 + $0xc] sm:$0xff]
        %v567 = vld [vmem:[#allocation2 + $0x14] sm:$0xff]
        %v568 = vld [vmem:[#allocation2 + $0x1c] sm:$0xff]
        %v569 = vld [vmem:[#allocation2 + $0x24] sm:$0xff]
        %v570 = vld [vmem:[#allocation2 + $0x2c] sm:$0xff]
        %v571 = vld [vmem:[#allocation2 + $0x34] sm:$0xff]
        %v572 = vld [vmem:[#allocation2 + $0x3c] sm:$0xff]
        %v573 = vld [vmem:[#allocation2 + $0x44] sm:$0xff]
        %v574 = vld [vmem:[#allocation2 + $0x4c] sm:$0xff]
        %v575 = vld [vmem:[#allocation2 + $0x54] sm:$0xff]
        %v576 = vld [vmem:[#allocation2 + $0x5c] sm:$0xff]
        %v577 = vld [vmem:[#allocation2 + $0x64] sm:$0xff]
        %v578 = vld [vmem:[#allocation2 + $0x6c] sm:$0xff]
        %v579 = vld [vmem:[#allocation2 + $0x74] sm:$0xff]
        %v580 = vld [vmem:[#allocation2 + $0x7c] sm:$0xff]
        %v581 = vld [vmem:[#allocation2 + $0x84] sm:$0xff]
        %v582 = vld [vmem:[#allocation2 + $0x8c] sm:$0xff]
        %v583 = vld [vmem:[#allocation2 + $0x94] sm:$0xff]
        %v584 = vld [vmem:[#allocation2 + $0x9c] sm:$0xff]
        %v585 = vld [vmem:[#allocation2 + $0xa4] sm:$0xff]
        %v586 = vld [vmem:[#allocation2 + $0xac] sm:$0xff]
        %v587 = vld [vmem:[#allocation2 + $0xb4] sm:$0xff]
        %v588 = vld [vmem:[#allocation2 + $0xbc] sm:$0xff]
        %v589 = vld [vmem:[#allocation2 + $0xc4] sm:$0xff]
        %v590 = vld [vmem:[#allocation2 + $0xcc] sm:$0xff]
        %v591 = vld [vmem:[#allocation2 + $0xd4] sm:$0xff]
        %v592 = vld [vmem:[#allocation2 + $0xdc] sm:$0xff]
        %v593 = vld [vmem:[#allocation2 + $0xe4] sm:$0xff]
        %v594 = vld [vmem:[#allocation2 + $0xec] sm:$0xff]
        %v595 = vld [vmem:[#allocation2 + $0xf4] sm:$0xff]
        %v596 = vld [vmem:[#allocation2 + $0xfc] sm:$0xff]
        %v597 = vld [vmem:[#allocation2 + $0x104] sm:$0xff]
        %s598 = scalar_lea.vmem %s424, 128
        %v599 = vld [vmem:[%s598] sm:$0xff]
        %v600 = vld [vmem:[%s598 + $0x8] sm:$0xff]
        %v601 = vld [vmem:[%s598 + $0x10] sm:$0xff]
        %v602 = vld [vmem:[%s598 + $0x18] sm:$0xff]
        %v603 = vld [vmem:[%s598 + $0x20] sm:$0xff]
        %v604 = vld [vmem:[%s598 + $0x28] sm:$0xff]
        %v605 = vld [vmem:[%s598 + $0x30] sm:$0xff]
        %v606 = vld [vmem:[%s598 + $0x38] sm:$0xff]
        %v607 = vld [vmem:[%s598 + $0x40] sm:$0xff]
        %v608 = vld [vmem:[%s598 + $0x48] sm:$0xff]
        %v609 = vld [vmem:[%s598 + $0x50] sm:$0xff]
        %v610 = vld [vmem:[%s598 + $0x58] sm:$0xff]
        %v611 = vld [vmem:[%s598 + $0x60] sm:$0xff]
        %v612 = vld [vmem:[%s598 + $0x68] sm:$0xff]
        %v613 = vld [vmem:[%s598 + $0x70] sm:$0xff]
        %v614 = vld [vmem:[%s598 + $0x78] sm:$0xff]
        %v616 = vsel %vm481, %v566, 0
        %v619 = vsel %vm481, %v567, 0
        %v622 = vsel %vm481, %v568, 0
        %v625 = vsel %vm481, %v569, 0
        %v628 = vsel %vm481, %v570, 0
        %v631 = vsel %vm481, %v571, 0
        %v634 = vsel %vm481, %v572, 0
        %v637 = vsel %vm481, %v573, 0
        %v640 = vsel %vm481, %v574, 0
        %v643 = vsel %vm481, %v575, 0
        %v646 = vsel %vm481, %v576, 0
        %v649 = vsel %vm481, %v577, 0
        %v652 = vsel %vm481, %v578, 0
        %v655 = vsel %vm481, %v579, 0
        %v658 = vsel %vm481, %v580, 0
        %v661 = vsel %vm481, %v581, 0
        %v664 = vsel %vm481, %v582, 0
        %v667 = vsel %vm481, %v583, 0
        %v670 = vsel %vm481, %v584, 0
        %v673 = vsel %vm481, %v585, 0
        %v676 = vsel %vm481, %v586, 0
        %v679 = vsel %vm481, %v587, 0
        %v682 = vsel %vm481, %v588, 0
        %v685 = vsel %vm481, %v589, 0
        %v688 = vsel %vm481, %v590, 0
        %v691 = vsel %vm481, %v591, 0
        %v694 = vsel %vm481, %v592, 0
        %v697 = vsel %vm481, %v593, 0
        %v700 = vsel %vm481, %v594, 0
        %v703 = vsel %vm481, %v595, 0
        %v706 = vsel %vm481, %v596, 0
        %v709 = vsel %vm481, %v597, 0
        %711 = vmatpush.msra.mxu0 0.0
        %712 = vmatpush.msra.mxu0 0.0
        %713 = vmatpush.msra.mxu0 0.0
        %714 = vmatpush.msra.mxu0 0.0
        %715 = vmatpush.msra.mxu0 0.0
        %716 = vmatpush.msra.mxu0 0.0
        %717 = vmatpush.msra.mxu0 0.0
        %718 = vmatpush.msra.mxu0 0.0
        %719 = vmatpush.msra.mxu0 %v613
        %720 = vmatpush.msra.mxu0 %v611
        %721 = vmatpush.msra.mxu0 %v609
        %722 = vmatpush.msra.mxu0 %v607
        %723 = vmatpush.msra.mxu0 %v605
        %724 = vmatpush.msra.mxu0 %v603
        %725 = vmatpush.msra.mxu0 %v601
        %726 = vmatpush.msra.mxu0 %v599
        %727 = vmatmul.f32.gmra.mxu0 %v616
        %v728 = vpop.f32.mrf.mxu0
        %v729 = vadd.f32 0.0, %v728
        %730 = vmatmul.f32.gmra.mxu0 %v619
        %v731 = vpop.f32.mrf.mxu0
        %v732 = vadd.f32 0.0, %v731
        %733 = vmatmul.f32.gmra.mxu0 %v622
        %v734 = vpop.f32.mrf.mxu0
        %v735 = vadd.f32 0.0, %v734
        %736 = vmatmul.f32.gmra.mxu0 %v625
        %v737 = vpop.f32.mrf.mxu0
        %v738 = vadd.f32 0.0, %v737
        %739 = vmatmul.f32.gmra.mxu0 %v628
        %v740 = vpop.f32.mrf.mxu0
        %v741 = vadd.f32 0.0, %v740
        %742 = vmatmul.f32.gmra.mxu0 %v631
        %v743 = vpop.f32.mrf.mxu0
        %v744 = vadd.f32 0.0, %v743
        %745 = vmatmul.f32.gmra.mxu0 %v634
        %v746 = vpop.f32.mrf.mxu0
        %v747 = vadd.f32 0.0, %v746
        %748 = vmatmul.f32.gmra.mxu0 %v637
        %v749 = vpop.f32.mrf.mxu0
        %v750 = vadd.f32 0.0, %v749
        %751 = vmatmul.f32.gmra.mxu0 %v640
        %v752 = vpop.f32.mrf.mxu0
        %v753 = vadd.f32 0.0, %v752
        %754 = vmatmul.f32.gmra.mxu0 %v643
        %v755 = vpop.f32.mrf.mxu0
        %v756 = vadd.f32 0.0, %v755
        %757 = vmatmul.f32.gmra.mxu0 %v646
        %v758 = vpop.f32.mrf.mxu0
        %v759 = vadd.f32 0.0, %v758
        %760 = vmatmul.f32.gmra.mxu0 %v649
        %v761 = vpop.f32.mrf.mxu0
        %v762 = vadd.f32 0.0, %v761
        %763 = vmatmul.f32.gmra.mxu0 %v652
        %v764 = vpop.f32.mrf.mxu0
        %v765 = vadd.f32 0.0, %v764
        %766 = vmatmul.f32.gmra.mxu0 %v655
        %v767 = vpop.f32.mrf.mxu0
        %v768 = vadd.f32 0.0, %v767
        %769 = vmatmul.f32.gmra.mxu0 %v658
        %v770 = vpop.f32.mrf.mxu0
        %v771 = vadd.f32 0.0, %v770
        %772 = vmatmul.f32.gmra.mxu0 %v661
        %v773 = vpop.f32.mrf.mxu0
        %v774 = vadd.f32 0.0, %v773
        %775 = vmatmul.f32.gmra.mxu0 %v664
        %v776 = vpop.f32.mrf.mxu0
        %v777 = vadd.f32 0.0, %v776
        %778 = vmatmul.f32.gmra.mxu0 %v667
        %v779 = vpop.f32.mrf.mxu0
        %v780 = vadd.f32 0.0, %v779
        %781 = vmatmul.f32.gmra.mxu0 %v670
        %v782 = vpop.f32.mrf.mxu0
        %v783 = vadd.f32 0.0, %v782
        %784 = vmatmul.f32.gmra.mxu0 %v673
        %v785 = vpop.f32.mrf.mxu0
        %v786 = vadd.f32 0.0, %v785
        %787 = vmatmul.f32.gmra.mxu0 %v676
        %v788 = vpop.f32.mrf.mxu0
        %v789 = vadd.f32 0.0, %v788
        %790 = vmatmul.f32.gmra.mxu0 %v679
        %v791 = vpop.f32.mrf.mxu0
        %v792 = vadd.f32 0.0, %v791
        %793 = vmatmul.f32.gmra.mxu0 %v682
        %v794 = vpop.f32.mrf.mxu0
        %v795 = vadd.f32 0.0, %v794
        %796 = vmatmul.f32.gmra.mxu0 %v685
        %v797 = vpop.f32.mrf.mxu0
        %v798 = vadd.f32 0.0, %v797
        %799 = vmatmul.f32.gmra.mxu0 %v688
        %v800 = vpop.f32.mrf.mxu0
        %v801 = vadd.f32 0.0, %v800
        %802 = vmatmul.f32.gmra.mxu0 %v691
        %v803 = vpop.f32.mrf.mxu0
        %v804 = vadd.f32 0.0, %v803
        %805 = vmatmul.f32.gmra.mxu0 %v694
        %v806 = vpop.f32.mrf.mxu0
        %v807 = vadd.f32 0.0, %v806
        %808 = vmatmul.f32.gmra.mxu0 %v697
        %v809 = vpop.f32.mrf.mxu0
        %v810 = vadd.f32 0.0, %v809
        %811 = vmatmul.f32.gmra.mxu0 %v700
        %v812 = vpop.f32.mrf.mxu0
        %v813 = vadd.f32 0.0, %v812
        %814 = vmatmul.f32.gmra.mxu0 %v703
        %v815 = vpop.f32.mrf.mxu0
        %v816 = vadd.f32 0.0, %v815
        %817 = vmatmul.f32.gmra.mxu0 %v706
        %v818 = vpop.f32.mrf.mxu0
        %v819 = vadd.f32 0.0, %v818
        %820 = vmatmul.f32.gmra.mxu0 %v709
        %v821 = vpop.f32.mrf.mxu0
        %v822 = vadd.f32 0.0, %v821
        %823 = vdwg.mxu0
        %824 = vmatpush.msra.mxu0 0.0
        %825 = vmatpush.msra.mxu0 0.0
        %826 = vmatpush.msra.mxu0 0.0
        %827 = vmatpush.msra.mxu0 0.0
        %828 = vmatpush.msra.mxu0 0.0
        %829 = vmatpush.msra.mxu0 0.0
        %830 = vmatpush.msra.mxu0 0.0
        %831 = vmatpush.msra.mxu0 0.0
        %832 = vmatpush.msra.mxu0 %v614
        %833 = vmatpush.msra.mxu0 %v612
        %834 = vmatpush.msra.mxu0 %v610
        %835 = vmatpush.msra.mxu0 %v608
        %836 = vmatpush.msra.mxu0 %v606
        %837 = vmatpush.msra.mxu0 %v604
        %838 = vmatpush.msra.mxu0 %v602
        %839 = vmatpush.msra.mxu0 %v600
        %840 = vmatmul.f32.gmra.mxu0 %v616
        %v841 = vpop.f32.mrf.mxu0
        %v842 = vadd.f32 0.0, %v841
        %843 = vmatmul.f32.gmra.mxu0 %v619
        %v844 = vpop.f32.mrf.mxu0
        %v845 = vadd.f32 0.0, %v844
        %846 = vmatmul.f32.gmra.mxu0 %v622
        %v847 = vpop.f32.mrf.mxu0
        %v848 = vadd.f32 0.0, %v847
        %849 = vmatmul.f32.gmra.mxu0 %v625
        %v850 = vpop.f32.mrf.mxu0
        %v851 = vadd.f32 0.0, %v850
        %852 = vmatmul.f32.gmra.mxu0 %v628
        %v853 = vpop.f32.mrf.mxu0
        %v854 = vadd.f32 0.0, %v853
        %855 = vmatmul.f32.gmra.mxu0 %v631
        %v856 = vpop.f32.mrf.mxu0
        %v857 = vadd.f32 0.0, %v856
        %858 = vmatmul.f32.gmra.mxu0 %v634
        %v859 = vpop.f32.mrf.mxu0
        %v860 = vadd.f32 0.0, %v859
        %861 = vmatmul.f32.gmra.mxu0 %v637
        %v862 = vpop.f32.mrf.mxu0
        %v863 = vadd.f32 0.0, %v862
        %864 = vmatmul.f32.gmra.mxu0 %v640
        %v865 = vpop.f32.mrf.mxu0
        %v866 = vadd.f32 0.0, %v865
        %867 = vmatmul.f32.gmra.mxu0 %v643
        %v868 = vpop.f32.mrf.mxu0
        %v869 = vadd.f32 0.0, %v868
        %870 = vmatmul.f32.gmra.mxu0 %v646
        %v871 = vpop.f32.mrf.mxu0
        %v872 = vadd.f32 0.0, %v871
        %873 = vmatmul.f32.gmra.mxu0 %v649
        %v874 = vpop.f32.mrf.mxu0
        %v875 = vadd.f32 0.0, %v874
        %876 = vmatmul.f32.gmra.mxu0 %v652
        %v877 = vpop.f32.mrf.mxu0
        %v878 = vadd.f32 0.0, %v877
        %879 = vmatmul.f32.gmra.mxu0 %v655
        %v880 = vpop.f32.mrf.mxu0
        %v881 = vadd.f32 0.0, %v880
        %882 = vmatmul.f32.gmra.mxu0 %v658
        %v883 = vpop.f32.mrf.mxu0
        %v884 = vadd.f32 0.0, %v883
        %885 = vmatmul.f32.gmra.mxu0 %v661
        %v886 = vpop.f32.mrf.mxu0
        %v887 = vadd.f32 0.0, %v886
        %888 = vmatmul.f32.gmra.mxu0 %v664
        %v889 = vpop.f32.mrf.mxu0
        %v890 = vadd.f32 0.0, %v889
        %891 = vmatmul.f32.gmra.mxu0 %v667
        %v892 = vpop.f32.mrf.mxu0
        %v893 = vadd.f32 0.0, %v892
        %894 = vmatmul.f32.gmra.mxu0 %v670
        %v895 = vpop.f32.mrf.mxu0
        %v896 = vadd.f32 0.0, %v895
        %897 = vmatmul.f32.gmra.mxu0 %v673
        %v898 = vpop.f32.mrf.mxu0
        %v899 = vadd.f32 0.0, %v898
        %900 = vmatmul.f32.gmra.mxu0 %v676
        %v901 = vpop.f32.mrf.mxu0
        %v902 = vadd.f32 0.0, %v901
        %903 = vmatmul.f32.gmra.mxu0 %v679
        %v904 = vpop.f32.mrf.mxu0
        %v905 = vadd.f32 0.0, %v904
        %906 = vmatmul.f32.gmra.mxu0 %v682
        %v907 = vpop.f32.mrf.mxu0
        %v908 = vadd.f32 0.0, %v907
        %909 = vmatmul.f32.gmra.mxu0 %v685
        %v910 = vpop.f32.mrf.mxu0
        %v911 = vadd.f32 0.0, %v910
        %912 = vmatmul.f32.gmra.mxu0 %v688
        %v913 = vpop.f32.mrf.mxu0
        %v914 = vadd.f32 0.0, %v913
        %915 = vmatmul.f32.gmra.mxu0 %v691
        %v916 = vpop.f32.mrf.mxu0
        %v917 = vadd.f32 0.0, %v916
        %918 = vmatmul.f32.gmra.mxu0 %v694
        %v919 = vpop.f32.mrf.mxu0
        %v920 = vadd.f32 0.0, %v919
        %921 = vmatmul.f32.gmra.mxu0 %v697
        %v922 = vpop.f32.mrf.mxu0
        %v923 = vadd.f32 0.0, %v922
        %924 = vmatmul.f32.gmra.mxu0 %v700
        %v925 = vpop.f32.mrf.mxu0
        %v926 = vadd.f32 0.0, %v925
        %927 = vmatmul.f32.gmra.mxu0 %v703
        %v928 = vpop.f32.mrf.mxu0
        %v929 = vadd.f32 0.0, %v928
        %930 = vmatmul.f32.gmra.mxu0 %v706
        %v931 = vpop.f32.mrf.mxu0
        %v932 = vadd.f32 0.0, %v931
        %933 = vmatmul.f32.gmra.mxu0 %v709
        %v934 = vpop.f32.mrf.mxu0
        %v935 = vadd.f32 0.0, %v934
        %936 = vdwg.mxu0
        %v938 = vsel %vm481, %v518, 0
        %v941 = vsel %vm481, %v519, 0
        %v944 = vsel %vm481, %v520, 0
        %v947 = vsel %vm481, %v521, 0
        %v950 = vsel %vm481, %v522, 0
        %v953 = vsel %vm481, %v523, 0
        %v956 = vsel %vm481, %v524, 0
        %v959 = vsel %vm481, %v525, 0
        %v962 = vsel %vm481, %v526, 0
        %v965 = vsel %vm481, %v527, 0
        %v968 = vsel %vm481, %v528, 0
        %v971 = vsel %vm481, %v529, 0
        %v974 = vsel %vm481, %v530, 0
        %v977 = vsel %vm481, %v531, 0
        %v980 = vsel %vm481, %v532, 0
        %v983 = vsel %vm481, %v533, 0
        %v986 = vsel %vm481, %v534, 0
        %v989 = vsel %vm481, %v535, 0
        %v992 = vsel %vm481, %v536, 0
        %v995 = vsel %vm481, %v537, 0
        %v998 = vsel %vm481, %v538, 0
        %v1001 = vsel %vm481, %v539, 0
        %v1004 = vsel %vm481, %v540, 0
        %v1007 = vsel %vm481, %v541, 0
        %v1010 = vsel %vm481, %v542, 0
        %v1013 = vsel %vm481, %v543, 0
        %v1016 = vsel %vm481, %v544, 0
        %v1019 = vsel %vm481, %v545, 0
        %v1022 = vsel %vm481, %v546, 0
        %v1025 = vsel %vm481, %v547, 0
        %v1028 = vsel %vm481, %v548, 0
        %v1031 = vsel %vm481, %v549, 0
        %1033 = vmatpush.msra.mxu0 0.0
        %1034 = vmatpush.msra.mxu0 0.0
        %1035 = vmatpush.msra.mxu0 0.0
        %1036 = vmatpush.msra.mxu0 0.0
        %1037 = vmatpush.msra.mxu0 0.0
        %1038 = vmatpush.msra.mxu0 0.0
        %1039 = vmatpush.msra.mxu0 0.0
        %1040 = vmatpush.msra.mxu0 0.0
        %1041 = vmatpush.msra.mxu0 %v564
        %1042 = vmatpush.msra.mxu0 %v562
        %1043 = vmatpush.msra.mxu0 %v560
        %1044 = vmatpush.msra.mxu0 %v558
        %1045 = vmatpush.msra.mxu0 %v556
        %1046 = vmatpush.msra.mxu0 %v554
        %1047 = vmatpush.msra.mxu0 %v552
        %1048 = vmatpush.msra.mxu0 %v550
        %1049 = vmatmul.f32.gmra.mxu0 %v938
        %v1050 = vpop.f32.mrf.mxu0
        %v1051 = vadd.f32 %v729, %v1050
        %1052 = vmatmul.f32.gmra.mxu0 %v941
        %v1053 = vpop.f32.mrf.mxu0
        %v1054 = vadd.f32 %v732, %v1053
        %1055 = vmatmul.f32.gmra.mxu0 %v944
        %v1056 = vpop.f32.mrf.mxu0
        %v1057 = vadd.f32 %v735, %v1056
        %1058 = vmatmul.f32.gmra.mxu0 %v947
        %v1059 = vpop.f32.mrf.mxu0
        %v1060 = vadd.f32 %v738, %v1059
        %1061 = vmatmul.f32.gmra.mxu0 %v950
        %v1062 = vpop.f32.mrf.mxu0
        %v1063 = vadd.f32 %v741, %v1062
        %1064 = vmatmul.f32.gmra.mxu0 %v953
        %v1065 = vpop.f32.mrf.mxu0
        %v1066 = vadd.f32 %v744, %v1065
        %1067 = vmatmul.f32.gmra.mxu0 %v956
        %v1068 = vpop.f32.mrf.mxu0
        %v1069 = vadd.f32 %v747, %v1068
        %1070 = vmatmul.f32.gmra.mxu0 %v959
        %v1071 = vpop.f32.mrf.mxu0
        %v1072 = vadd.f32 %v750, %v1071
        %1073 = vmatmul.f32.gmra.mxu0 %v962
        %v1074 = vpop.f32.mrf.mxu0
        %v1075 = vadd.f32 %v753, %v1074
        %1076 = vmatmul.f32.gmra.mxu0 %v965
        %v1077 = vpop.f32.mrf.mxu0
        %v1078 = vadd.f32 %v756, %v1077
        %1079 = vmatmul.f32.gmra.mxu0 %v968
        %v1080 = vpop.f32.mrf.mxu0
        %v1081 = vadd.f32 %v759, %v1080
        %1082 = vmatmul.f32.gmra.mxu0 %v971
        %v1083 = vpop.f32.mrf.mxu0
        %v1084 = vadd.f32 %v762, %v1083
        %1085 = vmatmul.f32.gmra.mxu0 %v974
        %v1086 = vpop.f32.mrf.mxu0
        %v1087 = vadd.f32 %v765, %v1086
        %1088 = vmatmul.f32.gmra.mxu0 %v977
        %v1089 = vpop.f32.mrf.mxu0
        %v1090 = vadd.f32 %v768, %v1089
        %1091 = vmatmul.f32.gmra.mxu0 %v980
        %v1092 = vpop.f32.mrf.mxu0
        %v1093 = vadd.f32 %v771, %v1092
        %1094 = vmatmul.f32.gmra.mxu0 %v983
        %v1095 = vpop.f32.mrf.mxu0
        %v1096 = vadd.f32 %v774, %v1095
        %1097 = vmatmul.f32.gmra.mxu0 %v986
        %v1098 = vpop.f32.mrf.mxu0
        %v1099 = vadd.f32 %v777, %v1098
        %1100 = vmatmul.f32.gmra.mxu0 %v989
        %v1101 = vpop.f32.mrf.mxu0
        %v1102 = vadd.f32 %v780, %v1101
        %1103 = vmatmul.f32.gmra.mxu0 %v992
        %v1104 = vpop.f32.mrf.mxu0
        %v1105 = vadd.f32 %v783, %v1104
        %1106 = vmatmul.f32.gmra.mxu0 %v995
        %v1107 = vpop.f32.mrf.mxu0
        %v1108 = vadd.f32 %v786, %v1107
        %1109 = vmatmul.f32.gmra.mxu0 %v998
        %v1110 = vpop.f32.mrf.mxu0
        %v1111 = vadd.f32 %v789, %v1110
        %1112 = vmatmul.f32.gmra.mxu0 %v1001
        %v1113 = vpop.f32.mrf.mxu0
        %v1114 = vadd.f32 %v792, %v1113
        %1115 = vmatmul.f32.gmra.mxu0 %v1004
        %v1116 = vpop.f32.mrf.mxu0
        %v1117 = vadd.f32 %v795, %v1116
        %1118 = vmatmul.f32.gmra.mxu0 %v1007
        %v1119 = vpop.f32.mrf.mxu0
        %v1120 = vadd.f32 %v798, %v1119
        %1121 = vmatmul.f32.gmra.mxu0 %v1010
        %v1122 = vpop.f32.mrf.mxu0
        %v1123 = vadd.f32 %v801, %v1122
        %1124 = vmatmul.f32.gmra.mxu0 %v1013
        %v1125 = vpop.f32.mrf.mxu0
        %v1126 = vadd.f32 %v804, %v1125
        %1127 = vmatmul.f32.gmra.mxu0 %v1016
        %v1128 = vpop.f32.mrf.mxu0
        %v1129 = vadd.f32 %v807, %v1128
        %1130 = vmatmul.f32.gmra.mxu0 %v1019
        %v1131 = vpop.f32.mrf.mxu0
        %v1132 = vadd.f32 %v810, %v1131
        %1133 = vmatmul.f32.gmra.mxu0 %v1022
        %v1134 = vpop.f32.mrf.mxu0
        %v1135 = vadd.f32 %v813, %v1134
        %1136 = vmatmul.f32.gmra.mxu0 %v1025
        %v1137 = vpop.f32.mrf.mxu0
        %v1138 = vadd.f32 %v816, %v1137
        %1139 = vmatmul.f32.gmra.mxu0 %v1028
        %v1140 = vpop.f32.mrf.mxu0
        %v1141 = vadd.f32 %v819, %v1140
        %1142 = vmatmul.f32.gmra.mxu0 %v1031
        %v1143 = vpop.f32.mrf.mxu0
        %v1144 = vadd.f32 %v822, %v1143
        %1145 = vdwg.mxu0
        %1146 = vmatpush.msra.mxu0 0.0
        %1147 = vmatpush.msra.mxu0 0.0
        %1148 = vmatpush.msra.mxu0 0.0
        %1149 = vmatpush.msra.mxu0 0.0
        %1150 = vmatpush.msra.mxu0 0.0
        %1151 = vmatpush.msra.mxu0 0.0
        %1152 = vmatpush.msra.mxu0 0.0
        %1153 = vmatpush.msra.mxu0 0.0
        %1154 = vmatpush.msra.mxu0 %v565
        %1155 = vmatpush.msra.mxu0 %v563
        %1156 = vmatpush.msra.mxu0 %v561
        %1157 = vmatpush.msra.mxu0 %v559
        %1158 = vmatpush.msra.mxu0 %v557
        %1159 = vmatpush.msra.mxu0 %v555
        %1160 = vmatpush.msra.mxu0 %v553
        %1161 = vmatpush.msra.mxu0 %v551
        %1162 = vmatmul.f32.gmra.mxu0 %v938
        %v1163 = vpop.f32.mrf.mxu0
        %v1164 = vadd.f32 %v842, %v1163
        %1165 = vmatmul.f32.gmra.mxu0 %v941
        %v1166 = vpop.f32.mrf.mxu0
        %v1167 = vadd.f32 %v845, %v1166
        %1168 = vmatmul.f32.gmra.mxu0 %v944
        %v1169 = vpop.f32.mrf.mxu0
        %v1170 = vadd.f32 %v848, %v1169
        %1171 = vmatmul.f32.gmra.mxu0 %v947
        %v1172 = vpop.f32.mrf.mxu0
        %v1173 = vadd.f32 %v851, %v1172
        %1174 = vmatmul.f32.gmra.mxu0 %v950
        %v1175 = vpop.f32.mrf.mxu0
        %v1176 = vadd.f32 %v854, %v1175
        %1177 = vmatmul.f32.gmra.mxu0 %v953
        %v1178 = vpop.f32.mrf.mxu0
        %v1179 = vadd.f32 %v857, %v1178
        %1180 = vmatmul.f32.gmra.mxu0 %v956
        %v1181 = vpop.f32.mrf.mxu0
        %v1182 = vadd.f32 %v860, %v1181
        %1183 = vmatmul.f32.gmra.mxu0 %v959
        %v1184 = vpop.f32.mrf.mxu0
        %v1185 = vadd.f32 %v863, %v1184
        %1186 = vmatmul.f32.gmra.mxu0 %v962
        %v1187 = vpop.f32.mrf.mxu0
        %v1188 = vadd.f32 %v866, %v1187
        %1189 = vmatmul.f32.gmra.mxu0 %v965
        %v1190 = vpop.f32.mrf.mxu0
        %v1191 = vadd.f32 %v869, %v1190
        %1192 = vmatmul.f32.gmra.mxu0 %v968
        %v1193 = vpop.f32.mrf.mxu0
        %v1194 = vadd.f32 %v872, %v1193
        %1195 = vmatmul.f32.gmra.mxu0 %v971
        %v1196 = vpop.f32.mrf.mxu0
        %v1197 = vadd.f32 %v875, %v1196
        %1198 = vmatmul.f32.gmra.mxu0 %v974
        %v1199 = vpop.f32.mrf.mxu0
        %v1200 = vadd.f32 %v878, %v1199
        %1201 = vmatmul.f32.gmra.mxu0 %v977
        %v1202 = vpop.f32.mrf.mxu0
        %v1203 = vadd.f32 %v881, %v1202
        %1204 = vmatmul.f32.gmra.mxu0 %v980
        %v1205 = vpop.f32.mrf.mxu0
        %v1206 = vadd.f32 %v884, %v1205
        %1207 = vmatmul.f32.gmra.mxu0 %v983
        %v1208 = vpop.f32.mrf.mxu0
        %v1209 = vadd.f32 %v887, %v1208
        %1210 = vmatmul.f32.gmra.mxu0 %v986
        %v1211 = vpop.f32.mrf.mxu0
        %v1212 = vadd.f32 %v890, %v1211
        %1213 = vmatmul.f32.gmra.mxu0 %v989
        %v1214 = vpop.f32.mrf.mxu0
        %v1215 = vadd.f32 %v893, %v1214
        %1216 = vmatmul.f32.gmra.mxu0 %v992
        %v1217 = vpop.f32.mrf.mxu0
        %v1218 = vadd.f32 %v896, %v1217
        %1219 = vmatmul.f32.gmra.mxu0 %v995
        %v1220 = vpop.f32.mrf.mxu0
        %v1221 = vadd.f32 %v899, %v1220
        %1222 = vmatmul.f32.gmra.mxu0 %v998
        %v1223 = vpop.f32.mrf.mxu0
        %v1224 = vadd.f32 %v902, %v1223
        %1225 = vmatmul.f32.gmra.mxu0 %v1001
        %v1226 = vpop.f32.mrf.mxu0
        %v1227 = vadd.f32 %v905, %v1226
        %1228 = vmatmul.f32.gmra.mxu0 %v1004
        %v1229 = vpop.f32.mrf.mxu0
        %v1230 = vadd.f32 %v908, %v1229
        %1231 = vmatmul.f32.gmra.mxu0 %v1007
        %v1232 = vpop.f32.mrf.mxu0
        %v1233 = vadd.f32 %v911, %v1232
        %1234 = vmatmul.f32.gmra.mxu0 %v1010
        %v1235 = vpop.f32.mrf.mxu0
        %v1236 = vadd.f32 %v914, %v1235
        %1237 = vmatmul.f32.gmra.mxu0 %v1013
        %v1238 = vpop.f32.mrf.mxu0
        %v1239 = vadd.f32 %v917, %v1238
        %1240 = vmatmul.f32.gmra.mxu0 %v1016
        %v1241 = vpop.f32.mrf.mxu0
        %v1242 = vadd.f32 %v920, %v1241
        %1243 = vmatmul.f32.gmra.mxu0 %v1019
        %v1244 = vpop.f32.mrf.mxu0
        %v1245 = vadd.f32 %v923, %v1244
        %1246 = vmatmul.f32.gmra.mxu0 %v1022
        %v1247 = vpop.f32.mrf.mxu0
        %v1248 = vadd.f32 %v926, %v1247
        %1249 = vmatmul.f32.gmra.mxu0 %v1025
        %v1250 = vpop.f32.mrf.mxu0
        %v1251 = vadd.f32 %v929, %v1250
        %1252 = vmatmul.f32.gmra.mxu0 %v1028
        %v1253 = vpop.f32.mrf.mxu0
        %v1254 = vadd.f32 %v932, %v1253
        %1255 = vmatmul.f32.gmra.mxu0 %v1031
        %v1256 = vpop.f32.mrf.mxu0
        %v1257 = vadd.f32 %v935, %v1256
        %1258 = vdwg.mxu0
        %v1259 = vld [vmem:[#allocation2 + $0xd] sm:$0xff]
        %v1260 = vld [vmem:[#allocation2 + $0x15] sm:$0xff]
        %v1261 = vld [vmem:[#allocation2 + $0x1d] sm:$0xff]
        %v1262 = vld [vmem:[#allocation2 + $0x25] sm:$0xff]
        %v1263 = vld [vmem:[#allocation2 + $0x2d] sm:$0xff]
        %v1264 = vld [vmem:[#allocation2 + $0x35] sm:$0xff]
        %v1265 = vld [vmem:[#allocation2 + $0x3d] sm:$0xff]
        %v1266 = vld [vmem:[#allocation2 + $0x45] sm:$0xff]
        %v1267 = vld [vmem:[#allocation2 + $0x4d] sm:$0xff]
        %v1268 = vld [vmem:[#allocation2 + $0x55] sm:$0xff]
        %v1269 = vld [vmem:[#allocation2 + $0x5d] sm:$0xff]
        %v1270 = vld [vmem:[#allocation2 + $0x65] sm:$0xff]
        %v1271 = vld [vmem:[#allocation2 + $0x6d] sm:$0xff]
        %v1272 = vld [vmem:[#allocation2 + $0x75] sm:$0xff]
        %v1273 = vld [vmem:[#allocation2 + $0x7d] sm:$0xff]
        %v1274 = vld [vmem:[#allocation2 + $0x85] sm:$0xff]
        %v1275 = vld [vmem:[#allocation2 + $0x8d] sm:$0xff]
        %v1276 = vld [vmem:[#allocation2 + $0x95] sm:$0xff]
        %v1277 = vld [vmem:[#allocation2 + $0x9d] sm:$0xff]
        %v1278 = vld [vmem:[#allocation2 + $0xa5] sm:$0xff]
        %v1279 = vld [vmem:[#allocation2 + $0xad] sm:$0xff]
        %v1280 = vld [vmem:[#allocation2 + $0xb5] sm:$0xff]
        %v1281 = vld [vmem:[#allocation2 + $0xbd] sm:$0xff]
        %v1282 = vld [vmem:[#allocation2 + $0xc5] sm:$0xff]
        %v1283 = vld [vmem:[#allocation2 + $0xcd] sm:$0xff]
        %v1284 = vld [vmem:[#allocation2 + $0xd5] sm:$0xff]
        %v1285 = vld [vmem:[#allocation2 + $0xdd] sm:$0xff]
        %v1286 = vld [vmem:[#allocation2 + $0xe5] sm:$0xff]
        %v1287 = vld [vmem:[#allocation2 + $0xed] sm:$0xff]
        %v1288 = vld [vmem:[#allocation2 + $0xf5] sm:$0xff]
        %v1289 = vld [vmem:[#allocation2 + $0xfd] sm:$0xff]
        %v1290 = vld [vmem:[#allocation2 + $0x105] sm:$0xff]
        %s1291 = scalar_lea.vmem %s424, 256
        %v1292 = vld [vmem:[%s1291] sm:$0xff]
        %v1293 = vld [vmem:[%s1291 + $0x8] sm:$0xff]
        %v1294 = vld [vmem:[%s1291 + $0x10] sm:$0xff]
        %v1295 = vld [vmem:[%s1291 + $0x18] sm:$0xff]
        %v1296 = vld [vmem:[%s1291 + $0x20] sm:$0xff]
        %v1297 = vld [vmem:[%s1291 + $0x28] sm:$0xff]
        %v1298 = vld [vmem:[%s1291 + $0x30] sm:$0xff]
        %v1299 = vld [vmem:[%s1291 + $0x38] sm:$0xff]
        %v1300 = vld [vmem:[%s1291 + $0x40] sm:$0xff]
        %v1301 = vld [vmem:[%s1291 + $0x48] sm:$0xff]
        %v1302 = vld [vmem:[%s1291 + $0x50] sm:$0xff]
        %v1303 = vld [vmem:[%s1291 + $0x58] sm:$0xff]
        %v1304 = vld [vmem:[%s1291 + $0x60] sm:$0xff]
        %v1305 = vld [vmem:[%s1291 + $0x68] sm:$0xff]
        %v1306 = vld [vmem:[%s1291 + $0x70] sm:$0xff]
        %v1307 = vld [vmem:[%s1291 + $0x78] sm:$0xff]
        %v1309 = vsel %vm481, %v1259, 0
        %v1312 = vsel %vm481, %v1260, 0
        %v1315 = vsel %vm481, %v1261, 0
        %v1318 = vsel %vm481, %v1262, 0
        %v1321 = vsel %vm481, %v1263, 0
        %v1324 = vsel %vm481, %v1264, 0
        %v1327 = vsel %vm481, %v1265, 0
        %v1330 = vsel %vm481, %v1266, 0
        %v1333 = vsel %vm481, %v1267, 0
        %v1336 = vsel %vm481, %v1268, 0
        %v1339 = vsel %vm481, %v1269, 0
        %v1342 = vsel %vm481, %v1270, 0
        %v1345 = vsel %vm481, %v1271, 0
        %v1348 = vsel %vm481, %v1272, 0
        %v1351 = vsel %vm481, %v1273, 0
        %v1354 = vsel %vm481, %v1274, 0
        %v1357 = vsel %vm481, %v1275, 0
        %v1360 = vsel %vm481, %v1276, 0
        %v1363 = vsel %vm481, %v1277, 0
        %v1366 = vsel %vm481, %v1278, 0
        %v1369 = vsel %vm481, %v1279, 0
        %v1372 = vsel %vm481, %v1280, 0
        %v1375 = vsel %vm481, %v1281, 0
        %v1378 = vsel %vm481, %v1282, 0
        %v1381 = vsel %vm481, %v1283, 0
        %v1384 = vsel %vm481, %v1284, 0
        %v1387 = vsel %vm481, %v1285, 0
        %v1390 = vsel %vm481, %v1286, 0
        %v1393 = vsel %vm481, %v1287, 0
        %v1396 = vsel %vm481, %v1288, 0
        %v1399 = vsel %vm481, %v1289, 0
        %v1402 = vsel %vm481, %v1290, 0
        %1404 = vmatpush.msra.mxu0 0.0
        %1405 = vmatpush.msra.mxu0 0.0
        %1406 = vmatpush.msra.mxu0 0.0
        %1407 = vmatpush.msra.mxu0 0.0
        %1408 = vmatpush.msra.mxu0 0.0
        %1409 = vmatpush.msra.mxu0 0.0
        %1410 = vmatpush.msra.mxu0 0.0
        %1411 = vmatpush.msra.mxu0 0.0
        %1412 = vmatpush.msra.mxu0 %v1306
        %1413 = vmatpush.msra.mxu0 %v1304
        %1414 = vmatpush.msra.mxu0 %v1302
        %1415 = vmatpush.msra.mxu0 %v1300
        %1416 = vmatpush.msra.mxu0 %v1298
        %1417 = vmatpush.msra.mxu0 %v1296
        %1418 = vmatpush.msra.mxu0 %v1294
        %1419 = vmatpush.msra.mxu0 %v1292
        %1420 = vmatmul.f32.gmra.mxu0 %v1309
        %v1421 = vpop.f32.mrf.mxu0
        %v1422 = vadd.f32 0.0, %v1421
        %1423 = vmatmul.f32.gmra.mxu0 %v1312
        %v1424 = vpop.f32.mrf.mxu0
        %v1425 = vadd.f32 0.0, %v1424
        %1426 = vmatmul.f32.gmra.mxu0 %v1315
        %v1427 = vpop.f32.mrf.mxu0
        %v1428 = vadd.f32 0.0, %v1427
        %1429 = vmatmul.f32.gmra.mxu0 %v1318
        %v1430 = vpop.f32.mrf.mxu0
        %v1431 = vadd.f32 0.0, %v1430
        %1432 = vmatmul.f32.gmra.mxu0 %v1321
        %v1433 = vpop.f32.mrf.mxu0
        %v1434 = vadd.f32 0.0, %v1433
        %1435 = vmatmul.f32.gmra.mxu0 %v1324
        %v1436 = vpop.f32.mrf.mxu0
        %v1437 = vadd.f32 0.0, %v1436
        %1438 = vmatmul.f32.gmra.mxu0 %v1327
        %v1439 = vpop.f32.mrf.mxu0
        %v1440 = vadd.f32 0.0, %v1439
        %1441 = vmatmul.f32.gmra.mxu0 %v1330
        %v1442 = vpop.f32.mrf.mxu0
        %v1443 = vadd.f32 0.0, %v1442
        %1444 = vmatmul.f32.gmra.mxu0 %v1333
        %v1445 = vpop.f32.mrf.mxu0
        %v1446 = vadd.f32 0.0, %v1445
        %1447 = vmatmul.f32.gmra.mxu0 %v1336
        %v1448 = vpop.f32.mrf.mxu0
        %v1449 = vadd.f32 0.0, %v1448
        %1450 = vmatmul.f32.gmra.mxu0 %v1339
        %v1451 = vpop.f32.mrf.mxu0
        %v1452 = vadd.f32 0.0, %v1451
        %1453 = vmatmul.f32.gmra.mxu0 %v1342
        %v1454 = vpop.f32.mrf.mxu0
        %v1455 = vadd.f32 0.0, %v1454
        %1456 = vmatmul.f32.gmra.mxu0 %v1345
        %v1457 = vpop.f32.mrf.mxu0
        %v1458 = vadd.f32 0.0, %v1457
        %1459 = vmatmul.f32.gmra.mxu0 %v1348
        %v1460 = vpop.f32.mrf.mxu0
        %v1461 = vadd.f32 0.0, %v1460
        %1462 = vmatmul.f32.gmra.mxu0 %v1351
        %v1463 = vpop.f32.mrf.mxu0
        %v1464 = vadd.f32 0.0, %v1463
        %1465 = vmatmul.f32.gmra.mxu0 %v1354
        %v1466 = vpop.f32.mrf.mxu0
        %v1467 = vadd.f32 0.0, %v1466
        %1468 = vmatmul.f32.gmra.mxu0 %v1357
        %v1469 = vpop.f32.mrf.mxu0
        %v1470 = vadd.f32 0.0, %v1469
        %1471 = vmatmul.f32.gmra.mxu0 %v1360
        %v1472 = vpop.f32.mrf.mxu0
        %v1473 = vadd.f32 0.0, %v1472
        %1474 = vmatmul.f32.gmra.mxu0 %v1363
        %v1475 = vpop.f32.mrf.mxu0
        %v1476 = vadd.f32 0.0, %v1475
        %1477 = vmatmul.f32.gmra.mxu0 %v1366
        %v1478 = vpop.f32.mrf.mxu0
        %v1479 = vadd.f32 0.0, %v1478
        %1480 = vmatmul.f32.gmra.mxu0 %v1369
        %v1481 = vpop.f32.mrf.mxu0
        %v1482 = vadd.f32 0.0, %v1481
        %1483 = vmatmul.f32.gmra.mxu0 %v1372
        %v1484 = vpop.f32.mrf.mxu0
        %v1485 = vadd.f32 0.0, %v1484
        %1486 = vmatmul.f32.gmra.mxu0 %v1375
        %v1487 = vpop.f32.mrf.mxu0
        %v1488 = vadd.f32 0.0, %v1487
        %1489 = vmatmul.f32.gmra.mxu0 %v1378
        %v1490 = vpop.f32.mrf.mxu0
        %v1491 = vadd.f32 0.0, %v1490
        %1492 = vmatmul.f32.gmra.mxu0 %v1381
        %v1493 = vpop.f32.mrf.mxu0
        %v1494 = vadd.f32 0.0, %v1493
        %1495 = vmatmul.f32.gmra.mxu0 %v1384
        %v1496 = vpop.f32.mrf.mxu0
        %v1497 = vadd.f32 0.0, %v1496
        %1498 = vmatmul.f32.gmra.mxu0 %v1387
        %v1499 = vpop.f32.mrf.mxu0
        %v1500 = vadd.f32 0.0, %v1499
        %1501 = vmatmul.f32.gmra.mxu0 %v1390
        %v1502 = vpop.f32.mrf.mxu0
        %v1503 = vadd.f32 0.0, %v1502
        %1504 = vmatmul.f32.gmra.mxu0 %v1393
        %v1505 = vpop.f32.mrf.mxu0
        %v1506 = vadd.f32 0.0, %v1505
        %1507 = vmatmul.f32.gmra.mxu0 %v1396
        %v1508 = vpop.f32.mrf.mxu0
        %v1509 = vadd.f32 0.0, %v1508
        %1510 = vmatmul.f32.gmra.mxu0 %v1399
        %v1511 = vpop.f32.mrf.mxu0
        %v1512 = vadd.f32 0.0, %v1511
        %1513 = vmatmul.f32.gmra.mxu0 %v1402
        %v1514 = vpop.f32.mrf.mxu0
        %v1515 = vadd.f32 0.0, %v1514
        %1516 = vdwg.mxu0
        %1517 = vmatpush.msra.mxu0 0.0
        %1518 = vmatpush.msra.mxu0 0.0
        %1519 = vmatpush.msra.mxu0 0.0
        %1520 = vmatpush.msra.mxu0 0.0
        %1521 = vmatpush.msra.mxu0 0.0
        %1522 = vmatpush.msra.mxu0 0.0
        %1523 = vmatpush.msra.mxu0 0.0
        %1524 = vmatpush.msra.mxu0 0.0
        %1525 = vmatpush.msra.mxu0 %v1307
        %1526 = vmatpush.msra.mxu0 %v1305
        %1527 = vmatpush.msra.mxu0 %v1303
        %1528 = vmatpush.msra.mxu0 %v1301
        %1529 = vmatpush.msra.mxu0 %v1299
        %1530 = vmatpush.msra.mxu0 %v1297
        %1531 = vmatpush.msra.mxu0 %v1295
        %1532 = vmatpush.msra.mxu0 %v1293
        %1533 = vmatmul.f32.gmra.mxu0 %v1309
        %v1534 = vpop.f32.mrf.mxu0
        %v1535 = vadd.f32 0.0, %v1534
        %1536 = vmatmul.f32.gmra.mxu0 %v1312
        %v1537 = vpop.f32.mrf.mxu0
        %v1538 = vadd.f32 0.0, %v1537
        %1539 = vmatmul.f32.gmra.mxu0 %v1315
        %v1540 = vpop.f32.mrf.mxu0
        %v1541 = vadd.f32 0.0, %v1540
        %1542 = vmatmul.f32.gmra.mxu0 %v1318
        %v1543 = vpop.f32.mrf.mxu0
        %v1544 = vadd.f32 0.0, %v1543
        %1545 = vmatmul.f32.gmra.mxu0 %v1321
        %v1546 = vpop.f32.mrf.mxu0
        %v1547 = vadd.f32 0.0, %v1546
        %1548 = vmatmul.f32.gmra.mxu0 %v1324
        %v1549 = vpop.f32.mrf.mxu0
        %v1550 = vadd.f32 0.0, %v1549
        %1551 = vmatmul.f32.gmra.mxu0 %v1327
        %v1552 = vpop.f32.mrf.mxu0
        %v1553 = vadd.f32 0.0, %v1552
        %1554 = vmatmul.f32.gmra.mxu0 %v1330
        %v1555 = vpop.f32.mrf.mxu0
        %v1556 = vadd.f32 0.0, %v1555
        %1557 = vmatmul.f32.gmra.mxu0 %v1333
        %v1558 = vpop.f32.mrf.mxu0
        %v1559 = vadd.f32 0.0, %v1558
        %1560 = vmatmul.f32.gmra.mxu0 %v1336
        %v1561 = vpop.f32.mrf.mxu0
        %v1562 = vadd.f32 0.0, %v1561
        %1563 = vmatmul.f32.gmra.mxu0 %v1339
        %v1564 = vpop.f32.mrf.mxu0
        %v1565 = vadd.f32 0.0, %v1564
        %1566 = vmatmul.f32.gmra.mxu0 %v1342
        %v1567 = vpop.f32.mrf.mxu0
        %v1568 = vadd.f32 0.0, %v1567
        %1569 = vmatmul.f32.gmra.mxu0 %v1345
        %v1570 = vpop.f32.mrf.mxu0
        %v1571 = vadd.f32 0.0, %v1570
        %1572 = vmatmul.f32.gmra.mxu0 %v1348
        %v1573 = vpop.f32.mrf.mxu0
        %v1574 = vadd.f32 0.0, %v1573
        %1575 = vmatmul.f32.gmra.mxu0 %v1351
        %v1576 = vpop.f32.mrf.mxu0
        %v1577 = vadd.f32 0.0, %v1576
        %1578 = vmatmul.f32.gmra.mxu0 %v1354
        %v1579 = vpop.f32.mrf.mxu0
        %v1580 = vadd.f32 0.0, %v1579
        %1581 = vmatmul.f32.gmra.mxu0 %v1357
        %v1582 = vpop.f32.mrf.mxu0
        %v1583 = vadd.f32 0.0, %v1582
        %1584 = vmatmul.f32.gmra.mxu0 %v1360
        %v1585 = vpop.f32.mrf.mxu0
        %v1586 = vadd.f32 0.0, %v1585
        %1587 = vmatmul.f32.gmra.mxu0 %v1363
        %v1588 = vpop.f32.mrf.mxu0
        %v1589 = vadd.f32 0.0, %v1588
        %1590 = vmatmul.f32.gmra.mxu0 %v1366
        %v1591 = vpop.f32.mrf.mxu0
        %v1592 = vadd.f32 0.0, %v1591
        %1593 = vmatmul.f32.gmra.mxu0 %v1369
        %v1594 = vpop.f32.mrf.mxu0
        %v1595 = vadd.f32 0.0, %v1594
        %1596 = vmatmul.f32.gmra.mxu0 %v1372
        %v1597 = vpop.f32.mrf.mxu0
        %v1598 = vadd.f32 0.0, %v1597
        %1599 = vmatmul.f32.gmra.mxu0 %v1375
        %v1600 = vpop.f32.mrf.mxu0
        %v1601 = vadd.f32 0.0, %v1600
        %1602 = vmatmul.f32.gmra.mxu0 %v1378
        %v1603 = vpop.f32.mrf.mxu0
        %v1604 = vadd.f32 0.0, %v1603
        %1605 = vmatmul.f32.gmra.mxu0 %v1381
        %v1606 = vpop.f32.mrf.mxu0
        %v1607 = vadd.f32 0.0, %v1606
        %1608 = vmatmul.f32.gmra.mxu0 %v1384
        %v1609 = vpop.f32.mrf.mxu0
        %v1610 = vadd.f32 0.0, %v1609
        %1611 = vmatmul.f32.gmra.mxu0 %v1387
        %v1612 = vpop.f32.mrf.mxu0
        %v1613 = vadd.f32 0.0, %v1612
        %1614 = vmatmul.f32.gmra.mxu0 %v1390
        %v1615 = vpop.f32.mrf.mxu0
        %v1616 = vadd.f32 0.0, %v1615
        %1617 = vmatmul.f32.gmra.mxu0 %v1393
        %v1618 = vpop.f32.mrf.mxu0
        %v1619 = vadd.f32 0.0, %v1618
        %1620 = vmatmul.f32.gmra.mxu0 %v1396
        %v1621 = vpop.f32.mrf.mxu0
        %v1622 = vadd.f32 0.0, %v1621
        %1623 = vmatmul.f32.gmra.mxu0 %v1399
        %v1624 = vpop.f32.mrf.mxu0
        %v1625 = vadd.f32 0.0, %v1624
        %1626 = vmatmul.f32.gmra.mxu0 %v1402
        %v1627 = vpop.f32.mrf.mxu0
        %v1628 = vadd.f32 0.0, %v1627
        %1629 = vdwg.mxu0
        %v1630 = vadd.f32 %v1051, %v1422
        %v1631 = vadd.f32 %v1164, %v1535
        %v1632 = vadd.f32 %v1054, %v1425
        %v1633 = vadd.f32 %v1167, %v1538
        %v1634 = vadd.f32 %v1057, %v1428
        %v1635 = vadd.f32 %v1170, %v1541
        %v1636 = vadd.f32 %v1060, %v1431
        %v1637 = vadd.f32 %v1173, %v1544
        %v1638 = vadd.f32 %v1063, %v1434
        %v1639 = vadd.f32 %v1176, %v1547
        %v1640 = vadd.f32 %v1066, %v1437
        %v1641 = vadd.f32 %v1179, %v1550
        %v1642 = vadd.f32 %v1069, %v1440
        %v1643 = vadd.f32 %v1182, %v1553
        %v1644 = vadd.f32 %v1072, %v1443
        %v1645 = vadd.f32 %v1185, %v1556
        %v1646 = vadd.f32 %v1075, %v1446
        %v1647 = vadd.f32 %v1188, %v1559
        %v1648 = vadd.f32 %v1078, %v1449
        %v1649 = vadd.f32 %v1191, %v1562
        %v1650 = vadd.f32 %v1081, %v1452
        %v1651 = vadd.f32 %v1194, %v1565
        %v1652 = vadd.f32 %v1084, %v1455
        %v1653 = vadd.f32 %v1197, %v1568
        %v1654 = vadd.f32 %v1087, %v1458
        %v1655 = vadd.f32 %v1200, %v1571
        %v1656 = vadd.f32 %v1090, %v1461
        %v1657 = vadd.f32 %v1203, %v1574
        %v1658 = vadd.f32 %v1093, %v1464
        %v1659 = vadd.f32 %v1206, %v1577
        %v1660 = vadd.f32 %v1096, %v1467
        %v1661 = vadd.f32 %v1209, %v1580
        %v1662 = vadd.f32 %v1099, %v1470
        %v1663 = vadd.f32 %v1212, %v1583
        %v1664 = vadd.f32 %v1102, %v1473
        %v1665 = vadd.f32 %v1215, %v1586
        %v1666 = vadd.f32 %v1105, %v1476
        %v1667 = vadd.f32 %v1218, %v1589
        %v1668 = vadd.f32 %v1108, %v1479
        %v1669 = vadd.f32 %v1221, %v1592
        %v1670 = vadd.f32 %v1111, %v1482
        %v1671 = vadd.f32 %v1224, %v1595
        %v1672 = vadd.f32 %v1114, %v1485
        %v1673 = vadd.f32 %v1227, %v1598
        %v1674 = vadd.f32 %v1117, %v1488
        %v1675 = vadd.f32 %v1230, %v1601
        %v1676 = vadd.f32 %v1120, %v1491
        %v1677 = vadd.f32 %v1233, %v1604
        %v1678 = vadd.f32 %v1123, %v1494
        %v1679 = vadd.f32 %v1236, %v1607
        %v1680 = vadd.f32 %v1126, %v1497
        %v1681 = vadd.f32 %v1239, %v1610
        %v1682 = vadd.f32 %v1129, %v1500
        %v1683 = vadd.f32 %v1242, %v1613
        %v1684 = vadd.f32 %v1132, %v1503
        %v1685 = vadd.f32 %v1245, %v1616
        %v1686 = vadd.f32 %v1135, %v1506
        %v1687 = vadd.f32 %v1248, %v1619
        %v1688 = vadd.f32 %v1138, %v1509
        %v1689 = vadd.f32 %v1251, %v1622
        %v1690 = vadd.f32 %v1141, %v1512
        %v1691 = vadd.f32 %v1254, %v1625
        %v1692 = vadd.f32 %v1144, %v1515
        %v1693 = vadd.f32 %v1257, %v1628
        %v1694 = vld [vmem:[#allocation2 + $0xe] sm:$0xff]
        %v1695 = vld [vmem:[#allocation2 + $0x16] sm:$0xff]
        %v1696 = vld [vmem:[#allocation2 + $0x1e] sm:$0xff]
        %v1697 = vld [vmem:[#allocation2 + $0x26] sm:$0xff]
        %v1698 = vld [vmem:[#allocation2 + $0x2e] sm:$0xff]
        %v1699 = vld [vmem:[#allocation2 + $0x36] sm:$0xff]
        %v1700 = vld [vmem:[#allocation2 + $0x3e] sm:$0xff]
        %v1701 = vld [vmem:[#allocation2 + $0x46] sm:$0xff]
        %v1702 = vld [vmem:[#allocation2 + $0x4e] sm:$0xff]
        %v1703 = vld [vmem:[#allocation2 + $0x56] sm:$0xff]
        %v1704 = vld [vmem:[#allocation2 + $0x5e] sm:$0xff]
        %v1705 = vld [vmem:[#allocation2 + $0x66] sm:$0xff]
        %v1706 = vld [vmem:[#allocation2 + $0x6e] sm:$0xff]
        %v1707 = vld [vmem:[#allocation2 + $0x76] sm:$0xff]
        %v1708 = vld [vmem:[#allocation2 + $0x7e] sm:$0xff]
        %v1709 = vld [vmem:[#allocation2 + $0x86] sm:$0xff]
        %v1710 = vld [vmem:[#allocation2 + $0x8e] sm:$0xff]
        %v1711 = vld [vmem:[#allocation2 + $0x96] sm:$0xff]
        %v1712 = vld [vmem:[#allocation2 + $0x9e] sm:$0xff]
        %v1713 = vld [vmem:[#allocation2 + $0xa6] sm:$0xff]
        %v1714 = vld [vmem:[#allocation2 + $0xae] sm:$0xff]
        %v1715 = vld [vmem:[#allocation2 + $0xb6] sm:$0xff]
        %v1716 = vld [vmem:[#allocation2 + $0xbe] sm:$0xff]
        %v1717 = vld [vmem:[#allocation2 + $0xc6] sm:$0xff]
        %v1718 = vld [vmem:[#allocation2 + $0xce] sm:$0xff]
        %v1719 = vld [vmem:[#allocation2 + $0xd6] sm:$0xff]
        %v1720 = vld [vmem:[#allocation2 + $0xde] sm:$0xff]
        %v1721 = vld [vmem:[#allocation2 + $0xe6] sm:$0xff]
        %v1722 = vld [vmem:[#allocation2 + $0xee] sm:$0xff]
        %v1723 = vld [vmem:[#allocation2 + $0xf6] sm:$0xff]
        %v1724 = vld [vmem:[#allocation2 + $0xfe] sm:$0xff]
        %v1725 = vld [vmem:[#allocation2 + $0x106] sm:$0xff]
        %s1726 = scalar_lea.vmem %s424, 384
        %v1727 = vld [vmem:[%s1726] sm:$0xff]
        %v1728 = vld [vmem:[%s1726 + $0x8] sm:$0xff]
        %v1729 = vld [vmem:[%s1726 + $0x10] sm:$0xff]
        %v1730 = vld [vmem:[%s1726 + $0x18] sm:$0xff]
        %v1731 = vld [vmem:[%s1726 + $0x20] sm:$0xff]
        %v1732 = vld [vmem:[%s1726 + $0x28] sm:$0xff]
        %v1733 = vld [vmem:[%s1726 + $0x30] sm:$0xff]
        %v1734 = vld [vmem:[%s1726 + $0x38] sm:$0xff]
        %v1735 = vld [vmem:[%s1726 + $0x40] sm:$0xff]
        %v1736 = vld [vmem:[%s1726 + $0x48] sm:$0xff]
        %v1737 = vld [vmem:[%s1726 + $0x50] sm:$0xff]
        %v1738 = vld [vmem:[%s1726 + $0x58] sm:$0xff]
        %v1739 = vld [vmem:[%s1726 + $0x60] sm:$0xff]
        %v1740 = vld [vmem:[%s1726 + $0x68] sm:$0xff]
        %v1741 = vld [vmem:[%s1726 + $0x70] sm:$0xff]
        %v1742 = vld [vmem:[%s1726 + $0x78] sm:$0xff]
        %v1744 = vsel %vm481, %v1694, 0
        %v1747 = vsel %vm481, %v1695, 0
        %v1750 = vsel %vm481, %v1696, 0
        %v1753 = vsel %vm481, %v1697, 0
        %v1756 = vsel %vm481, %v1698, 0
        %v1759 = vsel %vm481, %v1699, 0
        %v1762 = vsel %vm481, %v1700, 0
        %v1765 = vsel %vm481, %v1701, 0
        %v1768 = vsel %vm481, %v1702, 0
        %v1771 = vsel %vm481, %v1703, 0
        %v1774 = vsel %vm481, %v1704, 0
        %v1777 = vsel %vm481, %v1705, 0
        %v1780 = vsel %vm481, %v1706, 0
        %v1783 = vsel %vm481, %v1707, 0
        %v1786 = vsel %vm481, %v1708, 0
        %v1789 = vsel %vm481, %v1709, 0
        %v1792 = vsel %vm481, %v1710, 0
        %v1795 = vsel %vm481, %v1711, 0
        %v1798 = vsel %vm481, %v1712, 0
        %v1801 = vsel %vm481, %v1713, 0
        %v1804 = vsel %vm481, %v1714, 0
        %v1807 = vsel %vm481, %v1715, 0
        %v1810 = vsel %vm481, %v1716, 0
        %v1813 = vsel %vm481, %v1717, 0
        %v1816 = vsel %vm481, %v1718, 0
        %v1819 = vsel %vm481, %v1719, 0
        %v1822 = vsel %vm481, %v1720, 0
        %v1825 = vsel %vm481, %v1721, 0
        %v1828 = vsel %vm481, %v1722, 0
        %v1831 = vsel %vm481, %v1723, 0
        %v1834 = vsel %vm481, %v1724, 0
        %v1837 = vsel %vm481, %v1725, 0
        %1839 = vmatpush.msra.mxu0 0.0
        %1840 = vmatpush.msra.mxu0 0.0
        %1841 = vmatpush.msra.mxu0 0.0
        %1842 = vmatpush.msra.mxu0 0.0
        %1843 = vmatpush.msra.mxu0 0.0
        %1844 = vmatpush.msra.mxu0 0.0
        %1845 = vmatpush.msra.mxu0 0.0
        %1846 = vmatpush.msra.mxu0 0.0
        %1847 = vmatpush.msra.mxu0 %v1741
        %1848 = vmatpush.msra.mxu0 %v1739
        %1849 = vmatpush.msra.mxu0 %v1737
        %1850 = vmatpush.msra.mxu0 %v1735
        %1851 = vmatpush.msra.mxu0 %v1733
        %1852 = vmatpush.msra.mxu0 %v1731
        %1853 = vmatpush.msra.mxu0 %v1729
        %1854 = vmatpush.msra.mxu0 %v1727
        %1855 = vmatmul.f32.gmra.mxu0 %v1744
        %v1856 = vpop.f32.mrf.mxu0
        %v1857 = vadd.f32 0.0, %v1856
        %1858 = vmatmul.f32.gmra.mxu0 %v1747
        %v1859 = vpop.f32.mrf.mxu0
        %v1860 = vadd.f32 0.0, %v1859
        %1861 = vmatmul.f32.gmra.mxu0 %v1750
        %v1862 = vpop.f32.mrf.mxu0
        %v1863 = vadd.f32 0.0, %v1862
        %1864 = vmatmul.f32.gmra.mxu0 %v1753
        %v1865 = vpop.f32.mrf.mxu0
        %v1866 = vadd.f32 0.0, %v1865
        %1867 = vmatmul.f32.gmra.mxu0 %v1756
        %v1868 = vpop.f32.mrf.mxu0
        %v1869 = vadd.f32 0.0, %v1868
        %1870 = vmatmul.f32.gmra.mxu0 %v1759
        %v1871 = vpop.f32.mrf.mxu0
        %v1872 = vadd.f32 0.0, %v1871
        %1873 = vmatmul.f32.gmra.mxu0 %v1762
        %v1874 = vpop.f32.mrf.mxu0
        %v1875 = vadd.f32 0.0, %v1874
        %1876 = vmatmul.f32.gmra.mxu0 %v1765
        %v1877 = vpop.f32.mrf.mxu0
        %v1878 = vadd.f32 0.0, %v1877
        %1879 = vmatmul.f32.gmra.mxu0 %v1768
        %v1880 = vpop.f32.mrf.mxu0
        %v1881 = vadd.f32 0.0, %v1880
        %1882 = vmatmul.f32.gmra.mxu0 %v1771
        %v1883 = vpop.f32.mrf.mxu0
        %v1884 = vadd.f32 0.0, %v1883
        %1885 = vmatmul.f32.gmra.mxu0 %v1774
        %v1886 = vpop.f32.mrf.mxu0
        %v1887 = vadd.f32 0.0, %v1886
        %1888 = vmatmul.f32.gmra.mxu0 %v1777
        %v1889 = vpop.f32.mrf.mxu0
        %v1890 = vadd.f32 0.0, %v1889
        %1891 = vmatmul.f32.gmra.mxu0 %v1780
        %v1892 = vpop.f32.mrf.mxu0
        %v1893 = vadd.f32 0.0, %v1892
        %1894 = vmatmul.f32.gmra.mxu0 %v1783
        %v1895 = vpop.f32.mrf.mxu0
        %v1896 = vadd.f32 0.0, %v1895
        %1897 = vmatmul.f32.gmra.mxu0 %v1786
        %v1898 = vpop.f32.mrf.mxu0
        %v1899 = vadd.f32 0.0, %v1898
        %1900 = vmatmul.f32.gmra.mxu0 %v1789
        %v1901 = vpop.f32.mrf.mxu0
        %v1902 = vadd.f32 0.0, %v1901
        %1903 = vmatmul.f32.gmra.mxu0 %v1792
        %v1904 = vpop.f32.mrf.mxu0
        %v1905 = vadd.f32 0.0, %v1904
        %1906 = vmatmul.f32.gmra.mxu0 %v1795
        %v1907 = vpop.f32.mrf.mxu0
        %v1908 = vadd.f32 0.0, %v1907
        %1909 = vmatmul.f32.gmra.mxu0 %v1798
        %v1910 = vpop.f32.mrf.mxu0
        %v1911 = vadd.f32 0.0, %v1910
        %1912 = vmatmul.f32.gmra.mxu0 %v1801
        %v1913 = vpop.f32.mrf.mxu0
        %v1914 = vadd.f32 0.0, %v1913
        %1915 = vmatmul.f32.gmra.mxu0 %v1804
        %v1916 = vpop.f32.mrf.mxu0
        %v1917 = vadd.f32 0.0, %v1916
        %1918 = vmatmul.f32.gmra.mxu0 %v1807
        %v1919 = vpop.f32.mrf.mxu0
        %v1920 = vadd.f32 0.0, %v1919
        %1921 = vmatmul.f32.gmra.mxu0 %v1810
        %v1922 = vpop.f32.mrf.mxu0
        %v1923 = vadd.f32 0.0, %v1922
        %1924 = vmatmul.f32.gmra.mxu0 %v1813
        %v1925 = vpop.f32.mrf.mxu0
        %v1926 = vadd.f32 0.0, %v1925
        %1927 = vmatmul.f32.gmra.mxu0 %v1816
        %v1928 = vpop.f32.mrf.mxu0
        %v1929 = vadd.f32 0.0, %v1928
        %1930 = vmatmul.f32.gmra.mxu0 %v1819
        %v1931 = vpop.f32.mrf.mxu0
        %v1932 = vadd.f32 0.0, %v1931
        %1933 = vmatmul.f32.gmra.mxu0 %v1822
        %v1934 = vpop.f32.mrf.mxu0
        %v1935 = vadd.f32 0.0, %v1934
        %1936 = vmatmul.f32.gmra.mxu0 %v1825
        %v1937 = vpop.f32.mrf.mxu0
        %v1938 = vadd.f32 0.0, %v1937
        %1939 = vmatmul.f32.gmra.mxu0 %v1828
        %v1940 = vpop.f32.mrf.mxu0
        %v1941 = vadd.f32 0.0, %v1940
        %1942 = vmatmul.f32.gmra.mxu0 %v1831
        %v1943 = vpop.f32.mrf.mxu0
        %v1944 = vadd.f32 0.0, %v1943
        %1945 = vmatmul.f32.gmra.mxu0 %v1834
        %v1946 = vpop.f32.mrf.mxu0
        %v1947 = vadd.f32 0.0, %v1946
        %1948 = vmatmul.f32.gmra.mxu0 %v1837
        %v1949 = vpop.f32.mrf.mxu0
        %v1950 = vadd.f32 0.0, %v1949
        %1951 = vdwg.mxu0
        %1952 = vmatpush.msra.mxu0 0.0
        %1953 = vmatpush.msra.mxu0 0.0
        %1954 = vmatpush.msra.mxu0 0.0
        %1955 = vmatpush.msra.mxu0 0.0
        %1956 = vmatpush.msra.mxu0 0.0
        %1957 = vmatpush.msra.mxu0 0.0
        %1958 = vmatpush.msra.mxu0 0.0
        %1959 = vmatpush.msra.mxu0 0.0
        %1960 = vmatpush.msra.mxu0 %v1742
        %1961 = vmatpush.msra.mxu0 %v1740
        %1962 = vmatpush.msra.mxu0 %v1738
        %1963 = vmatpush.msra.mxu0 %v1736
        %1964 = vmatpush.msra.mxu0 %v1734
        %1965 = vmatpush.msra.mxu0 %v1732
        %1966 = vmatpush.msra.mxu0 %v1730
        %1967 = vmatpush.msra.mxu0 %v1728
        %1968 = vmatmul.f32.gmra.mxu0 %v1744
        %v1969 = vpop.f32.mrf.mxu0
        %v1970 = vadd.f32 0.0, %v1969
        %1971 = vmatmul.f32.gmra.mxu0 %v1747
        %v1972 = vpop.f32.mrf.mxu0
        %v1973 = vadd.f32 0.0, %v1972
        %1974 = vmatmul.f32.gmra.mxu0 %v1750
        %v1975 = vpop.f32.mrf.mxu0
        %v1976 = vadd.f32 0.0, %v1975
        %1977 = vmatmul.f32.gmra.mxu0 %v1753
        %v1978 = vpop.f32.mrf.mxu0
        %v1979 = vadd.f32 0.0, %v1978
        %1980 = vmatmul.f32.gmra.mxu0 %v1756
        %v1981 = vpop.f32.mrf.mxu0
        %v1982 = vadd.f32 0.0, %v1981
        %1983 = vmatmul.f32.gmra.mxu0 %v1759
        %v1984 = vpop.f32.mrf.mxu0
        %v1985 = vadd.f32 0.0, %v1984
        %1986 = vmatmul.f32.gmra.mxu0 %v1762
        %v1987 = vpop.f32.mrf.mxu0
        %v1988 = vadd.f32 0.0, %v1987
        %1989 = vmatmul.f32.gmra.mxu0 %v1765
        %v1990 = vpop.f32.mrf.mxu0
        %v1991 = vadd.f32 0.0, %v1990
        %1992 = vmatmul.f32.gmra.mxu0 %v1768
        %v1993 = vpop.f32.mrf.mxu0
        %v1994 = vadd.f32 0.0, %v1993
        %1995 = vmatmul.f32.gmra.mxu0 %v1771
        %v1996 = vpop.f32.mrf.mxu0
        %v1997 = vadd.f32 0.0, %v1996
        %1998 = vmatmul.f32.gmra.mxu0 %v1774
        %v1999 = vpop.f32.mrf.mxu0
        %v2000 = vadd.f32 0.0, %v1999
        %2001 = vmatmul.f32.gmra.mxu0 %v1777
        %v2002 = vpop.f32.mrf.mxu0
        %v2003 = vadd.f32 0.0, %v2002
        %2004 = vmatmul.f32.gmra.mxu0 %v1780
        %v2005 = vpop.f32.mrf.mxu0
        %v2006 = vadd.f32 0.0, %v2005
        %2007 = vmatmul.f32.gmra.mxu0 %v1783
        %v2008 = vpop.f32.mrf.mxu0
        %v2009 = vadd.f32 0.0, %v2008
        %2010 = vmatmul.f32.gmra.mxu0 %v1786
        %v2011 = vpop.f32.mrf.mxu0
        %v2012 = vadd.f32 0.0, %v2011
        %2013 = vmatmul.f32.gmra.mxu0 %v1789
        %v2014 = vpop.f32.mrf.mxu0
        %v2015 = vadd.f32 0.0, %v2014
        %2016 = vmatmul.f32.gmra.mxu0 %v1792
        %v2017 = vpop.f32.mrf.mxu0
        %v2018 = vadd.f32 0.0, %v2017
        %2019 = vmatmul.f32.gmra.mxu0 %v1795
        %v2020 = vpop.f32.mrf.mxu0
        %v2021 = vadd.f32 0.0, %v2020
        %2022 = vmatmul.f32.gmra.mxu0 %v1798
        %v2023 = vpop.f32.mrf.mxu0
        %v2024 = vadd.f32 0.0, %v2023
        %2025 = vmatmul.f32.gmra.mxu0 %v1801
        %v2026 = vpop.f32.mrf.mxu0
        %v2027 = vadd.f32 0.0, %v2026
        %2028 = vmatmul.f32.gmra.mxu0 %v1804
        %v2029 = vpop.f32.mrf.mxu0
        %v2030 = vadd.f32 0.0, %v2029
        %2031 = vmatmul.f32.gmra.mxu0 %v1807
        %v2032 = vpop.f32.mrf.mxu0
        %v2033 = vadd.f32 0.0, %v2032
        %2034 = vmatmul.f32.gmra.mxu0 %v1810
        %v2035 = vpop.f32.mrf.mxu0
        %v2036 = vadd.f32 0.0, %v2035
        %2037 = vmatmul.f32.gmra.mxu0 %v1813
        %v2038 = vpop.f32.mrf.mxu0
        %v2039 = vadd.f32 0.0, %v2038
        %2040 = vmatmul.f32.gmra.mxu0 %v1816
        %v2041 = vpop.f32.mrf.mxu0
        %v2042 = vadd.f32 0.0, %v2041
        %2043 = vmatmul.f32.gmra.mxu0 %v1819
        %v2044 = vpop.f32.mrf.mxu0
        %v2045 = vadd.f32 0.0, %v2044
        %2046 = vmatmul.f32.gmra.mxu0 %v1822
        %v2047 = vpop.f32.mrf.mxu0
        %v2048 = vadd.f32 0.0, %v2047
        %2049 = vmatmul.f32.gmra.mxu0 %v1825
        %v2050 = vpop.f32.mrf.mxu0
        %v2051 = vadd.f32 0.0, %v2050
        %2052 = vmatmul.f32.gmra.mxu0 %v1828
        %v2053 = vpop.f32.mrf.mxu0
        %v2054 = vadd.f32 0.0, %v2053
        %2055 = vmatmul.f32.gmra.mxu0 %v1831
        %v2056 = vpop.f32.mrf.mxu0
        %v2057 = vadd.f32 0.0, %v2056
        %2058 = vmatmul.f32.gmra.mxu0 %v1834
        %v2059 = vpop.f32.mrf.mxu0
        %v2060 = vadd.f32 0.0, %v2059
        %2061 = vmatmul.f32.gmra.mxu0 %v1837
        %v2062 = vpop.f32.mrf.mxu0
        %v2063 = vadd.f32 0.0, %v2062
        %2064 = vdwg.mxu0
        %v2065 = vadd.f32 %v1630, %v1857
        %v2066 = vadd.f32 %v1631, %v1970
        %v2067 = vadd.f32 %v1632, %v1860
        %v2068 = vadd.f32 %v1633, %v1973
        %v2069 = vadd.f32 %v1634, %v1863
        %v2070 = vadd.f32 %v1635, %v1976
        %v2071 = vadd.f32 %v1636, %v1866
        %v2072 = vadd.f32 %v1637, %v1979
        %v2073 = vadd.f32 %v1638, %v1869
        %v2074 = vadd.f32 %v1639, %v1982
        %v2075 = vadd.f32 %v1640, %v1872
        %v2076 = vadd.f32 %v1641, %v1985
        %v2077 = vadd.f32 %v1642, %v1875
        %v2078 = vadd.f32 %v1643, %v1988
        %v2079 = vadd.f32 %v1644, %v1878
        %v2080 = vadd.f32 %v1645, %v1991
        %v2081 = vadd.f32 %v1646, %v1881
        %v2082 = vadd.f32 %v1647, %v1994
        %v2083 = vadd.f32 %v1648, %v1884
        %v2084 = vadd.f32 %v1649, %v1997
        %v2085 = vadd.f32 %v1650, %v1887
        %v2086 = vadd.f32 %v1651, %v2000
        %v2087 = vadd.f32 %v1652, %v1890
        %v2088 = vadd.f32 %v1653, %v2003
        %v2089 = vadd.f32 %v1654, %v1893
        %v2090 = vadd.f32 %v1655, %v2006
        %v2091 = vadd.f32 %v1656, %v1896
        %v2092 = vadd.f32 %v1657, %v2009
        %v2093 = vadd.f32 %v1658, %v1899
        %v2094 = vadd.f32 %v1659, %v2012
        %v2095 = vadd.f32 %v1660, %v1902
        %v2096 = vadd.f32 %v1661, %v2015
        %v2097 = vadd.f32 %v1662, %v1905
        %v2098 = vadd.f32 %v1663, %v2018
        %v2099 = vadd.f32 %v1664, %v1908
        %v2100 = vadd.f32 %v1665, %v2021
        %v2101 = vadd.f32 %v1666, %v1911
        %v2102 = vadd.f32 %v1667, %v2024
        %v2103 = vadd.f32 %v1668, %v1914
        %v2104 = vadd.f32 %v1669, %v2027
        %v2105 = vadd.f32 %v1670, %v1917
        %v2106 = vadd.f32 %v1671, %v2030
        %v2107 = vadd.f32 %v1672, %v1920
        %v2108 = vadd.f32 %v1673, %v2033
        %v2109 = vadd.f32 %v1674, %v1923
        %v2110 = vadd.f32 %v1675, %v2036
        %v2111 = vadd.f32 %v1676, %v1926
        %v2112 = vadd.f32 %v1677, %v2039
        %v2113 = vadd.f32 %v1678, %v1929
        %v2114 = vadd.f32 %v1679, %v2042
        %v2115 = vadd.f32 %v1680, %v1932
        %v2116 = vadd.f32 %v1681, %v2045
        %v2117 = vadd.f32 %v1682, %v1935
        %v2118 = vadd.f32 %v1683, %v2048
        %v2119 = vadd.f32 %v1684, %v1938
        %v2120 = vadd.f32 %v1685, %v2051
        %v2121 = vadd.f32 %v1686, %v1941
        %v2122 = vadd.f32 %v1687, %v2054
        %v2123 = vadd.f32 %v1688, %v1944
        %v2124 = vadd.f32 %v1689, %v2057
        %v2125 = vadd.f32 %v1690, %v1947
        %v2126 = vadd.f32 %v1691, %v2060
        %v2127 = vadd.f32 %v1692, %v1950
        %v2128 = vadd.f32 %v1693, %v2063
        %v2129 = vld [vmem:[#allocation2 + $0xf] sm:$0xff]
        %v2130 = vld [vmem:[#allocation2 + $0x17] sm:$0xff]
        %v2131 = vld [vmem:[#allocation2 + $0x1f] sm:$0xff]
        %v2132 = vld [vmem:[#allocation2 + $0x27] sm:$0xff]
        %v2133 = vld [vmem:[#allocation2 + $0x2f] sm:$0xff]
        %v2134 = vld [vmem:[#allocation2 + $0x37] sm:$0xff]
        %v2135 = vld [vmem:[#allocation2 + $0x3f] sm:$0xff]
        %v2136 = vld [vmem:[#allocation2 + $0x47] sm:$0xff]
        %v2137 = vld [vmem:[#allocation2 + $0x4f] sm:$0xff]
        %v2138 = vld [vmem:[#allocation2 + $0x57] sm:$0xff]
        %v2139 = vld [vmem:[#allocation2 + $0x5f] sm:$0xff]
        %v2140 = vld [vmem:[#allocation2 + $0x67] sm:$0xff]
        %v2141 = vld [vmem:[#allocation2 + $0x6f] sm:$0xff]
        %v2142 = vld [vmem:[#allocation2 + $0x77] sm:$0xff]
        %v2143 = vld [vmem:[#allocation2 + $0x7f] sm:$0xff]
        %v2144 = vld [vmem:[#allocation2 + $0x87] sm:$0xff]
        %v2145 = vld [vmem:[#allocation2 + $0x8f] sm:$0xff]
        %v2146 = vld [vmem:[#allocation2 + $0x97] sm:$0xff]
        %v2147 = vld [vmem:[#allocation2 + $0x9f] sm:$0xff]
        %v2148 = vld [vmem:[#allocation2 + $0xa7] sm:$0xff]
        %v2149 = vld [vmem:[#allocation2 + $0xaf] sm:$0xff]
        %v2150 = vld [vmem:[#allocation2 + $0xb7] sm:$0xff]
        %v2151 = vld [vmem:[#allocation2 + $0xbf] sm:$0xff]
        %v2152 = vld [vmem:[#allocation2 + $0xc7] sm:$0xff]
        %v2153 = vld [vmem:[#allocation2 + $0xcf] sm:$0xff]
        %v2154 = vld [vmem:[#allocation2 + $0xd7] sm:$0xff]
        %v2155 = vld [vmem:[#allocation2 + $0xdf] sm:$0xff]
        %v2156 = vld [vmem:[#allocation2 + $0xe7] sm:$0xff]
        %v2157 = vld [vmem:[#allocation2 + $0xef] sm:$0xff]
        %v2158 = vld [vmem:[#allocation2 + $0xf7] sm:$0xff]
        %v2159 = vld [vmem:[#allocation2 + $0xff] sm:$0xff]
        %v2160 = vld [vmem:[#allocation2 + $0x107] sm:$0xff]
        %s2161 = scalar_lea.vmem %s424, 512
        %v2162 = vld [vmem:[%s2161] sm:$0xff]
        %v2163 = vld [vmem:[%s2161 + $0x8] sm:$0xff]
        %v2164 = vld [vmem:[%s2161 + $0x10] sm:$0xff]
        %v2165 = vld [vmem:[%s2161 + $0x18] sm:$0xff]
        %v2166 = vld [vmem:[%s2161 + $0x20] sm:$0xff]
        %v2167 = vld [vmem:[%s2161 + $0x28] sm:$0xff]
        %v2168 = vld [vmem:[%s2161 + $0x30] sm:$0xff]
        %v2169 = vld [vmem:[%s2161 + $0x38] sm:$0xff]
        %v2170 = vld [vmem:[%s2161 + $0x40] sm:$0xff]
        %v2171 = vld [vmem:[%s2161 + $0x48] sm:$0xff]
        %v2172 = vld [vmem:[%s2161 + $0x50] sm:$0xff]
        %v2173 = vld [vmem:[%s2161 + $0x58] sm:$0xff]
        %v2174 = vld [vmem:[%s2161 + $0x60] sm:$0xff]
        %v2175 = vld [vmem:[%s2161 + $0x68] sm:$0xff]
        %v2176 = vld [vmem:[%s2161 + $0x70] sm:$0xff]
        %v2177 = vld [vmem:[%s2161 + $0x78] sm:$0xff]
        %v2179 = vsel %vm481, %v2129, 0
        %v2182 = vsel %vm481, %v2130, 0
        %v2185 = vsel %vm481, %v2131, 0
        %v2188 = vsel %vm481, %v2132, 0
        %v2191 = vsel %vm481, %v2133, 0
        %v2194 = vsel %vm481, %v2134, 0
        %v2197 = vsel %vm481, %v2135, 0
        %v2200 = vsel %vm481, %v2136, 0
        %v2203 = vsel %vm481, %v2137, 0
        %v2206 = vsel %vm481, %v2138, 0
        %v2209 = vsel %vm481, %v2139, 0
        %v2212 = vsel %vm481, %v2140, 0
        %v2215 = vsel %vm481, %v2141, 0
        %v2218 = vsel %vm481, %v2142, 0
        %v2221 = vsel %vm481, %v2143, 0
        %v2224 = vsel %vm481, %v2144, 0
        %v2227 = vsel %vm481, %v2145, 0
        %v2230 = vsel %vm481, %v2146, 0
        %v2233 = vsel %vm481, %v2147, 0
        %v2236 = vsel %vm481, %v2148, 0
        %v2239 = vsel %vm481, %v2149, 0
        %v2242 = vsel %vm481, %v2150, 0
        %v2245 = vsel %vm481, %v2151, 0
        %v2248 = vsel %vm481, %v2152, 0
        %v2251 = vsel %vm481, %v2153, 0
        %v2254 = vsel %vm481, %v2154, 0
        %v2257 = vsel %vm481, %v2155, 0
        %v2260 = vsel %vm481, %v2156, 0
        %v2263 = vsel %vm481, %v2157, 0
        %v2266 = vsel %vm481, %v2158, 0
        %v2269 = vsel %vm481, %v2159, 0
        %v2272 = vsel %vm481, %v2160, 0
        %2274 = vmatpush.msra.mxu0 0.0
        %2275 = vmatpush.msra.mxu0 0.0
        %2276 = vmatpush.msra.mxu0 0.0
        %2277 = vmatpush.msra.mxu0 0.0
        %2278 = vmatpush.msra.mxu0 0.0
        %2279 = vmatpush.msra.mxu0 0.0
        %2280 = vmatpush.msra.mxu0 0.0
        %2281 = vmatpush.msra.mxu0 0.0
        %2282 = vmatpush.msra.mxu0 %v2176
        %2283 = vmatpush.msra.mxu0 %v2174
        %2284 = vmatpush.msra.mxu0 %v2172
        %2285 = vmatpush.msra.mxu0 %v2170
        %2286 = vmatpush.msra.mxu0 %v2168
        %2287 = vmatpush.msra.mxu0 %v2166
        %2288 = vmatpush.msra.mxu0 %v2164
        %2289 = vmatpush.msra.mxu0 %v2162
        %2290 = vmatmul.f32.gmra.mxu0 %v2179
        %v2291 = vpop.f32.mrf.mxu0
        %v2292 = vadd.f32 0.0, %v2291
        %2293 = vmatmul.f32.gmra.mxu0 %v2182
        %v2294 = vpop.f32.mrf.mxu0
        %v2295 = vadd.f32 0.0, %v2294
        %2296 = vmatmul.f32.gmra.mxu0 %v2185
        %v2297 = vpop.f32.mrf.mxu0
        %v2298 = vadd.f32 0.0, %v2297
        %2299 = vmatmul.f32.gmra.mxu0 %v2188
        %v2300 = vpop.f32.mrf.mxu0
        %v2301 = vadd.f32 0.0, %v2300
        %2302 = vmatmul.f32.gmra.mxu0 %v2191
        %v2303 = vpop.f32.mrf.mxu0
        %v2304 = vadd.f32 0.0, %v2303
        %2305 = vmatmul.f32.gmra.mxu0 %v2194
        %v2306 = vpop.f32.mrf.mxu0
        %v2307 = vadd.f32 0.0, %v2306
        %2308 = vmatmul.f32.gmra.mxu0 %v2197
        %v2309 = vpop.f32.mrf.mxu0
        %v2310 = vadd.f32 0.0, %v2309
        %2311 = vmatmul.f32.gmra.mxu0 %v2200
        %v2312 = vpop.f32.mrf.mxu0
        %v2313 = vadd.f32 0.0, %v2312
        %2314 = vmatmul.f32.gmra.mxu0 %v2203
        %v2315 = vpop.f32.mrf.mxu0
        %v2316 = vadd.f32 0.0, %v2315
        %2317 = vmatmul.f32.gmra.mxu0 %v2206
        %v2318 = vpop.f32.mrf.mxu0
        %v2319 = vadd.f32 0.0, %v2318
        %2320 = vmatmul.f32.gmra.mxu0 %v2209
        %v2321 = vpop.f32.mrf.mxu0
        %v2322 = vadd.f32 0.0, %v2321
        %2323 = vmatmul.f32.gmra.mxu0 %v2212
        %v2324 = vpop.f32.mrf.mxu0
        %v2325 = vadd.f32 0.0, %v2324
        %2326 = vmatmul.f32.gmra.mxu0 %v2215
        %v2327 = vpop.f32.mrf.mxu0
        %v2328 = vadd.f32 0.0, %v2327
        %2329 = vmatmul.f32.gmra.mxu0 %v2218
        %v2330 = vpop.f32.mrf.mxu0
        %v2331 = vadd.f32 0.0, %v2330
        %2332 = vmatmul.f32.gmra.mxu0 %v2221
        %v2333 = vpop.f32.mrf.mxu0
        %v2334 = vadd.f32 0.0, %v2333
        %2335 = vmatmul.f32.gmra.mxu0 %v2224
        %v2336 = vpop.f32.mrf.mxu0
        %v2337 = vadd.f32 0.0, %v2336
        %2338 = vmatmul.f32.gmra.mxu0 %v2227
        %v2339 = vpop.f32.mrf.mxu0
        %v2340 = vadd.f32 0.0, %v2339
        %2341 = vmatmul.f32.gmra.mxu0 %v2230
        %v2342 = vpop.f32.mrf.mxu0
        %v2343 = vadd.f32 0.0, %v2342
        %2344 = vmatmul.f32.gmra.mxu0 %v2233
        %v2345 = vpop.f32.mrf.mxu0
        %v2346 = vadd.f32 0.0, %v2345
        %2347 = vmatmul.f32.gmra.mxu0 %v2236
        %v2348 = vpop.f32.mrf.mxu0
        %v2349 = vadd.f32 0.0, %v2348
        %2350 = vmatmul.f32.gmra.mxu0 %v2239
        %v2351 = vpop.f32.mrf.mxu0
        %v2352 = vadd.f32 0.0, %v2351
        %2353 = vmatmul.f32.gmra.mxu0 %v2242
        %v2354 = vpop.f32.mrf.mxu0
        %v2355 = vadd.f32 0.0, %v2354
        %2356 = vmatmul.f32.gmra.mxu0 %v2245
        %v2357 = vpop.f32.mrf.mxu0
        %v2358 = vadd.f32 0.0, %v2357
        %2359 = vmatmul.f32.gmra.mxu0 %v2248
        %v2360 = vpop.f32.mrf.mxu0
        %v2361 = vadd.f32 0.0, %v2360
        %2362 = vmatmul.f32.gmra.mxu0 %v2251
        %v2363 = vpop.f32.mrf.mxu0
        %v2364 = vadd.f32 0.0, %v2363
        %2365 = vmatmul.f32.gmra.mxu0 %v2254
        %v2366 = vpop.f32.mrf.mxu0
        %v2367 = vadd.f32 0.0, %v2366
        %2368 = vmatmul.f32.gmra.mxu0 %v2257
        %v2369 = vpop.f32.mrf.mxu0
        %v2370 = vadd.f32 0.0, %v2369
        %2371 = vmatmul.f32.gmra.mxu0 %v2260
        %v2372 = vpop.f32.mrf.mxu0
        %v2373 = vadd.f32 0.0, %v2372
        %2374 = vmatmul.f32.gmra.mxu0 %v2263
        %v2375 = vpop.f32.mrf.mxu0
        %v2376 = vadd.f32 0.0, %v2375
        %2377 = vmatmul.f32.gmra.mxu0 %v2266
        %v2378 = vpop.f32.mrf.mxu0
        %v2379 = vadd.f32 0.0, %v2378
        %2380 = vmatmul.f32.gmra.mxu0 %v2269
        %v2381 = vpop.f32.mrf.mxu0
        %v2382 = vadd.f32 0.0, %v2381
        %2383 = vmatmul.f32.gmra.mxu0 %v2272
        %v2384 = vpop.f32.mrf.mxu0
        %v2385 = vadd.f32 0.0, %v2384
        %2386 = vdwg.mxu0
        %2387 = vmatpush.msra.mxu0 0.0
        %2388 = vmatpush.msra.mxu0 0.0
        %2389 = vmatpush.msra.mxu0 0.0
        %2390 = vmatpush.msra.mxu0 0.0
        %2391 = vmatpush.msra.mxu0 0.0
        %2392 = vmatpush.msra.mxu0 0.0
        %2393 = vmatpush.msra.mxu0 0.0
        %2394 = vmatpush.msra.mxu0 0.0
        %2395 = vmatpush.msra.mxu0 %v2177
        %2396 = vmatpush.msra.mxu0 %v2175
        %2397 = vmatpush.msra.mxu0 %v2173
        %2398 = vmatpush.msra.mxu0 %v2171
        %2399 = vmatpush.msra.mxu0 %v2169
        %2400 = vmatpush.msra.mxu0 %v2167
        %2401 = vmatpush.msra.mxu0 %v2165
        %2402 = vmatpush.msra.mxu0 %v2163
        %2403 = vmatmul.f32.gmra.mxu0 %v2179
        %v2404 = vpop.f32.mrf.mxu0
        %v2405 = vadd.f32 0.0, %v2404
        %2406 = vmatmul.f32.gmra.mxu0 %v2182
        %v2407 = vpop.f32.mrf.mxu0
        %v2408 = vadd.f32 0.0, %v2407
        %2409 = vmatmul.f32.gmra.mxu0 %v2185
        %v2410 = vpop.f32.mrf.mxu0
        %v2411 = vadd.f32 0.0, %v2410
        %2412 = vmatmul.f32.gmra.mxu0 %v2188
        %v2413 = vpop.f32.mrf.mxu0
        %v2414 = vadd.f32 0.0, %v2413
        %2415 = vmatmul.f32.gmra.mxu0 %v2191
        %v2416 = vpop.f32.mrf.mxu0
        %v2417 = vadd.f32 0.0, %v2416
        %2418 = vmatmul.f32.gmra.mxu0 %v2194
        %v2419 = vpop.f32.mrf.mxu0
        %v2420 = vadd.f32 0.0, %v2419
        %2421 = vmatmul.f32.gmra.mxu0 %v2197
        %v2422 = vpop.f32.mrf.mxu0
        %v2423 = vadd.f32 0.0, %v2422
        %2424 = vmatmul.f32.gmra.mxu0 %v2200
        %v2425 = vpop.f32.mrf.mxu0
        %v2426 = vadd.f32 0.0, %v2425
        %2427 = vmatmul.f32.gmra.mxu0 %v2203
        %v2428 = vpop.f32.mrf.mxu0
        %v2429 = vadd.f32 0.0, %v2428
        %2430 = vmatmul.f32.gmra.mxu0 %v2206
        %v2431 = vpop.f32.mrf.mxu0
        %v2432 = vadd.f32 0.0, %v2431
        %2433 = vmatmul.f32.gmra.mxu0 %v2209
        %v2434 = vpop.f32.mrf.mxu0
        %v2435 = vadd.f32 0.0, %v2434
        %2436 = vmatmul.f32.gmra.mxu0 %v2212
        %v2437 = vpop.f32.mrf.mxu0
        %v2438 = vadd.f32 0.0, %v2437
        %2439 = vmatmul.f32.gmra.mxu0 %v2215
        %v2440 = vpop.f32.mrf.mxu0
        %v2441 = vadd.f32 0.0, %v2440
        %2442 = vmatmul.f32.gmra.mxu0 %v2218
        %v2443 = vpop.f32.mrf.mxu0
        %v2444 = vadd.f32 0.0, %v2443
        %2445 = vmatmul.f32.gmra.mxu0 %v2221
        %v2446 = vpop.f32.mrf.mxu0
        %v2447 = vadd.f32 0.0, %v2446
        %2448 = vmatmul.f32.gmra.mxu0 %v2224
        %v2449 = vpop.f32.mrf.mxu0
        %v2450 = vadd.f32 0.0, %v2449
        %2451 = vmatmul.f32.gmra.mxu0 %v2227
        %v2452 = vpop.f32.mrf.mxu0
        %v2453 = vadd.f32 0.0, %v2452
        %2454 = vmatmul.f32.gmra.mxu0 %v2230
        %v2455 = vpop.f32.mrf.mxu0
        %v2456 = vadd.f32 0.0, %v2455
        %2457 = vmatmul.f32.gmra.mxu0 %v2233
        %v2458 = vpop.f32.mrf.mxu0
        %v2459 = vadd.f32 0.0, %v2458
        %2460 = vmatmul.f32.gmra.mxu0 %v2236
        %v2461 = vpop.f32.mrf.mxu0
        %v2462 = vadd.f32 0.0, %v2461
        %2463 = vmatmul.f32.gmra.mxu0 %v2239
        %v2464 = vpop.f32.mrf.mxu0
        %v2465 = vadd.f32 0.0, %v2464
        %2466 = vmatmul.f32.gmra.mxu0 %v2242
        %v2467 = vpop.f32.mrf.mxu0
        %v2468 = vadd.f32 0.0, %v2467
        %2469 = vmatmul.f32.gmra.mxu0 %v2245
        %v2470 = vpop.f32.mrf.mxu0
        %v2471 = vadd.f32 0.0, %v2470
        %2472 = vmatmul.f32.gmra.mxu0 %v2248
        %v2473 = vpop.f32.mrf.mxu0
        %v2474 = vadd.f32 0.0, %v2473
        %2475 = vmatmul.f32.gmra.mxu0 %v2251
        %v2476 = vpop.f32.mrf.mxu0
        %v2477 = vadd.f32 0.0, %v2476
        %2478 = vmatmul.f32.gmra.mxu0 %v2254
        %v2479 = vpop.f32.mrf.mxu0
        %v2480 = vadd.f32 0.0, %v2479
        %2481 = vmatmul.f32.gmra.mxu0 %v2257
        %v2482 = vpop.f32.mrf.mxu0
        %v2483 = vadd.f32 0.0, %v2482
        %2484 = vmatmul.f32.gmra.mxu0 %v2260
        %v2485 = vpop.f32.mrf.mxu0
        %v2486 = vadd.f32 0.0, %v2485
        %2487 = vmatmul.f32.gmra.mxu0 %v2263
        %v2488 = vpop.f32.mrf.mxu0
        %v2489 = vadd.f32 0.0, %v2488
        %2490 = vmatmul.f32.gmra.mxu0 %v2266
        %v2491 = vpop.f32.mrf.mxu0
        %v2492 = vadd.f32 0.0, %v2491
        %2493 = vmatmul.f32.gmra.mxu0 %v2269
        %v2494 = vpop.f32.mrf.mxu0
        %v2495 = vadd.f32 0.0, %v2494
        %2496 = vmatmul.f32.gmra.mxu0 %v2272
        %v2497 = vpop.f32.mrf.mxu0
        %v2498 = vadd.f32 0.0, %v2497
        %2499 = vdwg.mxu0
        %v2500 = vadd.f32 %v2065, %v2292
        %v2501 = vadd.f32 %v2066, %v2405
        %v2502 = vadd.f32 %v2067, %v2295
        %v2503 = vadd.f32 %v2068, %v2408
        %v2504 = vadd.f32 %v2069, %v2298
        %v2505 = vadd.f32 %v2070, %v2411
        %v2506 = vadd.f32 %v2071, %v2301
        %v2507 = vadd.f32 %v2072, %v2414
        %v2508 = vadd.f32 %v2073, %v2304
        %v2509 = vadd.f32 %v2074, %v2417
        %v2510 = vadd.f32 %v2075, %v2307
        %v2511 = vadd.f32 %v2076, %v2420
        %v2512 = vadd.f32 %v2077, %v2310
        %v2513 = vadd.f32 %v2078, %v2423
        %v2514 = vadd.f32 %v2079, %v2313
        %v2515 = vadd.f32 %v2080, %v2426
        %v2516 = vadd.f32 %v2081, %v2316
        %v2517 = vadd.f32 %v2082, %v2429
        %v2518 = vadd.f32 %v2083, %v2319
        %v2519 = vadd.f32 %v2084, %v2432
        %v2520 = vadd.f32 %v2085, %v2322
        %v2521 = vadd.f32 %v2086, %v2435
        %v2522 = vadd.f32 %v2087, %v2325
        %v2523 = vadd.f32 %v2088, %v2438
        %v2524 = vadd.f32 %v2089, %v2328
        %v2525 = vadd.f32 %v2090, %v2441
        %v2526 = vadd.f32 %v2091, %v2331
        %v2527 = vadd.f32 %v2092, %v2444
        %v2528 = vadd.f32 %v2093, %v2334
        %v2529 = vadd.f32 %v2094, %v2447
        %v2530 = vadd.f32 %v2095, %v2337
        %v2531 = vadd.f32 %v2096, %v2450
        %v2532 = vadd.f32 %v2097, %v2340
        %v2533 = vadd.f32 %v2098, %v2453
        %v2534 = vadd.f32 %v2099, %v2343
        %v2535 = vadd.f32 %v2100, %v2456
        %v2536 = vadd.f32 %v2101, %v2346
        %v2537 = vadd.f32 %v2102, %v2459
        %v2538 = vadd.f32 %v2103, %v2349
        %v2539 = vadd.f32 %v2104, %v2462
        %v2540 = vadd.f32 %v2105, %v2352
        %v2541 = vadd.f32 %v2106, %v2465
        %v2542 = vadd.f32 %v2107, %v2355
        %v2543 = vadd.f32 %v2108, %v2468
        %v2544 = vadd.f32 %v2109, %v2358
        %v2545 = vadd.f32 %v2110, %v2471
        %v2546 = vadd.f32 %v2111, %v2361
        %v2547 = vadd.f32 %v2112, %v2474
        %v2548 = vadd.f32 %v2113, %v2364
        %v2549 = vadd.f32 %v2114, %v2477
        %v2550 = vadd.f32 %v2115, %v2367
        %v2551 = vadd.f32 %v2116, %v2480
        %v2552 = vadd.f32 %v2117, %v2370
        %v2553 = vadd.f32 %v2118, %v2483
        %v2554 = vadd.f32 %v2119, %v2373
        %v2555 = vadd.f32 %v2120, %v2486
        %v2556 = vadd.f32 %v2121, %v2376
        %v2557 = vadd.f32 %v2122, %v2489
        %v2558 = vadd.f32 %v2123, %v2379
        %v2559 = vadd.f32 %v2124, %v2492
        %v2560 = vadd.f32 %v2125, %v2382
        %v2561 = vadd.f32 %v2126, %v2495
        %v2562 = vadd.f32 %v2127, %v2385
        %v2563 = vadd.f32 %v2128, %v2498
        %v2564 = vld [vmem:[#allocation2 + $0x10] sm:$0xff]
        %v2565 = vld [vmem:[#allocation2 + $0x18] sm:$0xff]
        %v2566 = vld [vmem:[#allocation2 + $0x20] sm:$0xff]
        %v2567 = vld [vmem:[#allocation2 + $0x28] sm:$0xff]
        %v2568 = vld [vmem:[#allocation2 + $0x30] sm:$0xff]
        %v2569 = vld [vmem:[#allocation2 + $0x38] sm:$0xff]
        %v2570 = vld [vmem:[#allocation2 + $0x40] sm:$0xff]
        %v2571 = vld [vmem:[#allocation2 + $0x48] sm:$0xff]
        %v2572 = vld [vmem:[#allocation2 + $0x50] sm:$0xff]
        %v2573 = vld [vmem:[#allocation2 + $0x58] sm:$0xff]
        %v2574 = vld [vmem:[#allocation2 + $0x60] sm:$0xff]
        %v2575 = vld [vmem:[#allocation2 + $0x68] sm:$0xff]
        %v2576 = vld [vmem:[#allocation2 + $0x70] sm:$0xff]
        %v2577 = vld [vmem:[#allocation2 + $0x78] sm:$0xff]
        %v2578 = vld [vmem:[#allocation2 + $0x80] sm:$0xff]
        %v2579 = vld [vmem:[#allocation2 + $0x88] sm:$0xff]
        %v2580 = vld [vmem:[#allocation2 + $0x90] sm:$0xff]
        %v2581 = vld [vmem:[#allocation2 + $0x98] sm:$0xff]
        %v2582 = vld [vmem:[#allocation2 + $0xa0] sm:$0xff]
        %v2583 = vld [vmem:[#allocation2 + $0xa8] sm:$0xff]
        %v2584 = vld [vmem:[#allocation2 + $0xb0] sm:$0xff]
        %v2585 = vld [vmem:[#allocation2 + $0xb8] sm:$0xff]
        %v2586 = vld [vmem:[#allocation2 + $0xc0] sm:$0xff]
        %v2587 = vld [vmem:[#allocation2 + $0xc8] sm:$0xff]
        %v2588 = vld [vmem:[#allocation2 + $0xd0] sm:$0xff]
        %v2589 = vld [vmem:[#allocation2 + $0xd8] sm:$0xff]
        %v2590 = vld [vmem:[#allocation2 + $0xe0] sm:$0xff]
        %v2591 = vld [vmem:[#allocation2 + $0xe8] sm:$0xff]
        %v2592 = vld [vmem:[#allocation2 + $0xf0] sm:$0xff]
        %v2593 = vld [vmem:[#allocation2 + $0xf8] sm:$0xff]
        %v2594 = vld [vmem:[#allocation2 + $0x100] sm:$0xff]
        %v2595 = vld [vmem:[#allocation2 + $0x108] sm:$0xff]
        %s2596 = scalar_lea.vmem %s424, 640
        %v2597 = vld [vmem:[%s2596] sm:$0xff]
        %v2598 = vld [vmem:[%s2596 + $0x8] sm:$0xff]
        %v2599 = vld [vmem:[%s2596 + $0x10] sm:$0xff]
        %v2600 = vld [vmem:[%s2596 + $0x18] sm:$0xff]
        %v2601 = vld [vmem:[%s2596 + $0x20] sm:$0xff]
        %v2602 = vld [vmem:[%s2596 + $0x28] sm:$0xff]
        %v2603 = vld [vmem:[%s2596 + $0x30] sm:$0xff]
        %v2604 = vld [vmem:[%s2596 + $0x38] sm:$0xff]
        %v2605 = vld [vmem:[%s2596 + $0x40] sm:$0xff]
        %v2606 = vld [vmem:[%s2596 + $0x48] sm:$0xff]
        %v2607 = vld [vmem:[%s2596 + $0x50] sm:$0xff]
        %v2608 = vld [vmem:[%s2596 + $0x58] sm:$0xff]
        %v2609 = vld [vmem:[%s2596 + $0x60] sm:$0xff]
        %v2610 = vld [vmem:[%s2596 + $0x68] sm:$0xff]
        %v2611 = vld [vmem:[%s2596 + $0x70] sm:$0xff]
        %v2612 = vld [vmem:[%s2596 + $0x78] sm:$0xff]
        %v2614 = vsel %vm481, %v2564, 0
        %v2617 = vsel %vm481, %v2565, 0
        %v2620 = vsel %vm481, %v2566, 0
        %v2623 = vsel %vm481, %v2567, 0
        %v2626 = vsel %vm481, %v2568, 0
        %v2629 = vsel %vm481, %v2569, 0
        %v2632 = vsel %vm481, %v2570, 0
        %v2635 = vsel %vm481, %v2571, 0
        %v2638 = vsel %vm481, %v2572, 0
        %v2641 = vsel %vm481, %v2573, 0
        %v2644 = vsel %vm481, %v2574, 0
        %v2647 = vsel %vm481, %v2575, 0
        %v2650 = vsel %vm481, %v2576, 0
        %v2653 = vsel %vm481, %v2577, 0
        %v2656 = vsel %vm481, %v2578, 0
        %v2659 = vsel %vm481, %v2579, 0
        %v2662 = vsel %vm481, %v2580, 0
        %v2665 = vsel %vm481, %v2581, 0
        %v2668 = vsel %vm481, %v2582, 0
        %v2671 = vsel %vm481, %v2583, 0
        %v2674 = vsel %vm481, %v2584, 0
        %v2677 = vsel %vm481, %v2585, 0
        %v2680 = vsel %vm481, %v2586, 0
        %v2683 = vsel %vm481, %v2587, 0
        %v2686 = vsel %vm481, %v2588, 0
        %v2689 = vsel %vm481, %v2589, 0
        %v2692 = vsel %vm481, %v2590, 0
        %v2695 = vsel %vm481, %v2591, 0
        %v2698 = vsel %vm481, %v2592, 0
        %v2701 = vsel %vm481, %v2593, 0
        %v2704 = vsel %vm481, %v2594, 0
        %v2707 = vsel %vm481, %v2595, 0
        %2709 = vmatpush.msra.mxu0 0.0
        %2710 = vmatpush.msra.mxu0 0.0
        %2711 = vmatpush.msra.mxu0 0.0
        %2712 = vmatpush.msra.mxu0 0.0
        %2713 = vmatpush.msra.mxu0 0.0
        %2714 = vmatpush.msra.mxu0 0.0
        %2715 = vmatpush.msra.mxu0 0.0
        %2716 = vmatpush.msra.mxu0 0.0
        %2717 = vmatpush.msra.mxu0 %v2611
        %2718 = vmatpush.msra.mxu0 %v2609
        %2719 = vmatpush.msra.mxu0 %v2607
        %2720 = vmatpush.msra.mxu0 %v2605
        %2721 = vmatpush.msra.mxu0 %v2603
        %2722 = vmatpush.msra.mxu0 %v2601
        %2723 = vmatpush.msra.mxu0 %v2599
        %2724 = vmatpush.msra.mxu0 %v2597
        %2725 = vmatmul.f32.gmra.mxu0 %v2614
        %v2726 = vpop.f32.mrf.mxu0
        %v2727 = vadd.f32 0.0, %v2726
        %2728 = vmatmul.f32.gmra.mxu0 %v2617
        %v2729 = vpop.f32.mrf.mxu0
        %v2730 = vadd.f32 0.0, %v2729
        %2731 = vmatmul.f32.gmra.mxu0 %v2620
        %v2732 = vpop.f32.mrf.mxu0
        %v2733 = vadd.f32 0.0, %v2732
        %2734 = vmatmul.f32.gmra.mxu0 %v2623
        %v2735 = vpop.f32.mrf.mxu0
        %v2736 = vadd.f32 0.0, %v2735
        %2737 = vmatmul.f32.gmra.mxu0 %v2626
        %v2738 = vpop.f32.mrf.mxu0
        %v2739 = vadd.f32 0.0, %v2738
        %2740 = vmatmul.f32.gmra.mxu0 %v2629
        %v2741 = vpop.f32.mrf.mxu0
        %v2742 = vadd.f32 0.0, %v2741
        %2743 = vmatmul.f32.gmra.mxu0 %v2632
        %v2744 = vpop.f32.mrf.mxu0
        %v2745 = vadd.f32 0.0, %v2744
        %2746 = vmatmul.f32.gmra.mxu0 %v2635
        %v2747 = vpop.f32.mrf.mxu0
        %v2748 = vadd.f32 0.0, %v2747
        %2749 = vmatmul.f32.gmra.mxu0 %v2638
        %v2750 = vpop.f32.mrf.mxu0
        %v2751 = vadd.f32 0.0, %v2750
        %2752 = vmatmul.f32.gmra.mxu0 %v2641
        %v2753 = vpop.f32.mrf.mxu0
        %v2754 = vadd.f32 0.0, %v2753
        %2755 = vmatmul.f32.gmra.mxu0 %v2644
        %v2756 = vpop.f32.mrf.mxu0
        %v2757 = vadd.f32 0.0, %v2756
        %2758 = vmatmul.f32.gmra.mxu0 %v2647
        %v2759 = vpop.f32.mrf.mxu0
        %v2760 = vadd.f32 0.0, %v2759
        %2761 = vmatmul.f32.gmra.mxu0 %v2650
        %v2762 = vpop.f32.mrf.mxu0
        %v2763 = vadd.f32 0.0, %v2762
        %2764 = vmatmul.f32.gmra.mxu0 %v2653
        %v2765 = vpop.f32.mrf.mxu0
        %v2766 = vadd.f32 0.0, %v2765
        %2767 = vmatmul.f32.gmra.mxu0 %v2656
        %v2768 = vpop.f32.mrf.mxu0
        %v2769 = vadd.f32 0.0, %v2768
        %2770 = vmatmul.f32.gmra.mxu0 %v2659
        %v2771 = vpop.f32.mrf.mxu0
        %v2772 = vadd.f32 0.0, %v2771
        %2773 = vmatmul.f32.gmra.mxu0 %v2662
        %v2774 = vpop.f32.mrf.mxu0
        %v2775 = vadd.f32 0.0, %v2774
        %2776 = vmatmul.f32.gmra.mxu0 %v2665
        %v2777 = vpop.f32.mrf.mxu0
        %v2778 = vadd.f32 0.0, %v2777
        %2779 = vmatmul.f32.gmra.mxu0 %v2668
        %v2780 = vpop.f32.mrf.mxu0
        %v2781 = vadd.f32 0.0, %v2780
        %2782 = vmatmul.f32.gmra.mxu0 %v2671
        %v2783 = vpop.f32.mrf.mxu0
        %v2784 = vadd.f32 0.0, %v2783
        %2785 = vmatmul.f32.gmra.mxu0 %v2674
        %v2786 = vpop.f32.mrf.mxu0
        %v2787 = vadd.f32 0.0, %v2786
        %2788 = vmatmul.f32.gmra.mxu0 %v2677
        %v2789 = vpop.f32.mrf.mxu0
        %v2790 = vadd.f32 0.0, %v2789
        %2791 = vmatmul.f32.gmra.mxu0 %v2680
        %v2792 = vpop.f32.mrf.mxu0
        %v2793 = vadd.f32 0.0, %v2792
        %2794 = vmatmul.f32.gmra.mxu0 %v2683
        %v2795 = vpop.f32.mrf.mxu0
        %v2796 = vadd.f32 0.0, %v2795
        %2797 = vmatmul.f32.gmra.mxu0 %v2686
        %v2798 = vpop.f32.mrf.mxu0
        %v2799 = vadd.f32 0.0, %v2798
        %2800 = vmatmul.f32.gmra.mxu0 %v2689
        %v2801 = vpop.f32.mrf.mxu0
        %v2802 = vadd.f32 0.0, %v2801
        %2803 = vmatmul.f32.gmra.mxu0 %v2692
        %v2804 = vpop.f32.mrf.mxu0
        %v2805 = vadd.f32 0.0, %v2804
        %2806 = vmatmul.f32.gmra.mxu0 %v2695
        %v2807 = vpop.f32.mrf.mxu0
        %v2808 = vadd.f32 0.0, %v2807
        %2809 = vmatmul.f32.gmra.mxu0 %v2698
        %v2810 = vpop.f32.mrf.mxu0
        %v2811 = vadd.f32 0.0, %v2810
        %2812 = vmatmul.f32.gmra.mxu0 %v2701
        %v2813 = vpop.f32.mrf.mxu0
        %v2814 = vadd.f32 0.0, %v2813
        %2815 = vmatmul.f32.gmra.mxu0 %v2704
        %v2816 = vpop.f32.mrf.mxu0
        %v2817 = vadd.f32 0.0, %v2816
        %2818 = vmatmul.f32.gmra.mxu0 %v2707
        %v2819 = vpop.f32.mrf.mxu0
        %v2820 = vadd.f32 0.0, %v2819
        %2821 = vdwg.mxu0
        %2822 = vmatpush.msra.mxu0 0.0
        %2823 = vmatpush.msra.mxu0 0.0
        %2824 = vmatpush.msra.mxu0 0.0
        %2825 = vmatpush.msra.mxu0 0.0
        %2826 = vmatpush.msra.mxu0 0.0
        %2827 = vmatpush.msra.mxu0 0.0
        %2828 = vmatpush.msra.mxu0 0.0
        %2829 = vmatpush.msra.mxu0 0.0
        %2830 = vmatpush.msra.mxu0 %v2612
        %2831 = vmatpush.msra.mxu0 %v2610
        %2832 = vmatpush.msra.mxu0 %v2608
        %2833 = vmatpush.msra.mxu0 %v2606
        %2834 = vmatpush.msra.mxu0 %v2604
        %2835 = vmatpush.msra.mxu0 %v2602
        %2836 = vmatpush.msra.mxu0 %v2600
        %2837 = vmatpush.msra.mxu0 %v2598
        %2838 = vmatmul.f32.gmra.mxu0 %v2614
        %v2839 = vpop.f32.mrf.mxu0
        %v2840 = vadd.f32 0.0, %v2839
        %2841 = vmatmul.f32.gmra.mxu0 %v2617
        %v2842 = vpop.f32.mrf.mxu0
        %v2843 = vadd.f32 0.0, %v2842
        %2844 = vmatmul.f32.gmra.mxu0 %v2620
        %v2845 = vpop.f32.mrf.mxu0
        %v2846 = vadd.f32 0.0, %v2845
        %2847 = vmatmul.f32.gmra.mxu0 %v2623
        %v2848 = vpop.f32.mrf.mxu0
        %v2849 = vadd.f32 0.0, %v2848
        %2850 = vmatmul.f32.gmra.mxu0 %v2626
        %v2851 = vpop.f32.mrf.mxu0
        %v2852 = vadd.f32 0.0, %v2851
        %2853 = vmatmul.f32.gmra.mxu0 %v2629
        %v2854 = vpop.f32.mrf.mxu0
        %v2855 = vadd.f32 0.0, %v2854
        %2856 = vmatmul.f32.gmra.mxu0 %v2632
        %v2857 = vpop.f32.mrf.mxu0
        %v2858 = vadd.f32 0.0, %v2857
        %2859 = vmatmul.f32.gmra.mxu0 %v2635
        %v2860 = vpop.f32.mrf.mxu0
        %v2861 = vadd.f32 0.0, %v2860
        %2862 = vmatmul.f32.gmra.mxu0 %v2638
        %v2863 = vpop.f32.mrf.mxu0
        %v2864 = vadd.f32 0.0, %v2863
        %2865 = vmatmul.f32.gmra.mxu0 %v2641
        %v2866 = vpop.f32.mrf.mxu0
        %v2867 = vadd.f32 0.0, %v2866
        %2868 = vmatmul.f32.gmra.mxu0 %v2644
        %v2869 = vpop.f32.mrf.mxu0
        %v2870 = vadd.f32 0.0, %v2869
        %2871 = vmatmul.f32.gmra.mxu0 %v2647
        %v2872 = vpop.f32.mrf.mxu0
        %v2873 = vadd.f32 0.0, %v2872
        %2874 = vmatmul.f32.gmra.mxu0 %v2650
        %v2875 = vpop.f32.mrf.mxu0
        %v2876 = vadd.f32 0.0, %v2875
        %2877 = vmatmul.f32.gmra.mxu0 %v2653
        %v2878 = vpop.f32.mrf.mxu0
        %v2879 = vadd.f32 0.0, %v2878
        %2880 = vmatmul.f32.gmra.mxu0 %v2656
        %v2881 = vpop.f32.mrf.mxu0
        %v2882 = vadd.f32 0.0, %v2881
        %2883 = vmatmul.f32.gmra.mxu0 %v2659
        %v2884 = vpop.f32.mrf.mxu0
        %v2885 = vadd.f32 0.0, %v2884
        %2886 = vmatmul.f32.gmra.mxu0 %v2662
        %v2887 = vpop.f32.mrf.mxu0
        %v2888 = vadd.f32 0.0, %v2887
        %2889 = vmatmul.f32.gmra.mxu0 %v2665
        %v2890 = vpop.f32.mrf.mxu0
        %v2891 = vadd.f32 0.0, %v2890
        %2892 = vmatmul.f32.gmra.mxu0 %v2668
        %v2893 = vpop.f32.mrf.mxu0
        %v2894 = vadd.f32 0.0, %v2893
        %2895 = vmatmul.f32.gmra.mxu0 %v2671
        %v2896 = vpop.f32.mrf.mxu0
        %v2897 = vadd.f32 0.0, %v2896
        %2898 = vmatmul.f32.gmra.mxu0 %v2674
        %v2899 = vpop.f32.mrf.mxu0
        %v2900 = vadd.f32 0.0, %v2899
        %2901 = vmatmul.f32.gmra.mxu0 %v2677
        %v2902 = vpop.f32.mrf.mxu0
        %v2903 = vadd.f32 0.0, %v2902
        %2904 = vmatmul.f32.gmra.mxu0 %v2680
        %v2905 = vpop.f32.mrf.mxu0
        %v2906 = vadd.f32 0.0, %v2905
        %2907 = vmatmul.f32.gmra.mxu0 %v2683
        %v2908 = vpop.f32.mrf.mxu0
        %v2909 = vadd.f32 0.0, %v2908
        %2910 = vmatmul.f32.gmra.mxu0 %v2686
        %v2911 = vpop.f32.mrf.mxu0
        %v2912 = vadd.f32 0.0, %v2911
        %2913 = vmatmul.f32.gmra.mxu0 %v2689
        %v2914 = vpop.f32.mrf.mxu0
        %v2915 = vadd.f32 0.0, %v2914
        %2916 = vmatmul.f32.gmra.mxu0 %v2692
        %v2917 = vpop.f32.mrf.mxu0
        %v2918 = vadd.f32 0.0, %v2917
        %2919 = vmatmul.f32.gmra.mxu0 %v2695
        %v2920 = vpop.f32.mrf.mxu0
        %v2921 = vadd.f32 0.0, %v2920
        %2922 = vmatmul.f32.gmra.mxu0 %v2698
        %v2923 = vpop.f32.mrf.mxu0
        %v2924 = vadd.f32 0.0, %v2923
        %2925 = vmatmul.f32.gmra.mxu0 %v2701
        %v2926 = vpop.f32.mrf.mxu0
        %v2927 = vadd.f32 0.0, %v2926
        %2928 = vmatmul.f32.gmra.mxu0 %v2704
        %v2929 = vpop.f32.mrf.mxu0
        %v2930 = vadd.f32 0.0, %v2929
        %2931 = vmatmul.f32.gmra.mxu0 %v2707
        %v2932 = vpop.f32.mrf.mxu0
        %v2933 = vadd.f32 0.0, %v2932
        %2934 = vdwg.mxu0
        %v2935 = vadd.f32 %v2500, %v2727
        %v2936 = vadd.f32 %v2501, %v2840
        %v2937 = vadd.f32 %v2502, %v2730
        %v2938 = vadd.f32 %v2503, %v2843
        %v2939 = vadd.f32 %v2504, %v2733
        %v2940 = vadd.f32 %v2505, %v2846
        %v2941 = vadd.f32 %v2506, %v2736
        %v2942 = vadd.f32 %v2507, %v2849
        %v2943 = vadd.f32 %v2508, %v2739
        %v2944 = vadd.f32 %v2509, %v2852
        %v2945 = vadd.f32 %v2510, %v2742
        %v2946 = vadd.f32 %v2511, %v2855
        %v2947 = vadd.f32 %v2512, %v2745
        %v2948 = vadd.f32 %v2513, %v2858
        %v2949 = vadd.f32 %v2514, %v2748
        %v2950 = vadd.f32 %v2515, %v2861
        %v2951 = vadd.f32 %v2516, %v2751
        %v2952 = vadd.f32 %v2517, %v2864
        %v2953 = vadd.f32 %v2518, %v2754
        %v2954 = vadd.f32 %v2519, %v2867
        %v2955 = vadd.f32 %v2520, %v2757
        %v2956 = vadd.f32 %v2521, %v2870
        %v2957 = vadd.f32 %v2522, %v2760
        %v2958 = vadd.f32 %v2523, %v2873
        %v2959 = vadd.f32 %v2524, %v2763
        %v2960 = vadd.f32 %v2525, %v2876
        %v2961 = vadd.f32 %v2526, %v2766
        %v2962 = vadd.f32 %v2527, %v2879
        %v2963 = vadd.f32 %v2528, %v2769
        %v2964 = vadd.f32 %v2529, %v2882
        %v2965 = vadd.f32 %v2530, %v2772
        %v2966 = vadd.f32 %v2531, %v2885
        %v2967 = vadd.f32 %v2532, %v2775
        %v2968 = vadd.f32 %v2533, %v2888
        %v2969 = vadd.f32 %v2534, %v2778
        %v2970 = vadd.f32 %v2535, %v2891
        %v2971 = vadd.f32 %v2536, %v2781
        %v2972 = vadd.f32 %v2537, %v2894
        %v2973 = vadd.f32 %v2538, %v2784
        %v2974 = vadd.f32 %v2539, %v2897
        %v2975 = vadd.f32 %v2540, %v2787
        %v2976 = vadd.f32 %v2541, %v2900
        %v2977 = vadd.f32 %v2542, %v2790
        %v2978 = vadd.f32 %v2543, %v2903
        %v2979 = vadd.f32 %v2544, %v2793
        %v2980 = vadd.f32 %v2545, %v2906
        %v2981 = vadd.f32 %v2546, %v2796
        %v2982 = vadd.f32 %v2547, %v2909
        %v2983 = vadd.f32 %v2548, %v2799
        %v2984 = vadd.f32 %v2549, %v2912
        %v2985 = vadd.f32 %v2550, %v2802
        %v2986 = vadd.f32 %v2551, %v2915
        %v2987 = vadd.f32 %v2552, %v2805
        %v2988 = vadd.f32 %v2553, %v2918
        %v2989 = vadd.f32 %v2554, %v2808
        %v2990 = vadd.f32 %v2555, %v2921
        %v2991 = vadd.f32 %v2556, %v2811
        %v2992 = vadd.f32 %v2557, %v2924
        %v2993 = vadd.f32 %v2558, %v2814
        %v2994 = vadd.f32 %v2559, %v2927
        %v2995 = vadd.f32 %v2560, %v2817
        %v2996 = vadd.f32 %v2561, %v2930
        %v2997 = vadd.f32 %v2562, %v2820
        %v2998 = vadd.f32 %v2563, %v2933
        %v2999 = vld [vmem:[#allocation2 + $0x11] sm:$0xff]
        %v3000 = vld [vmem:[#allocation2 + $0x19] sm:$0xff]
        %v3001 = vld [vmem:[#allocation2 + $0x21] sm:$0xff]
        %v3002 = vld [vmem:[#allocation2 + $0x29] sm:$0xff]
        %v3003 = vld [vmem:[#allocation2 + $0x31] sm:$0xff]
        %v3004 = vld [vmem:[#allocation2 + $0x39] sm:$0xff]
        %v3005 = vld [vmem:[#allocation2 + $0x41] sm:$0xff]
        %v3006 = vld [vmem:[#allocation2 + $0x49] sm:$0xff]
        %v3007 = vld [vmem:[#allocation2 + $0x51] sm:$0xff]
        %v3008 = vld [vmem:[#allocation2 + $0x59] sm:$0xff]
        %v3009 = vld [vmem:[#allocation2 + $0x61] sm:$0xff]
        %v3010 = vld [vmem:[#allocation2 + $0x69] sm:$0xff]
        %v3011 = vld [vmem:[#allocation2 + $0x71] sm:$0xff]
        %v3012 = vld [vmem:[#allocation2 + $0x79] sm:$0xff]
        %v3013 = vld [vmem:[#allocation2 + $0x81] sm:$0xff]
        %v3014 = vld [vmem:[#allocation2 + $0x89] sm:$0xff]
        %v3015 = vld [vmem:[#allocation2 + $0x91] sm:$0xff]
        %v3016 = vld [vmem:[#allocation2 + $0x99] sm:$0xff]
        %v3017 = vld [vmem:[#allocation2 + $0xa1] sm:$0xff]
        %v3018 = vld [vmem:[#allocation2 + $0xa9] sm:$0xff]
        %v3019 = vld [vmem:[#allocation2 + $0xb1] sm:$0xff]
        %v3020 = vld [vmem:[#allocation2 + $0xb9] sm:$0xff]
        %v3021 = vld [vmem:[#allocation2 + $0xc1] sm:$0xff]
        %v3022 = vld [vmem:[#allocation2 + $0xc9] sm:$0xff]
        %v3023 = vld [vmem:[#allocation2 + $0xd1] sm:$0xff]
        %v3024 = vld [vmem:[#allocation2 + $0xd9] sm:$0xff]
        %v3025 = vld [vmem:[#allocation2 + $0xe1] sm:$0xff]
        %v3026 = vld [vmem:[#allocation2 + $0xe9] sm:$0xff]
        %v3027 = vld [vmem:[#allocation2 + $0xf1] sm:$0xff]
        %v3028 = vld [vmem:[#allocation2 + $0xf9] sm:$0xff]
        %v3029 = vld [vmem:[#allocation2 + $0x101] sm:$0xff]
        %v3030 = vld [vmem:[#allocation2 + $0x109] sm:$0xff]
        %s3031 = scalar_lea.vmem %s424, 768
        %v3032 = vld [vmem:[%s3031] sm:$0xff]
        %v3033 = vld [vmem:[%s3031 + $0x8] sm:$0xff]
        %v3034 = vld [vmem:[%s3031 + $0x10] sm:$0xff]
        %v3035 = vld [vmem:[%s3031 + $0x18] sm:$0xff]
        %v3036 = vld [vmem:[%s3031 + $0x20] sm:$0xff]
        %v3037 = vld [vmem:[%s3031 + $0x28] sm:$0xff]
        %v3038 = vld [vmem:[%s3031 + $0x30] sm:$0xff]
        %v3039 = vld [vmem:[%s3031 + $0x38] sm:$0xff]
        %v3040 = vld [vmem:[%s3031 + $0x40] sm:$0xff]
        %v3041 = vld [vmem:[%s3031 + $0x48] sm:$0xff]
        %v3042 = vld [vmem:[%s3031 + $0x50] sm:$0xff]
        %v3043 = vld [vmem:[%s3031 + $0x58] sm:$0xff]
        %v3044 = vld [vmem:[%s3031 + $0x60] sm:$0xff]
        %v3045 = vld [vmem:[%s3031 + $0x68] sm:$0xff]
        %v3046 = vld [vmem:[%s3031 + $0x70] sm:$0xff]
        %v3047 = vld [vmem:[%s3031 + $0x78] sm:$0xff]
        %v3049 = vsel %vm481, %v2999, 0
        %v3052 = vsel %vm481, %v3000, 0
        %v3055 = vsel %vm481, %v3001, 0
        %v3058 = vsel %vm481, %v3002, 0
        %v3061 = vsel %vm481, %v3003, 0
        %v3064 = vsel %vm481, %v3004, 0
        %v3067 = vsel %vm481, %v3005, 0
        %v3070 = vsel %vm481, %v3006, 0
        %v3073 = vsel %vm481, %v3007, 0
        %v3076 = vsel %vm481, %v3008, 0
        %v3079 = vsel %vm481, %v3009, 0
        %v3082 = vsel %vm481, %v3010, 0
        %v3085 = vsel %vm481, %v3011, 0
        %v3088 = vsel %vm481, %v3012, 0
        %v3091 = vsel %vm481, %v3013, 0
        %v3094 = vsel %vm481, %v3014, 0
        %v3097 = vsel %vm481, %v3015, 0
        %v3100 = vsel %vm481, %v3016, 0
        %v3103 = vsel %vm481, %v3017, 0
        %v3106 = vsel %vm481, %v3018, 0
        %v3109 = vsel %vm481, %v3019, 0
        %v3112 = vsel %vm481, %v3020, 0
        %v3115 = vsel %vm481, %v3021, 0
        %v3118 = vsel %vm481, %v3022, 0
        %v3121 = vsel %vm481, %v3023, 0
        %v3124 = vsel %vm481, %v3024, 0
        %v3127 = vsel %vm481, %v3025, 0
        %v3130 = vsel %vm481, %v3026, 0
        %v3133 = vsel %vm481, %v3027, 0
        %v3136 = vsel %vm481, %v3028, 0
        %v3139 = vsel %vm481, %v3029, 0
        %v3142 = vsel %vm481, %v3030, 0
        %3144 = vmatpush.msra.mxu0 0.0
        %3145 = vmatpush.msra.mxu0 0.0
        %3146 = vmatpush.msra.mxu0 0.0
        %3147 = vmatpush.msra.mxu0 0.0
        %3148 = vmatpush.msra.mxu0 0.0
        %3149 = vmatpush.msra.mxu0 0.0
        %3150 = vmatpush.msra.mxu0 0.0
        %3151 = vmatpush.msra.mxu0 0.0
        %3152 = vmatpush.msra.mxu0 %v3046
        %3153 = vmatpush.msra.mxu0 %v3044
        %3154 = vmatpush.msra.mxu0 %v3042
        %3155 = vmatpush.msra.mxu0 %v3040
        %3156 = vmatpush.msra.mxu0 %v3038
        %3157 = vmatpush.msra.mxu0 %v3036
        %3158 = vmatpush.msra.mxu0 %v3034
        %3159 = vmatpush.msra.mxu0 %v3032
        %3160 = vmatmul.f32.gmra.mxu0 %v3049
        %v3161 = vpop.f32.mrf.mxu0
        %v3162 = vadd.f32 0.0, %v3161
        %3163 = vmatmul.f32.gmra.mxu0 %v3052
        %v3164 = vpop.f32.mrf.mxu0
        %v3165 = vadd.f32 0.0, %v3164
        %3166 = vmatmul.f32.gmra.mxu0 %v3055
        %v3167 = vpop.f32.mrf.mxu0
        %v3168 = vadd.f32 0.0, %v3167
        %3169 = vmatmul.f32.gmra.mxu0 %v3058
        %v3170 = vpop.f32.mrf.mxu0
        %v3171 = vadd.f32 0.0, %v3170
        %3172 = vmatmul.f32.gmra.mxu0 %v3061
        %v3173 = vpop.f32.mrf.mxu0
        %v3174 = vadd.f32 0.0, %v3173
        %3175 = vmatmul.f32.gmra.mxu0 %v3064
        %v3176 = vpop.f32.mrf.mxu0
        %v3177 = vadd.f32 0.0, %v3176
        %3178 = vmatmul.f32.gmra.mxu0 %v3067
        %v3179 = vpop.f32.mrf.mxu0
        %v3180 = vadd.f32 0.0, %v3179
        %3181 = vmatmul.f32.gmra.mxu0 %v3070
        %v3182 = vpop.f32.mrf.mxu0
        %v3183 = vadd.f32 0.0, %v3182
        %3184 = vmatmul.f32.gmra.mxu0 %v3073
        %v3185 = vpop.f32.mrf.mxu0
        %v3186 = vadd.f32 0.0, %v3185
        %3187 = vmatmul.f32.gmra.mxu0 %v3076
        %v3188 = vpop.f32.mrf.mxu0
        %v3189 = vadd.f32 0.0, %v3188
        %3190 = vmatmul.f32.gmra.mxu0 %v3079
        %v3191 = vpop.f32.mrf.mxu0
        %v3192 = vadd.f32 0.0, %v3191
        %3193 = vmatmul.f32.gmra.mxu0 %v3082
        %v3194 = vpop.f32.mrf.mxu0
        %v3195 = vadd.f32 0.0, %v3194
        %3196 = vmatmul.f32.gmra.mxu0 %v3085
        %v3197 = vpop.f32.mrf.mxu0
        %v3198 = vadd.f32 0.0, %v3197
        %3199 = vmatmul.f32.gmra.mxu0 %v3088
        %v3200 = vpop.f32.mrf.mxu0
        %v3201 = vadd.f32 0.0, %v3200
        %3202 = vmatmul.f32.gmra.mxu0 %v3091
        %v3203 = vpop.f32.mrf.mxu0
        %v3204 = vadd.f32 0.0, %v3203
        %3205 = vmatmul.f32.gmra.mxu0 %v3094
        %v3206 = vpop.f32.mrf.mxu0
        %v3207 = vadd.f32 0.0, %v3206
        %3208 = vmatmul.f32.gmra.mxu0 %v3097
        %v3209 = vpop.f32.mrf.mxu0
        %v3210 = vadd.f32 0.0, %v3209
        %3211 = vmatmul.f32.gmra.mxu0 %v3100
        %v3212 = vpop.f32.mrf.mxu0
        %v3213 = vadd.f32 0.0, %v3212
        %3214 = vmatmul.f32.gmra.mxu0 %v3103
        %v3215 = vpop.f32.mrf.mxu0
        %v3216 = vadd.f32 0.0, %v3215
        %3217 = vmatmul.f32.gmra.mxu0 %v3106
        %v3218 = vpop.f32.mrf.mxu0
        %v3219 = vadd.f32 0.0, %v3218
        %3220 = vmatmul.f32.gmra.mxu0 %v3109
        %v3221 = vpop.f32.mrf.mxu0
        %v3222 = vadd.f32 0.0, %v3221
        %3223 = vmatmul.f32.gmra.mxu0 %v3112
        %v3224 = vpop.f32.mrf.mxu0
        %v3225 = vadd.f32 0.0, %v3224
        %3226 = vmatmul.f32.gmra.mxu0 %v3115
        %v3227 = vpop.f32.mrf.mxu0
        %v3228 = vadd.f32 0.0, %v3227
        %3229 = vmatmul.f32.gmra.mxu0 %v3118
        %v3230 = vpop.f32.mrf.mxu0
        %v3231 = vadd.f32 0.0, %v3230
        %3232 = vmatmul.f32.gmra.mxu0 %v3121
        %v3233 = vpop.f32.mrf.mxu0
        %v3234 = vadd.f32 0.0, %v3233
        %3235 = vmatmul.f32.gmra.mxu0 %v3124
        %v3236 = vpop.f32.mrf.mxu0
        %v3237 = vadd.f32 0.0, %v3236
        %3238 = vmatmul.f32.gmra.mxu0 %v3127
        %v3239 = vpop.f32.mrf.mxu0
        %v3240 = vadd.f32 0.0, %v3239
        %3241 = vmatmul.f32.gmra.mxu0 %v3130
        %v3242 = vpop.f32.mrf.mxu0
        %v3243 = vadd.f32 0.0, %v3242
        %3244 = vmatmul.f32.gmra.mxu0 %v3133
        %v3245 = vpop.f32.mrf.mxu0
        %v3246 = vadd.f32 0.0, %v3245
        %3247 = vmatmul.f32.gmra.mxu0 %v3136
        %v3248 = vpop.f32.mrf.mxu0
        %v3249 = vadd.f32 0.0, %v3248
        %3250 = vmatmul.f32.gmra.mxu0 %v3139
        %v3251 = vpop.f32.mrf.mxu0
        %v3252 = vadd.f32 0.0, %v3251
        %3253 = vmatmul.f32.gmra.mxu0 %v3142
        %v3254 = vpop.f32.mrf.mxu0
        %v3255 = vadd.f32 0.0, %v3254
        %3256 = vdwg.mxu0
        %3257 = vmatpush.msra.mxu0 0.0
        %3258 = vmatpush.msra.mxu0 0.0
        %3259 = vmatpush.msra.mxu0 0.0
        %3260 = vmatpush.msra.mxu0 0.0
        %3261 = vmatpush.msra.mxu0 0.0
        %3262 = vmatpush.msra.mxu0 0.0
        %3263 = vmatpush.msra.mxu0 0.0
        %3264 = vmatpush.msra.mxu0 0.0
        %3265 = vmatpush.msra.mxu0 %v3047
        %3266 = vmatpush.msra.mxu0 %v3045
        %3267 = vmatpush.msra.mxu0 %v3043
        %3268 = vmatpush.msra.mxu0 %v3041
        %3269 = vmatpush.msra.mxu0 %v3039
        %3270 = vmatpush.msra.mxu0 %v3037
        %3271 = vmatpush.msra.mxu0 %v3035
        %3272 = vmatpush.msra.mxu0 %v3033
        %3273 = vmatmul.f32.gmra.mxu0 %v3049
        %v3274 = vpop.f32.mrf.mxu0
        %v3275 = vadd.f32 0.0, %v3274
        %3276 = vmatmul.f32.gmra.mxu0 %v3052
        %v3277 = vpop.f32.mrf.mxu0
        %v3278 = vadd.f32 0.0, %v3277
        %3279 = vmatmul.f32.gmra.mxu0 %v3055
        %v3280 = vpop.f32.mrf.mxu0
        %v3281 = vadd.f32 0.0, %v3280
        %3282 = vmatmul.f32.gmra.mxu0 %v3058
        %v3283 = vpop.f32.mrf.mxu0
        %v3284 = vadd.f32 0.0, %v3283
        %3285 = vmatmul.f32.gmra.mxu0 %v3061
        %v3286 = vpop.f32.mrf.mxu0
        %v3287 = vadd.f32 0.0, %v3286
        %3288 = vmatmul.f32.gmra.mxu0 %v3064
        %v3289 = vpop.f32.mrf.mxu0
        %v3290 = vadd.f32 0.0, %v3289
        %3291 = vmatmul.f32.gmra.mxu0 %v3067
        %v3292 = vpop.f32.mrf.mxu0
        %v3293 = vadd.f32 0.0, %v3292
        %3294 = vmatmul.f32.gmra.mxu0 %v3070
        %v3295 = vpop.f32.mrf.mxu0
        %v3296 = vadd.f32 0.0, %v3295
        %3297 = vmatmul.f32.gmra.mxu0 %v3073
        %v3298 = vpop.f32.mrf.mxu0
        %v3299 = vadd.f32 0.0, %v3298
        %3300 = vmatmul.f32.gmra.mxu0 %v3076
        %v3301 = vpop.f32.mrf.mxu0
        %v3302 = vadd.f32 0.0, %v3301
        %3303 = vmatmul.f32.gmra.mxu0 %v3079
        %v3304 = vpop.f32.mrf.mxu0
        %v3305 = vadd.f32 0.0, %v3304
        %3306 = vmatmul.f32.gmra.mxu0 %v3082
        %v3307 = vpop.f32.mrf.mxu0
        %v3308 = vadd.f32 0.0, %v3307
        %3309 = vmatmul.f32.gmra.mxu0 %v3085
        %v3310 = vpop.f32.mrf.mxu0
        %v3311 = vadd.f32 0.0, %v3310
        %3312 = vmatmul.f32.gmra.mxu0 %v3088
        %v3313 = vpop.f32.mrf.mxu0
        %v3314 = vadd.f32 0.0, %v3313
        %3315 = vmatmul.f32.gmra.mxu0 %v3091
        %v3316 = vpop.f32.mrf.mxu0
        %v3317 = vadd.f32 0.0, %v3316
        %3318 = vmatmul.f32.gmra.mxu0 %v3094
        %v3319 = vpop.f32.mrf.mxu0
        %v3320 = vadd.f32 0.0, %v3319
        %3321 = vmatmul.f32.gmra.mxu0 %v3097
        %v3322 = vpop.f32.mrf.mxu0
        %v3323 = vadd.f32 0.0, %v3322
        %3324 = vmatmul.f32.gmra.mxu0 %v3100
        %v3325 = vpop.f32.mrf.mxu0
        %v3326 = vadd.f32 0.0, %v3325
        %3327 = vmatmul.f32.gmra.mxu0 %v3103
        %v3328 = vpop.f32.mrf.mxu0
        %v3329 = vadd.f32 0.0, %v3328
        %3330 = vmatmul.f32.gmra.mxu0 %v3106
        %v3331 = vpop.f32.mrf.mxu0
        %v3332 = vadd.f32 0.0, %v3331
        %3333 = vmatmul.f32.gmra.mxu0 %v3109
        %v3334 = vpop.f32.mrf.mxu0
        %v3335 = vadd.f32 0.0, %v3334
        %3336 = vmatmul.f32.gmra.mxu0 %v3112
        %v3337 = vpop.f32.mrf.mxu0
        %v3338 = vadd.f32 0.0, %v3337
        %3339 = vmatmul.f32.gmra.mxu0 %v3115
        %v3340 = vpop.f32.mrf.mxu0
        %v3341 = vadd.f32 0.0, %v3340
        %3342 = vmatmul.f32.gmra.mxu0 %v3118
        %v3343 = vpop.f32.mrf.mxu0
        %v3344 = vadd.f32 0.0, %v3343
        %3345 = vmatmul.f32.gmra.mxu0 %v3121
        %v3346 = vpop.f32.mrf.mxu0
        %v3347 = vadd.f32 0.0, %v3346
        %3348 = vmatmul.f32.gmra.mxu0 %v3124
        %v3349 = vpop.f32.mrf.mxu0
        %v3350 = vadd.f32 0.0, %v3349
        %3351 = vmatmul.f32.gmra.mxu0 %v3127
        %v3352 = vpop.f32.mrf.mxu0
        %v3353 = vadd.f32 0.0, %v3352
        %3354 = vmatmul.f32.gmra.mxu0 %v3130
        %v3355 = vpop.f32.mrf.mxu0
        %v3356 = vadd.f32 0.0, %v3355
        %3357 = vmatmul.f32.gmra.mxu0 %v3133
        %v3358 = vpop.f32.mrf.mxu0
        %v3359 = vadd.f32 0.0, %v3358
        %3360 = vmatmul.f32.gmra.mxu0 %v3136
        %v3361 = vpop.f32.mrf.mxu0
        %v3362 = vadd.f32 0.0, %v3361
        %3363 = vmatmul.f32.gmra.mxu0 %v3139
        %v3364 = vpop.f32.mrf.mxu0
        %v3365 = vadd.f32 0.0, %v3364
        %3366 = vmatmul.f32.gmra.mxu0 %v3142
        %v3367 = vpop.f32.mrf.mxu0
        %v3368 = vadd.f32 0.0, %v3367
        %3369 = vdwg.mxu0
        %v3370 = vadd.f32 %v2935, %v3162
        %v3371 = vadd.f32 %v2936, %v3275
        %v3372 = vadd.f32 %v2937, %v3165
        %v3373 = vadd.f32 %v2938, %v3278
        %v3374 = vadd.f32 %v2939, %v3168
        %v3375 = vadd.f32 %v2940, %v3281
        %v3376 = vadd.f32 %v2941, %v3171
        %v3377 = vadd.f32 %v2942, %v3284
        %v3378 = vadd.f32 %v2943, %v3174
        %v3379 = vadd.f32 %v2944, %v3287
        %v3380 = vadd.f32 %v2945, %v3177
        %v3381 = vadd.f32 %v2946, %v3290
        %v3382 = vadd.f32 %v2947, %v3180
        %v3383 = vadd.f32 %v2948, %v3293
        %v3384 = vadd.f32 %v2949, %v3183
        %v3385 = vadd.f32 %v2950, %v3296
        %v3386 = vadd.f32 %v2951, %v3186
        %v3387 = vadd.f32 %v2952, %v3299
        %v3388 = vadd.f32 %v2953, %v3189
        %v3389 = vadd.f32 %v2954, %v3302
        %v3390 = vadd.f32 %v2955, %v3192
        %v3391 = vadd.f32 %v2956, %v3305
        %v3392 = vadd.f32 %v2957, %v3195
        %v3393 = vadd.f32 %v2958, %v3308
        %v3394 = vadd.f32 %v2959, %v3198
        %v3395 = vadd.f32 %v2960, %v3311
        %v3396 = vadd.f32 %v2961, %v3201
        %v3397 = vadd.f32 %v2962, %v3314
        %v3398 = vadd.f32 %v2963, %v3204
        %v3399 = vadd.f32 %v2964, %v3317
        %v3400 = vadd.f32 %v2965, %v3207
        %v3401 = vadd.f32 %v2966, %v3320
        %v3402 = vadd.f32 %v2967, %v3210
        %v3403 = vadd.f32 %v2968, %v3323
        %v3404 = vadd.f32 %v2969, %v3213
        %v3405 = vadd.f32 %v2970, %v3326
        %v3406 = vadd.f32 %v2971, %v3216
        %v3407 = vadd.f32 %v2972, %v3329
        %v3408 = vadd.f32 %v2973, %v3219
        %v3409 = vadd.f32 %v2974, %v3332
        %v3410 = vadd.f32 %v2975, %v3222
        %v3411 = vadd.f32 %v2976, %v3335
        %v3412 = vadd.f32 %v2977, %v3225
        %v3413 = vadd.f32 %v2978, %v3338
        %v3414 = vadd.f32 %v2979, %v3228
        %v3415 = vadd.f32 %v2980, %v3341
        %v3416 = vadd.f32 %v2981, %v3231
        %v3417 = vadd.f32 %v2982, %v3344
        %v3418 = vadd.f32 %v2983, %v3234
        %v3419 = vadd.f32 %v2984, %v3347
        %v3420 = vadd.f32 %v2985, %v3237
        %v3421 = vadd.f32 %v2986, %v3350
        %v3422 = vadd.f32 %v2987, %v3240
        %v3423 = vadd.f32 %v2988, %v3353
        %v3424 = vadd.f32 %v2989, %v3243
        %v3425 = vadd.f32 %v2990, %v3356
        %v3426 = vadd.f32 %v2991, %v3246
        %v3427 = vadd.f32 %v2992, %v3359
        %v3428 = vadd.f32 %v2993, %v3249
        %v3429 = vadd.f32 %v2994, %v3362
        %v3430 = vadd.f32 %v2995, %v3252
        %v3431 = vadd.f32 %v2996, %v3365
        %v3432 = vadd.f32 %v2997, %v3255
        %v3433 = vadd.f32 %v2998, %v3368
        %v3434 = vld [vmem:[#allocation2 + $0x12] sm:$0xff]
        %v3435 = vld [vmem:[#allocation2 + $0x1a] sm:$0xff]
        %v3436 = vld [vmem:[#allocation2 + $0x22] sm:$0xff]
        %v3437 = vld [vmem:[#allocation2 + $0x2a] sm:$0xff]
        %v3438 = vld [vmem:[#allocation2 + $0x32] sm:$0xff]
        %v3439 = vld [vmem:[#allocation2 + $0x3a] sm:$0xff]
        %v3440 = vld [vmem:[#allocation2 + $0x42] sm:$0xff]
        %v3441 = vld [vmem:[#allocation2 + $0x4a] sm:$0xff]
        %v3442 = vld [vmem:[#allocation2 + $0x52] sm:$0xff]
        %v3443 = vld [vmem:[#allocation2 + $0x5a] sm:$0xff]
        %v3444 = vld [vmem:[#allocation2 + $0x62] sm:$0xff]
        %v3445 = vld [vmem:[#allocation2 + $0x6a] sm:$0xff]
        %v3446 = vld [vmem:[#allocation2 + $0x72] sm:$0xff]
        %v3447 = vld [vmem:[#allocation2 + $0x7a] sm:$0xff]
        %v3448 = vld [vmem:[#allocation2 + $0x82] sm:$0xff]
        %v3449 = vld [vmem:[#allocation2 + $0x8a] sm:$0xff]
        %v3450 = vld [vmem:[#allocation2 + $0x92] sm:$0xff]
        %v3451 = vld [vmem:[#allocation2 + $0x9a] sm:$0xff]
        %v3452 = vld [vmem:[#allocation2 + $0xa2] sm:$0xff]
        %v3453 = vld [vmem:[#allocation2 + $0xaa] sm:$0xff]
        %v3454 = vld [vmem:[#allocation2 + $0xb2] sm:$0xff]
        %v3455 = vld [vmem:[#allocation2 + $0xba] sm:$0xff]
        %v3456 = vld [vmem:[#allocation2 + $0xc2] sm:$0xff]
        %v3457 = vld [vmem:[#allocation2 + $0xca] sm:$0xff]
        %v3458 = vld [vmem:[#allocation2 + $0xd2] sm:$0xff]
        %v3459 = vld [vmem:[#allocation2 + $0xda] sm:$0xff]
        %v3460 = vld [vmem:[#allocation2 + $0xe2] sm:$0xff]
        %v3461 = vld [vmem:[#allocation2 + $0xea] sm:$0xff]
        %v3462 = vld [vmem:[#allocation2 + $0xf2] sm:$0xff]
        %v3463 = vld [vmem:[#allocation2 + $0xfa] sm:$0xff]
        %v3464 = vld [vmem:[#allocation2 + $0x102] sm:$0xff]
        %v3465 = vld [vmem:[#allocation2 + $0x10a] sm:$0xff]
        %s3466 = scalar_lea.vmem %s424, 896
        %v3467 = vld [vmem:[%s3466] sm:$0xff]
        %v3468 = vld [vmem:[%s3466 + $0x8] sm:$0xff]
        %v3469 = vld [vmem:[%s3466 + $0x10] sm:$0xff]
        %v3470 = vld [vmem:[%s3466 + $0x18] sm:$0xff]
        %v3471 = vld [vmem:[%s3466 + $0x20] sm:$0xff]
        %v3472 = vld [vmem:[%s3466 + $0x28] sm:$0xff]
        %v3473 = vld [vmem:[%s3466 + $0x30] sm:$0xff]
        %v3474 = vld [vmem:[%s3466 + $0x38] sm:$0xff]
        %v3475 = vld [vmem:[%s3466 + $0x40] sm:$0xff]
        %v3476 = vld [vmem:[%s3466 + $0x48] sm:$0xff]
        %v3477 = vld [vmem:[%s3466 + $0x50] sm:$0xff]
        %v3478 = vld [vmem:[%s3466 + $0x58] sm:$0xff]
        %v3479 = vld [vmem:[%s3466 + $0x60] sm:$0xff]
        %v3480 = vld [vmem:[%s3466 + $0x68] sm:$0xff]
        %v3481 = vld [vmem:[%s3466 + $0x70] sm:$0xff]
        %v3482 = vld [vmem:[%s3466 + $0x78] sm:$0xff]
        %v3484 = vsel %vm481, %v3434, 0
        %v3487 = vsel %vm481, %v3435, 0
        %v3490 = vsel %vm481, %v3436, 0
        %v3493 = vsel %vm481, %v3437, 0
        %v3496 = vsel %vm481, %v3438, 0
        %v3499 = vsel %vm481, %v3439, 0
        %v3502 = vsel %vm481, %v3440, 0
        %v3505 = vsel %vm481, %v3441, 0
        %v3508 = vsel %vm481, %v3442, 0
        %v3511 = vsel %vm481, %v3443, 0
        %v3514 = vsel %vm481, %v3444, 0
        %v3517 = vsel %vm481, %v3445, 0
        %v3520 = vsel %vm481, %v3446, 0
        %v3523 = vsel %vm481, %v3447, 0
        %v3526 = vsel %vm481, %v3448, 0
        %v3529 = vsel %vm481, %v3449, 0
        %v3532 = vsel %vm481, %v3450, 0
        %v3535 = vsel %vm481, %v3451, 0
        %v3538 = vsel %vm481, %v3452, 0
        %v3541 = vsel %vm481, %v3453, 0
        %v3544 = vsel %vm481, %v3454, 0
        %v3547 = vsel %vm481, %v3455, 0
        %v3550 = vsel %vm481, %v3456, 0
        %v3553 = vsel %vm481, %v3457, 0
        %v3556 = vsel %vm481, %v3458, 0
        %v3559 = vsel %vm481, %v3459, 0
        %v3562 = vsel %vm481, %v3460, 0
        %v3565 = vsel %vm481, %v3461, 0
        %v3568 = vsel %vm481, %v3462, 0
        %v3571 = vsel %vm481, %v3463, 0
        %v3574 = vsel %vm481, %v3464, 0
        %v3577 = vsel %vm481, %v3465, 0
        %3579 = vmatpush.msra.mxu0 0.0
        %3580 = vmatpush.msra.mxu0 0.0
        %3581 = vmatpush.msra.mxu0 0.0
        %3582 = vmatpush.msra.mxu0 0.0
        %3583 = vmatpush.msra.mxu0 0.0
        %3584 = vmatpush.msra.mxu0 0.0
        %3585 = vmatpush.msra.mxu0 0.0
        %3586 = vmatpush.msra.mxu0 0.0
        %3587 = vmatpush.msra.mxu0 %v3481
        %3588 = vmatpush.msra.mxu0 %v3479
        %3589 = vmatpush.msra.mxu0 %v3477
        %3590 = vmatpush.msra.mxu0 %v3475
        %3591 = vmatpush.msra.mxu0 %v3473
        %3592 = vmatpush.msra.mxu0 %v3471
        %3593 = vmatpush.msra.mxu0 %v3469
        %3594 = vmatpush.msra.mxu0 %v3467
        %3595 = vmatmul.f32.gmra.mxu0 %v3484
        %v3596 = vpop.f32.mrf.mxu0
        %v3597 = vadd.f32 0.0, %v3596
        %3598 = vmatmul.f32.gmra.mxu0 %v3487
        %v3599 = vpop.f32.mrf.mxu0
        %v3600 = vadd.f32 0.0, %v3599
        %3601 = vmatmul.f32.gmra.mxu0 %v3490
        %v3602 = vpop.f32.mrf.mxu0
        %v3603 = vadd.f32 0.0, %v3602
        %3604 = vmatmul.f32.gmra.mxu0 %v3493
        %v3605 = vpop.f32.mrf.mxu0
        %v3606 = vadd.f32 0.0, %v3605
        %3607 = vmatmul.f32.gmra.mxu0 %v3496
        %v3608 = vpop.f32.mrf.mxu0
        %v3609 = vadd.f32 0.0, %v3608
        %3610 = vmatmul.f32.gmra.mxu0 %v3499
        %v3611 = vpop.f32.mrf.mxu0
        %v3612 = vadd.f32 0.0, %v3611
        %3613 = vmatmul.f32.gmra.mxu0 %v3502
        %v3614 = vpop.f32.mrf.mxu0
        %v3615 = vadd.f32 0.0, %v3614
        %3616 = vmatmul.f32.gmra.mxu0 %v3505
        %v3617 = vpop.f32.mrf.mxu0
        %v3618 = vadd.f32 0.0, %v3617
        %3619 = vmatmul.f32.gmra.mxu0 %v3508
        %v3620 = vpop.f32.mrf.mxu0
        %v3621 = vadd.f32 0.0, %v3620
        %3622 = vmatmul.f32.gmra.mxu0 %v3511
        %v3623 = vpop.f32.mrf.mxu0
        %v3624 = vadd.f32 0.0, %v3623
        %3625 = vmatmul.f32.gmra.mxu0 %v3514
        %v3626 = vpop.f32.mrf.mxu0
        %v3627 = vadd.f32 0.0, %v3626
        %3628 = vmatmul.f32.gmra.mxu0 %v3517
        %v3629 = vpop.f32.mrf.mxu0
        %v3630 = vadd.f32 0.0, %v3629
        %3631 = vmatmul.f32.gmra.mxu0 %v3520
        %v3632 = vpop.f32.mrf.mxu0
        %v3633 = vadd.f32 0.0, %v3632
        %3634 = vmatmul.f32.gmra.mxu0 %v3523
        %v3635 = vpop.f32.mrf.mxu0
        %v3636 = vadd.f32 0.0, %v3635
        %3637 = vmatmul.f32.gmra.mxu0 %v3526
        %v3638 = vpop.f32.mrf.mxu0
        %v3639 = vadd.f32 0.0, %v3638
        %3640 = vmatmul.f32.gmra.mxu0 %v3529
        %v3641 = vpop.f32.mrf.mxu0
        %v3642 = vadd.f32 0.0, %v3641
        %3643 = vmatmul.f32.gmra.mxu0 %v3532
        %v3644 = vpop.f32.mrf.mxu0
        %v3645 = vadd.f32 0.0, %v3644
        %3646 = vmatmul.f32.gmra.mxu0 %v3535
        %v3647 = vpop.f32.mrf.mxu0
        %v3648 = vadd.f32 0.0, %v3647
        %3649 = vmatmul.f32.gmra.mxu0 %v3538
        %v3650 = vpop.f32.mrf.mxu0
        %v3651 = vadd.f32 0.0, %v3650
        %3652 = vmatmul.f32.gmra.mxu0 %v3541
        %v3653 = vpop.f32.mrf.mxu0
        %v3654 = vadd.f32 0.0, %v3653
        %3655 = vmatmul.f32.gmra.mxu0 %v3544
        %v3656 = vpop.f32.mrf.mxu0
        %v3657 = vadd.f32 0.0, %v3656
        %3658 = vmatmul.f32.gmra.mxu0 %v3547
        %v3659 = vpop.f32.mrf.mxu0
        %v3660 = vadd.f32 0.0, %v3659
        %3661 = vmatmul.f32.gmra.mxu0 %v3550
        %v3662 = vpop.f32.mrf.mxu0
        %v3663 = vadd.f32 0.0, %v3662
        %3664 = vmatmul.f32.gmra.mxu0 %v3553
        %v3665 = vpop.f32.mrf.mxu0
        %v3666 = vadd.f32 0.0, %v3665
        %3667 = vmatmul.f32.gmra.mxu0 %v3556
        %v3668 = vpop.f32.mrf.mxu0
        %v3669 = vadd.f32 0.0, %v3668
        %3670 = vmatmul.f32.gmra.mxu0 %v3559
        %v3671 = vpop.f32.mrf.mxu0
        %v3672 = vadd.f32 0.0, %v3671
        %3673 = vmatmul.f32.gmra.mxu0 %v3562
        %v3674 = vpop.f32.mrf.mxu0
        %v3675 = vadd.f32 0.0, %v3674
        %3676 = vmatmul.f32.gmra.mxu0 %v3565
        %v3677 = vpop.f32.mrf.mxu0
        %v3678 = vadd.f32 0.0, %v3677
        %3679 = vmatmul.f32.gmra.mxu0 %v3568
        %v3680 = vpop.f32.mrf.mxu0
        %v3681 = vadd.f32 0.0, %v3680
        %3682 = vmatmul.f32.gmra.mxu0 %v3571
        %v3683 = vpop.f32.mrf.mxu0
        %v3684 = vadd.f32 0.0, %v3683
        %3685 = vmatmul.f32.gmra.mxu0 %v3574
        %v3686 = vpop.f32.mrf.mxu0
        %v3687 = vadd.f32 0.0, %v3686
        %3688 = vmatmul.f32.gmra.mxu0 %v3577
        %v3689 = vpop.f32.mrf.mxu0
        %v3690 = vadd.f32 0.0, %v3689
        %3691 = vdwg.mxu0
        %3692 = vmatpush.msra.mxu0 0.0
        %3693 = vmatpush.msra.mxu0 0.0
        %3694 = vmatpush.msra.mxu0 0.0
        %3695 = vmatpush.msra.mxu0 0.0
        %3696 = vmatpush.msra.mxu0 0.0
        %3697 = vmatpush.msra.mxu0 0.0
        %3698 = vmatpush.msra.mxu0 0.0
        %3699 = vmatpush.msra.mxu0 0.0
        %3700 = vmatpush.msra.mxu0 %v3482
        %3701 = vmatpush.msra.mxu0 %v3480
        %3702 = vmatpush.msra.mxu0 %v3478
        %3703 = vmatpush.msra.mxu0 %v3476
        %3704 = vmatpush.msra.mxu0 %v3474
        %3705 = vmatpush.msra.mxu0 %v3472
        %3706 = vmatpush.msra.mxu0 %v3470
        %3707 = vmatpush.msra.mxu0 %v3468
        %3708 = vmatmul.f32.gmra.mxu0 %v3484
        %v3709 = vpop.f32.mrf.mxu0
        %v3710 = vadd.f32 0.0, %v3709
        %3711 = vmatmul.f32.gmra.mxu0 %v3487
        %v3712 = vpop.f32.mrf.mxu0
        %v3713 = vadd.f32 0.0, %v3712
        %3714 = vmatmul.f32.gmra.mxu0 %v3490
        %v3715 = vpop.f32.mrf.mxu0
        %v3716 = vadd.f32 0.0, %v3715
        %3717 = vmatmul.f32.gmra.mxu0 %v3493
        %v3718 = vpop.f32.mrf.mxu0
        %v3719 = vadd.f32 0.0, %v3718
        %3720 = vmatmul.f32.gmra.mxu0 %v3496
        %v3721 = vpop.f32.mrf.mxu0
        %v3722 = vadd.f32 0.0, %v3721
        %3723 = vmatmul.f32.gmra.mxu0 %v3499
        %v3724 = vpop.f32.mrf.mxu0
        %v3725 = vadd.f32 0.0, %v3724
        %3726 = vmatmul.f32.gmra.mxu0 %v3502
        %v3727 = vpop.f32.mrf.mxu0
        %v3728 = vadd.f32 0.0, %v3727
        %3729 = vmatmul.f32.gmra.mxu0 %v3505
        %v3730 = vpop.f32.mrf.mxu0
        %v3731 = vadd.f32 0.0, %v3730
        %3732 = vmatmul.f32.gmra.mxu0 %v3508
        %v3733 = vpop.f32.mrf.mxu0
        %v3734 = vadd.f32 0.0, %v3733
        %3735 = vmatmul.f32.gmra.mxu0 %v3511
        %v3736 = vpop.f32.mrf.mxu0
        %v3737 = vadd.f32 0.0, %v3736
        %3738 = vmatmul.f32.gmra.mxu0 %v3514
        %v3739 = vpop.f32.mrf.mxu0
        %v3740 = vadd.f32 0.0, %v3739
        %3741 = vmatmul.f32.gmra.mxu0 %v3517
        %v3742 = vpop.f32.mrf.mxu0
        %v3743 = vadd.f32 0.0, %v3742
        %3744 = vmatmul.f32.gmra.mxu0 %v3520
        %v3745 = vpop.f32.mrf.mxu0
        %v3746 = vadd.f32 0.0, %v3745
        %3747 = vmatmul.f32.gmra.mxu0 %v3523
        %v3748 = vpop.f32.mrf.mxu0
        %v3749 = vadd.f32 0.0, %v3748
        %3750 = vmatmul.f32.gmra.mxu0 %v3526
        %v3751 = vpop.f32.mrf.mxu0
        %v3752 = vadd.f32 0.0, %v3751
        %3753 = vmatmul.f32.gmra.mxu0 %v3529
        %v3754 = vpop.f32.mrf.mxu0
        %v3755 = vadd.f32 0.0, %v3754
        %3756 = vmatmul.f32.gmra.mxu0 %v3532
        %v3757 = vpop.f32.mrf.mxu0
        %v3758 = vadd.f32 0.0, %v3757
        %3759 = vmatmul.f32.gmra.mxu0 %v3535
        %v3760 = vpop.f32.mrf.mxu0
        %v3761 = vadd.f32 0.0, %v3760
        %3762 = vmatmul.f32.gmra.mxu0 %v3538
        %v3763 = vpop.f32.mrf.mxu0
        %v3764 = vadd.f32 0.0, %v3763
        %3765 = vmatmul.f32.gmra.mxu0 %v3541
        %v3766 = vpop.f32.mrf.mxu0
        %v3767 = vadd.f32 0.0, %v3766
        %3768 = vmatmul.f32.gmra.mxu0 %v3544
        %v3769 = vpop.f32.mrf.mxu0
        %v3770 = vadd.f32 0.0, %v3769
        %3771 = vmatmul.f32.gmra.mxu0 %v3547
        %v3772 = vpop.f32.mrf.mxu0
        %v3773 = vadd.f32 0.0, %v3772
        %3774 = vmatmul.f32.gmra.mxu0 %v3550
        %v3775 = vpop.f32.mrf.mxu0
        %v3776 = vadd.f32 0.0, %v3775
        %3777 = vmatmul.f32.gmra.mxu0 %v3553
        %v3778 = vpop.f32.mrf.mxu0
        %v3779 = vadd.f32 0.0, %v3778
        %3780 = vmatmul.f32.gmra.mxu0 %v3556
        %v3781 = vpop.f32.mrf.mxu0
        %v3782 = vadd.f32 0.0, %v3781
        %3783 = vmatmul.f32.gmra.mxu0 %v3559
        %v3784 = vpop.f32.mrf.mxu0
        %v3785 = vadd.f32 0.0, %v3784
        %3786 = vmatmul.f32.gmra.mxu0 %v3562
        %v3787 = vpop.f32.mrf.mxu0
        %v3788 = vadd.f32 0.0, %v3787
        %3789 = vmatmul.f32.gmra.mxu0 %v3565
        %v3790 = vpop.f32.mrf.mxu0
        %v3791 = vadd.f32 0.0, %v3790
        %3792 = vmatmul.f32.gmra.mxu0 %v3568
        %v3793 = vpop.f32.mrf.mxu0
        %v3794 = vadd.f32 0.0, %v3793
        %3795 = vmatmul.f32.gmra.mxu0 %v3571
        %v3796 = vpop.f32.mrf.mxu0
        %v3797 = vadd.f32 0.0, %v3796
        %3798 = vmatmul.f32.gmra.mxu0 %v3574
        %v3799 = vpop.f32.mrf.mxu0
        %v3800 = vadd.f32 0.0, %v3799
        %3801 = vmatmul.f32.gmra.mxu0 %v3577
        %v3802 = vpop.f32.mrf.mxu0
        %v3803 = vadd.f32 0.0, %v3802
        %3804 = vdwg.mxu0
        %v3805 = vadd.f32 %v3370, %v3597
        %v3806 = vadd.f32 %v3371, %v3710
        %v3807 = vadd.f32 %v3372, %v3600
        %v3808 = vadd.f32 %v3373, %v3713
        %v3809 = vadd.f32 %v3374, %v3603
        %v3810 = vadd.f32 %v3375, %v3716
        %v3811 = vadd.f32 %v3376, %v3606
        %v3812 = vadd.f32 %v3377, %v3719
        %v3813 = vadd.f32 %v3378, %v3609
        %v3814 = vadd.f32 %v3379, %v3722
        %v3815 = vadd.f32 %v3380, %v3612
        %v3816 = vadd.f32 %v3381, %v3725
        %v3817 = vadd.f32 %v3382, %v3615
        %v3818 = vadd.f32 %v3383, %v3728
        %v3819 = vadd.f32 %v3384, %v3618
        %v3820 = vadd.f32 %v3385, %v3731
        %v3821 = vadd.f32 %v3386, %v3621
        %v3822 = vadd.f32 %v3387, %v3734
        %v3823 = vadd.f32 %v3388, %v3624
        %v3824 = vadd.f32 %v3389, %v3737
        %v3825 = vadd.f32 %v3390, %v3627
        %v3826 = vadd.f32 %v3391, %v3740
        %v3827 = vadd.f32 %v3392, %v3630
        %v3828 = vadd.f32 %v3393, %v3743
        %v3829 = vadd.f32 %v3394, %v3633
        %v3830 = vadd.f32 %v3395, %v3746
        %v3831 = vadd.f32 %v3396, %v3636
        %v3832 = vadd.f32 %v3397, %v3749
        %v3833 = vadd.f32 %v3398, %v3639
        %v3834 = vadd.f32 %v3399, %v3752
        %v3835 = vadd.f32 %v3400, %v3642
        %v3836 = vadd.f32 %v3401, %v3755
        %v3837 = vadd.f32 %v3402, %v3645
        %v3838 = vadd.f32 %v3403, %v3758
        %v3839 = vadd.f32 %v3404, %v3648
        %v3840 = vadd.f32 %v3405, %v3761
        %v3841 = vadd.f32 %v3406, %v3651
        %v3842 = vadd.f32 %v3407, %v3764
        %v3843 = vadd.f32 %v3408, %v3654
        %v3844 = vadd.f32 %v3409, %v3767
        %v3845 = vadd.f32 %v3410, %v3657
        %v3846 = vadd.f32 %v3411, %v3770
        %v3847 = vadd.f32 %v3412, %v3660
        %v3848 = vadd.f32 %v3413, %v3773
        %v3849 = vadd.f32 %v3414, %v3663
        %v3850 = vadd.f32 %v3415, %v3776
        %v3851 = vadd.f32 %v3416, %v3666
        %v3852 = vadd.f32 %v3417, %v3779
        %v3853 = vadd.f32 %v3418, %v3669
        %v3854 = vadd.f32 %v3419, %v3782
        %v3855 = vadd.f32 %v3420, %v3672
        %v3856 = vadd.f32 %v3421, %v3785
        %v3857 = vadd.f32 %v3422, %v3675
        %v3858 = vadd.f32 %v3423, %v3788
        %v3859 = vadd.f32 %v3424, %v3678
        %v3860 = vadd.f32 %v3425, %v3791
        %v3861 = vadd.f32 %v3426, %v3681
        %v3862 = vadd.f32 %v3427, %v3794
        %v3863 = vadd.f32 %v3428, %v3684
        %v3864 = vadd.f32 %v3429, %v3797
        %v3865 = vadd.f32 %v3430, %v3687
        %v3866 = vadd.f32 %v3431, %v3800
        %v3867 = vadd.f32 %v3432, %v3690
        %v3868 = vadd.f32 %v3433, %v3803
        %v3869 = vld [vmem:[#allocation2 + $0x13] sm:$0xff]
        %v3870 = vld [vmem:[#allocation2 + $0x1b] sm:$0xff]
        %v3871 = vld [vmem:[#allocation2 + $0x23] sm:$0xff]
        %v3872 = vld [vmem:[#allocation2 + $0x2b] sm:$0xff]
        %v3873 = vld [vmem:[#allocation2 + $0x33] sm:$0xff]
        %v3874 = vld [vmem:[#allocation2 + $0x3b] sm:$0xff]
        %v3875 = vld [vmem:[#allocation2 + $0x43] sm:$0xff]
        %v3876 = vld [vmem:[#allocation2 + $0x4b] sm:$0xff]
        %v3877 = vld [vmem:[#allocation2 + $0x53] sm:$0xff]
        %v3878 = vld [vmem:[#allocation2 + $0x5b] sm:$0xff]
        %v3879 = vld [vmem:[#allocation2 + $0x63] sm:$0xff]
        %v3880 = vld [vmem:[#allocation2 + $0x6b] sm:$0xff]
        %v3881 = vld [vmem:[#allocation2 + $0x73] sm:$0xff]
        %v3882 = vld [vmem:[#allocation2 + $0x7b] sm:$0xff]
        %v3883 = vld [vmem:[#allocation2 + $0x83] sm:$0xff]
        %v3884 = vld [vmem:[#allocation2 + $0x8b] sm:$0xff]
        %v3885 = vld [vmem:[#allocation2 + $0x93] sm:$0xff]
        %v3886 = vld [vmem:[#allocation2 + $0x9b] sm:$0xff]
        %v3887 = vld [vmem:[#allocation2 + $0xa3] sm:$0xff]
        %v3888 = vld [vmem:[#allocation2 + $0xab] sm:$0xff]
        %v3889 = vld [vmem:[#allocation2 + $0xb3] sm:$0xff]
        %v3890 = vld [vmem:[#allocation2 + $0xbb] sm:$0xff]
        %v3891 = vld [vmem:[#allocation2 + $0xc3] sm:$0xff]
        %v3892 = vld [vmem:[#allocation2 + $0xcb] sm:$0xff]
        %v3893 = vld [vmem:[#allocation2 + $0xd3] sm:$0xff]
        %v3894 = vld [vmem:[#allocation2 + $0xdb] sm:$0xff]
        %v3895 = vld [vmem:[#allocation2 + $0xe3] sm:$0xff]
        %v3896 = vld [vmem:[#allocation2 + $0xeb] sm:$0xff]
        %v3897 = vld [vmem:[#allocation2 + $0xf3] sm:$0xff]
        %v3898 = vld [vmem:[#allocation2 + $0xfb] sm:$0xff]
        %v3899 = vld [vmem:[#allocation2 + $0x103] sm:$0xff]
        %v3900 = vld [vmem:[#allocation2 + $0x10b] sm:$0xff]
        %s3901 = scalar_lea.vmem %s424, 1024
        %v3902 = vld [vmem:[%s3901] sm:$0xff]
        %v3903 = vld [vmem:[%s3901 + $0x8] sm:$0xff]
        %v3904 = vld [vmem:[%s3901 + $0x10] sm:$0xff]
        %v3905 = vld [vmem:[%s3901 + $0x18] sm:$0xff]
        %v3906 = vld [vmem:[%s3901 + $0x20] sm:$0xff]
        %v3907 = vld [vmem:[%s3901 + $0x28] sm:$0xff]
        %v3908 = vld [vmem:[%s3901 + $0x30] sm:$0xff]
        %v3909 = vld [vmem:[%s3901 + $0x38] sm:$0xff]
        %v3910 = vld [vmem:[%s3901 + $0x40] sm:$0xff]
        %v3911 = vld [vmem:[%s3901 + $0x48] sm:$0xff]
        %v3912 = vld [vmem:[%s3901 + $0x50] sm:$0xff]
        %v3913 = vld [vmem:[%s3901 + $0x58] sm:$0xff]
        %v3914 = vld [vmem:[%s3901 + $0x60] sm:$0xff]
        %v3915 = vld [vmem:[%s3901 + $0x68] sm:$0xff]
        %v3916 = vld [vmem:[%s3901 + $0x70] sm:$0xff]
        %v3917 = vld [vmem:[%s3901 + $0x78] sm:$0xff]
        %v3919 = vsel %vm481, %v3869, 0
        %v3922 = vsel %vm481, %v3870, 0
        %v3925 = vsel %vm481, %v3871, 0
        %v3928 = vsel %vm481, %v3872, 0
        %v3931 = vsel %vm481, %v3873, 0
        %v3934 = vsel %vm481, %v3874, 0
        %v3937 = vsel %vm481, %v3875, 0
        %v3940 = vsel %vm481, %v3876, 0
        %v3943 = vsel %vm481, %v3877, 0
        %v3946 = vsel %vm481, %v3878, 0
        %v3949 = vsel %vm481, %v3879, 0
        %v3952 = vsel %vm481, %v3880, 0
        %v3955 = vsel %vm481, %v3881, 0
        %v3958 = vsel %vm481, %v3882, 0
        %v3961 = vsel %vm481, %v3883, 0
        %v3964 = vsel %vm481, %v3884, 0
        %v3967 = vsel %vm481, %v3885, 0
        %v3970 = vsel %vm481, %v3886, 0
        %v3973 = vsel %vm481, %v3887, 0
        %v3976 = vsel %vm481, %v3888, 0
        %v3979 = vsel %vm481, %v3889, 0
        %v3982 = vsel %vm481, %v3890, 0
        %v3985 = vsel %vm481, %v3891, 0
        %v3988 = vsel %vm481, %v3892, 0
        %v3991 = vsel %vm481, %v3893, 0
        %v3994 = vsel %vm481, %v3894, 0
        %v3997 = vsel %vm481, %v3895, 0
        %v4000 = vsel %vm481, %v3896, 0
        %v4003 = vsel %vm481, %v3897, 0
        %v4006 = vsel %vm481, %v3898, 0
        %v4009 = vsel %vm481, %v3899, 0
        %v4012 = vsel %vm481, %v3900, 0
        %4014 = vmatpush.msra.mxu0 0.0
        %4015 = vmatpush.msra.mxu0 0.0
        %4016 = vmatpush.msra.mxu0 0.0
        %4017 = vmatpush.msra.mxu0 0.0
        %4018 = vmatpush.msra.mxu0 0.0
        %4019 = vmatpush.msra.mxu0 0.0
        %4020 = vmatpush.msra.mxu0 0.0
        %4021 = vmatpush.msra.mxu0 0.0
        %4022 = vmatpush.msra.mxu0 %v3916
        %4023 = vmatpush.msra.mxu0 %v3914
        %4024 = vmatpush.msra.mxu0 %v3912
        %4025 = vmatpush.msra.mxu0 %v3910
        %4026 = vmatpush.msra.mxu0 %v3908
        %4027 = vmatpush.msra.mxu0 %v3906
        %4028 = vmatpush.msra.mxu0 %v3904
        %4029 = vmatpush.msra.mxu0 %v3902
        %4030 = vmatmul.f32.gmra.mxu0 %v3919
        %v4031 = vpop.f32.mrf.mxu0
        %v4032 = vadd.f32 0.0, %v4031
        %4033 = vmatmul.f32.gmra.mxu0 %v3922
        %v4034 = vpop.f32.mrf.mxu0
        %v4035 = vadd.f32 0.0, %v4034
        %4036 = vmatmul.f32.gmra.mxu0 %v3925
        %v4037 = vpop.f32.mrf.mxu0
        %v4038 = vadd.f32 0.0, %v4037
        %4039 = vmatmul.f32.gmra.mxu0 %v3928
        %v4040 = vpop.f32.mrf.mxu0
        %v4041 = vadd.f32 0.0, %v4040
        %4042 = vmatmul.f32.gmra.mxu0 %v3931
        %v4043 = vpop.f32.mrf.mxu0
        %v4044 = vadd.f32 0.0, %v4043
        %4045 = vmatmul.f32.gmra.mxu0 %v3934
        %v4046 = vpop.f32.mrf.mxu0
        %v4047 = vadd.f32 0.0, %v4046
        %4048 = vmatmul.f32.gmra.mxu0 %v3937
        %v4049 = vpop.f32.mrf.mxu0
        %v4050 = vadd.f32 0.0, %v4049
        %4051 = vmatmul.f32.gmra.mxu0 %v3940
        %v4052 = vpop.f32.mrf.mxu0
        %v4053 = vadd.f32 0.0, %v4052
        %4054 = vmatmul.f32.gmra.mxu0 %v3943
        %v4055 = vpop.f32.mrf.mxu0
        %v4056 = vadd.f32 0.0, %v4055
        %4057 = vmatmul.f32.gmra.mxu0 %v3946
        %v4058 = vpop.f32.mrf.mxu0
        %v4059 = vadd.f32 0.0, %v4058
        %4060 = vmatmul.f32.gmra.mxu0 %v3949
        %v4061 = vpop.f32.mrf.mxu0
        %v4062 = vadd.f32 0.0, %v4061
        %4063 = vmatmul.f32.gmra.mxu0 %v3952
        %v4064 = vpop.f32.mrf.mxu0
        %v4065 = vadd.f32 0.0, %v4064
        %4066 = vmatmul.f32.gmra.mxu0 %v3955
        %v4067 = vpop.f32.mrf.mxu0
        %v4068 = vadd.f32 0.0, %v4067
        %4069 = vmatmul.f32.gmra.mxu0 %v3958
        %v4070 = vpop.f32.mrf.mxu0
        %v4071 = vadd.f32 0.0, %v4070
        %4072 = vmatmul.f32.gmra.mxu0 %v3961
        %v4073 = vpop.f32.mrf.mxu0
        %v4074 = vadd.f32 0.0, %v4073
        %4075 = vmatmul.f32.gmra.mxu0 %v3964
        %v4076 = vpop.f32.mrf.mxu0
        %v4077 = vadd.f32 0.0, %v4076
        %4078 = vmatmul.f32.gmra.mxu0 %v3967
        %v4079 = vpop.f32.mrf.mxu0
        %v4080 = vadd.f32 0.0, %v4079
        %4081 = vmatmul.f32.gmra.mxu0 %v3970
        %v4082 = vpop.f32.mrf.mxu0
        %v4083 = vadd.f32 0.0, %v4082
        %4084 = vmatmul.f32.gmra.mxu0 %v3973
        %v4085 = vpop.f32.mrf.mxu0
        %v4086 = vadd.f32 0.0, %v4085
        %4087 = vmatmul.f32.gmra.mxu0 %v3976
        %v4088 = vpop.f32.mrf.mxu0
        %v4089 = vadd.f32 0.0, %v4088
        %4090 = vmatmul.f32.gmra.mxu0 %v3979
        %v4091 = vpop.f32.mrf.mxu0
        %v4092 = vadd.f32 0.0, %v4091
        %4093 = vmatmul.f32.gmra.mxu0 %v3982
        %v4094 = vpop.f32.mrf.mxu0
        %v4095 = vadd.f32 0.0, %v4094
        %4096 = vmatmul.f32.gmra.mxu0 %v3985
        %v4097 = vpop.f32.mrf.mxu0
        %v4098 = vadd.f32 0.0, %v4097
        %4099 = vmatmul.f32.gmra.mxu0 %v3988
        %v4100 = vpop.f32.mrf.mxu0
        %v4101 = vadd.f32 0.0, %v4100
        %4102 = vmatmul.f32.gmra.mxu0 %v3991
        %v4103 = vpop.f32.mrf.mxu0
        %v4104 = vadd.f32 0.0, %v4103
        %4105 = vmatmul.f32.gmra.mxu0 %v3994
        %v4106 = vpop.f32.mrf.mxu0
        %v4107 = vadd.f32 0.0, %v4106
        %4108 = vmatmul.f32.gmra.mxu0 %v3997
        %v4109 = vpop.f32.mrf.mxu0
        %v4110 = vadd.f32 0.0, %v4109
        %4111 = vmatmul.f32.gmra.mxu0 %v4000
        %v4112 = vpop.f32.mrf.mxu0
        %v4113 = vadd.f32 0.0, %v4112
        %4114 = vmatmul.f32.gmra.mxu0 %v4003
        %v4115 = vpop.f32.mrf.mxu0
        %v4116 = vadd.f32 0.0, %v4115
        %4117 = vmatmul.f32.gmra.mxu0 %v4006
        %v4118 = vpop.f32.mrf.mxu0
        %v4119 = vadd.f32 0.0, %v4118
        %4120 = vmatmul.f32.gmra.mxu0 %v4009
        %v4121 = vpop.f32.mrf.mxu0
        %v4122 = vadd.f32 0.0, %v4121
        %4123 = vmatmul.f32.gmra.mxu0 %v4012
        %v4124 = vpop.f32.mrf.mxu0
        %v4125 = vadd.f32 0.0, %v4124
        %4126 = vdwg.mxu0
        %4127 = vmatpush.msra.mxu0 0.0
        %4128 = vmatpush.msra.mxu0 0.0
        %4129 = vmatpush.msra.mxu0 0.0
        %4130 = vmatpush.msra.mxu0 0.0
        %4131 = vmatpush.msra.mxu0 0.0
        %4132 = vmatpush.msra.mxu0 0.0
        %4133 = vmatpush.msra.mxu0 0.0
        %4134 = vmatpush.msra.mxu0 0.0
        %4135 = vmatpush.msra.mxu0 %v3917
        %4136 = vmatpush.msra.mxu0 %v3915
        %4137 = vmatpush.msra.mxu0 %v3913
        %4138 = vmatpush.msra.mxu0 %v3911
        %4139 = vmatpush.msra.mxu0 %v3909
        %4140 = vmatpush.msra.mxu0 %v3907
        %4141 = vmatpush.msra.mxu0 %v3905
        %4142 = vmatpush.msra.mxu0 %v3903
        %4143 = vmatmul.f32.gmra.mxu0 %v3919
        %v4144 = vpop.f32.mrf.mxu0
        %v4145 = vadd.f32 0.0, %v4144
        %4146 = vmatmul.f32.gmra.mxu0 %v3922
        %v4147 = vpop.f32.mrf.mxu0
        %v4148 = vadd.f32 0.0, %v4147
        %4149 = vmatmul.f32.gmra.mxu0 %v3925
        %v4150 = vpop.f32.mrf.mxu0
        %v4151 = vadd.f32 0.0, %v4150
        %4152 = vmatmul.f32.gmra.mxu0 %v3928
        %v4153 = vpop.f32.mrf.mxu0
        %v4154 = vadd.f32 0.0, %v4153
        %4155 = vmatmul.f32.gmra.mxu0 %v3931
        %v4156 = vpop.f32.mrf.mxu0
        %v4157 = vadd.f32 0.0, %v4156
        %4158 = vmatmul.f32.gmra.mxu0 %v3934
        %v4159 = vpop.f32.mrf.mxu0
        %v4160 = vadd.f32 0.0, %v4159
        %4161 = vmatmul.f32.gmra.mxu0 %v3937
        %v4162 = vpop.f32.mrf.mxu0
        %v4163 = vadd.f32 0.0, %v4162
        %4164 = vmatmul.f32.gmra.mxu0 %v3940
        %v4165 = vpop.f32.mrf.mxu0
        %v4166 = vadd.f32 0.0, %v4165
        %4167 = vmatmul.f32.gmra.mxu0 %v3943
        %v4168 = vpop.f32.mrf.mxu0
        %v4169 = vadd.f32 0.0, %v4168
        %4170 = vmatmul.f32.gmra.mxu0 %v3946
        %v4171 = vpop.f32.mrf.mxu0
        %v4172 = vadd.f32 0.0, %v4171
        %4173 = vmatmul.f32.gmra.mxu0 %v3949
        %v4174 = vpop.f32.mrf.mxu0
        %v4175 = vadd.f32 0.0, %v4174
        %4176 = vmatmul.f32.gmra.mxu0 %v3952
        %v4177 = vpop.f32.mrf.mxu0
        %v4178 = vadd.f32 0.0, %v4177
        %4179 = vmatmul.f32.gmra.mxu0 %v3955
        %v4180 = vpop.f32.mrf.mxu0
        %v4181 = vadd.f32 0.0, %v4180
        %4182 = vmatmul.f32.gmra.mxu0 %v3958
        %v4183 = vpop.f32.mrf.mxu0
        %v4184 = vadd.f32 0.0, %v4183
        %4185 = vmatmul.f32.gmra.mxu0 %v3961
        %v4186 = vpop.f32.mrf.mxu0
        %v4187 = vadd.f32 0.0, %v4186
        %4188 = vmatmul.f32.gmra.mxu0 %v3964
        %v4189 = vpop.f32.mrf.mxu0
        %v4190 = vadd.f32 0.0, %v4189
        %4191 = vmatmul.f32.gmra.mxu0 %v3967
        %v4192 = vpop.f32.mrf.mxu0
        %v4193 = vadd.f32 0.0, %v4192
        %4194 = vmatmul.f32.gmra.mxu0 %v3970
        %v4195 = vpop.f32.mrf.mxu0
        %v4196 = vadd.f32 0.0, %v4195
        %4197 = vmatmul.f32.gmra.mxu0 %v3973
        %v4198 = vpop.f32.mrf.mxu0
        %v4199 = vadd.f32 0.0, %v4198
        %4200 = vmatmul.f32.gmra.mxu0 %v3976
        %v4201 = vpop.f32.mrf.mxu0
        %v4202 = vadd.f32 0.0, %v4201
        %4203 = vmatmul.f32.gmra.mxu0 %v3979
        %v4204 = vpop.f32.mrf.mxu0
        %v4205 = vadd.f32 0.0, %v4204
        %4206 = vmatmul.f32.gmra.mxu0 %v3982
        %v4207 = vpop.f32.mrf.mxu0
        %v4208 = vadd.f32 0.0, %v4207
        %4209 = vmatmul.f32.gmra.mxu0 %v3985
        %v4210 = vpop.f32.mrf.mxu0
        %v4211 = vadd.f32 0.0, %v4210
        %4212 = vmatmul.f32.gmra.mxu0 %v3988
        %v4213 = vpop.f32.mrf.mxu0
        %v4214 = vadd.f32 0.0, %v4213
        %4215 = vmatmul.f32.gmra.mxu0 %v3991
        %v4216 = vpop.f32.mrf.mxu0
        %v4217 = vadd.f32 0.0, %v4216
        %4218 = vmatmul.f32.gmra.mxu0 %v3994
        %v4219 = vpop.f32.mrf.mxu0
        %v4220 = vadd.f32 0.0, %v4219
        %4221 = vmatmul.f32.gmra.mxu0 %v3997
        %v4222 = vpop.f32.mrf.mxu0
        %v4223 = vadd.f32 0.0, %v4222
        %4224 = vmatmul.f32.gmra.mxu0 %v4000
        %v4225 = vpop.f32.mrf.mxu0
        %v4226 = vadd.f32 0.0, %v4225
        %4227 = vmatmul.f32.gmra.mxu0 %v4003
        %v4228 = vpop.f32.mrf.mxu0
        %v4229 = vadd.f32 0.0, %v4228
        %4230 = vmatmul.f32.gmra.mxu0 %v4006
        %v4231 = vpop.f32.mrf.mxu0
        %v4232 = vadd.f32 0.0, %v4231
        %4233 = vmatmul.f32.gmra.mxu0 %v4009
        %v4234 = vpop.f32.mrf.mxu0
        %v4235 = vadd.f32 0.0, %v4234
        %4236 = vmatmul.f32.gmra.mxu0 %v4012
        %v4237 = vpop.f32.mrf.mxu0
        %v4238 = vadd.f32 0.0, %v4237
        %4239 = vdwg.mxu0
        %v4240 = vadd.f32 %v3805, %v4032
        %v4241 = vadd.f32 %v3806, %v4145
        %v4242 = vadd.f32 %v3807, %v4035
        %v4243 = vadd.f32 %v3808, %v4148
        %v4244 = vadd.f32 %v3809, %v4038
        %v4245 = vadd.f32 %v3810, %v4151
        %v4246 = vadd.f32 %v3811, %v4041
        %v4247 = vadd.f32 %v3812, %v4154
        %v4248 = vadd.f32 %v3813, %v4044
        %v4249 = vadd.f32 %v3814, %v4157
        %v4250 = vadd.f32 %v3815, %v4047
        %v4251 = vadd.f32 %v3816, %v4160
        %v4252 = vadd.f32 %v3817, %v4050
        %v4253 = vadd.f32 %v3818, %v4163
        %v4254 = vadd.f32 %v3819, %v4053
        %v4255 = vadd.f32 %v3820, %v4166
        %v4256 = vadd.f32 %v3821, %v4056
        %v4257 = vadd.f32 %v3822, %v4169
        %v4258 = vadd.f32 %v3823, %v4059
        %v4259 = vadd.f32 %v3824, %v4172
        %v4260 = vadd.f32 %v3825, %v4062
        %v4261 = vadd.f32 %v3826, %v4175
        %v4262 = vadd.f32 %v3827, %v4065
        %v4263 = vadd.f32 %v3828, %v4178
        %v4264 = vadd.f32 %v3829, %v4068
        %v4265 = vadd.f32 %v3830, %v4181
        %v4266 = vadd.f32 %v3831, %v4071
        %v4267 = vadd.f32 %v3832, %v4184
        %v4268 = vadd.f32 %v3833, %v4074
        %v4269 = vadd.f32 %v3834, %v4187
        %v4270 = vadd.f32 %v3835, %v4077
        %v4271 = vadd.f32 %v3836, %v4190
        %v4272 = vadd.f32 %v3837, %v4080
        %v4273 = vadd.f32 %v3838, %v4193
        %v4274 = vadd.f32 %v3839, %v4083
        %v4275 = vadd.f32 %v3840, %v4196
        %v4276 = vadd.f32 %v3841, %v4086
        %v4277 = vadd.f32 %v3842, %v4199
        %v4278 = vadd.f32 %v3843, %v4089
        %v4279 = vadd.f32 %v3844, %v4202
        %v4280 = vadd.f32 %v3845, %v4092
        %v4281 = vadd.f32 %v3846, %v4205
        %v4282 = vadd.f32 %v3847, %v4095
        %v4283 = vadd.f32 %v3848, %v4208
        %v4284 = vadd.f32 %v3849, %v4098
        %v4285 = vadd.f32 %v3850, %v4211
        %v4286 = vadd.f32 %v3851, %v4101
        %v4287 = vadd.f32 %v3852, %v4214
        %v4288 = vadd.f32 %v3853, %v4104
        %v4289 = vadd.f32 %v3854, %v4217
        %v4290 = vadd.f32 %v3855, %v4107
        %v4291 = vadd.f32 %v3856, %v4220
        %v4292 = vadd.f32 %v3857, %v4110
        %v4293 = vadd.f32 %v3858, %v4223
        %v4294 = vadd.f32 %v3859, %v4113
        %v4295 = vadd.f32 %v3860, %v4226
        %v4296 = vadd.f32 %v3861, %v4116
        %v4297 = vadd.f32 %v3862, %v4229
        %v4298 = vadd.f32 %v3863, %v4119
        %v4299 = vadd.f32 %v3864, %v4232
        %v4300 = vadd.f32 %v3865, %v4122
        %v4301 = vadd.f32 %v3866, %v4235
        %v4302 = vadd.f32 %v3867, %v4125
        %v4303 = vadd.f32 %v3868, %v4238
        %v4304 = vld [vmem:[#allocation2 + $0x14] sm:$0xff]
        %v4305 = vld [vmem:[#allocation2 + $0x1c] sm:$0xff]
        %v4306 = vld [vmem:[#allocation2 + $0x24] sm:$0xff]
        %v4307 = vld [vmem:[#allocation2 + $0x2c] sm:$0xff]
        %v4308 = vld [vmem:[#allocation2 + $0x34] sm:$0xff]
        %v4309 = vld [vmem:[#allocation2 + $0x3c] sm:$0xff]
        %v4310 = vld [vmem:[#allocation2 + $0x44] sm:$0xff]
        %v4311 = vld [vmem:[#allocation2 + $0x4c] sm:$0xff]
        %v4312 = vld [vmem:[#allocation2 + $0x54] sm:$0xff]
        %v4313 = vld [vmem:[#allocation2 + $0x5c] sm:$0xff]
        %v4314 = vld [vmem:[#allocation2 + $0x64] sm:$0xff]
        %v4315 = vld [vmem:[#allocation2 + $0x6c] sm:$0xff]
        %v4316 = vld [vmem:[#allocation2 + $0x74] sm:$0xff]
        %v4317 = vld [vmem:[#allocation2 + $0x7c] sm:$0xff]
        %v4318 = vld [vmem:[#allocation2 + $0x84] sm:$0xff]
        %v4319 = vld [vmem:[#allocation2 + $0x8c] sm:$0xff]
        %v4320 = vld [vmem:[#allocation2 + $0x94] sm:$0xff]
        %v4321 = vld [vmem:[#allocation2 + $0x9c] sm:$0xff]
        %v4322 = vld [vmem:[#allocation2 + $0xa4] sm:$0xff]
        %v4323 = vld [vmem:[#allocation2 + $0xac] sm:$0xff]
        %v4324 = vld [vmem:[#allocation2 + $0xb4] sm:$0xff]
        %v4325 = vld [vmem:[#allocation2 + $0xbc] sm:$0xff]
        %v4326 = vld [vmem:[#allocation2 + $0xc4] sm:$0xff]
        %v4327 = vld [vmem:[#allocation2 + $0xcc] sm:$0xff]
        %v4328 = vld [vmem:[#allocation2 + $0xd4] sm:$0xff]
        %v4329 = vld [vmem:[#allocation2 + $0xdc] sm:$0xff]
        %v4330 = vld [vmem:[#allocation2 + $0xe4] sm:$0xff]
        %v4331 = vld [vmem:[#allocation2 + $0xec] sm:$0xff]
        %v4332 = vld [vmem:[#allocation2 + $0xf4] sm:$0xff]
        %v4333 = vld [vmem:[#allocation2 + $0xfc] sm:$0xff]
        %v4334 = vld [vmem:[#allocation2 + $0x104] sm:$0xff]
        %v4335 = vld [vmem:[#allocation2 + $0x10c] sm:$0xff]
        %s4336 = scalar_lea.vmem %s424, 1152
        %v4337 = vld [vmem:[%s4336] sm:$0xff]
        %v4338 = vld [vmem:[%s4336 + $0x8] sm:$0xff]
        %v4339 = vld [vmem:[%s4336 + $0x10] sm:$0xff]
        %v4340 = vld [vmem:[%s4336 + $0x18] sm:$0xff]
        %v4341 = vld [vmem:[%s4336 + $0x20] sm:$0xff]
        %v4342 = vld [vmem:[%s4336 + $0x28] sm:$0xff]
        %v4343 = vld [vmem:[%s4336 + $0x30] sm:$0xff]
        %v4344 = vld [vmem:[%s4336 + $0x38] sm:$0xff]
        %v4345 = vld [vmem:[%s4336 + $0x40] sm:$0xff]
        %v4346 = vld [vmem:[%s4336 + $0x48] sm:$0xff]
        %v4347 = vld [vmem:[%s4336 + $0x50] sm:$0xff]
        %v4348 = vld [vmem:[%s4336 + $0x58] sm:$0xff]
        %v4349 = vld [vmem:[%s4336 + $0x60] sm:$0xff]
        %v4350 = vld [vmem:[%s4336 + $0x68] sm:$0xff]
        %v4351 = vld [vmem:[%s4336 + $0x70] sm:$0xff]
        %v4352 = vld [vmem:[%s4336 + $0x78] sm:$0xff]
        %v4354 = vsel %vm481, %v4304, 0
        %v4357 = vsel %vm481, %v4305, 0
        %v4360 = vsel %vm481, %v4306, 0
        %v4363 = vsel %vm481, %v4307, 0
        %v4366 = vsel %vm481, %v4308, 0
        %v4369 = vsel %vm481, %v4309, 0
        %v4372 = vsel %vm481, %v4310, 0
        %v4375 = vsel %vm481, %v4311, 0
        %v4378 = vsel %vm481, %v4312, 0
        %v4381 = vsel %vm481, %v4313, 0
        %v4384 = vsel %vm481, %v4314, 0
        %v4387 = vsel %vm481, %v4315, 0
        %v4390 = vsel %vm481, %v4316, 0
        %v4393 = vsel %vm481, %v4317, 0
        %v4396 = vsel %vm481, %v4318, 0
        %v4399 = vsel %vm481, %v4319, 0
        %v4402 = vsel %vm481, %v4320, 0
        %v4405 = vsel %vm481, %v4321, 0
        %v4408 = vsel %vm481, %v4322, 0
        %v4411 = vsel %vm481, %v4323, 0
        %v4414 = vsel %vm481, %v4324, 0
        %v4417 = vsel %vm481, %v4325, 0
        %v4420 = vsel %vm481, %v4326, 0
        %v4423 = vsel %vm481, %v4327, 0
        %v4426 = vsel %vm481, %v4328, 0
        %v4429 = vsel %vm481, %v4329, 0
        %v4432 = vsel %vm481, %v4330, 0
        %v4435 = vsel %vm481, %v4331, 0
        %v4438 = vsel %vm481, %v4332, 0
        %v4441 = vsel %vm481, %v4333, 0
        %v4444 = vsel %vm481, %v4334, 0
        %v4447 = vsel %vm481, %v4335, 0
        %4449 = vmatpush.msra.mxu0 0.0
        %4450 = vmatpush.msra.mxu0 0.0
        %4451 = vmatpush.msra.mxu0 0.0
        %4452 = vmatpush.msra.mxu0 0.0
        %4453 = vmatpush.msra.mxu0 0.0
        %4454 = vmatpush.msra.mxu0 0.0
        %4455 = vmatpush.msra.mxu0 0.0
        %4456 = vmatpush.msra.mxu0 0.0
        %4457 = vmatpush.msra.mxu0 %v4351
        %4458 = vmatpush.msra.mxu0 %v4349
        %4459 = vmatpush.msra.mxu0 %v4347
        %4460 = vmatpush.msra.mxu0 %v4345
        %4461 = vmatpush.msra.mxu0 %v4343
        %4462 = vmatpush.msra.mxu0 %v4341
        %4463 = vmatpush.msra.mxu0 %v4339
        %4464 = vmatpush.msra.mxu0 %v4337
        %4465 = vmatmul.f32.gmra.mxu0 %v4354
        %v4466 = vpop.f32.mrf.mxu0
        %v4467 = vadd.f32 0.0, %v4466
        %4468 = vmatmul.f32.gmra.mxu0 %v4357
        %v4469 = vpop.f32.mrf.mxu0
        %v4470 = vadd.f32 0.0, %v4469
        %4471 = vmatmul.f32.gmra.mxu0 %v4360
        %v4472 = vpop.f32.mrf.mxu0
        %v4473 = vadd.f32 0.0, %v4472
        %4474 = vmatmul.f32.gmra.mxu0 %v4363
        %v4475 = vpop.f32.mrf.mxu0
        %v4476 = vadd.f32 0.0, %v4475
        %4477 = vmatmul.f32.gmra.mxu0 %v4366
        %v4478 = vpop.f32.mrf.mxu0
        %v4479 = vadd.f32 0.0, %v4478
        %4480 = vmatmul.f32.gmra.mxu0 %v4369
        %v4481 = vpop.f32.mrf.mxu0
        %v4482 = vadd.f32 0.0, %v4481
        %4483 = vmatmul.f32.gmra.mxu0 %v4372
        %v4484 = vpop.f32.mrf.mxu0
        %v4485 = vadd.f32 0.0, %v4484
        %4486 = vmatmul.f32.gmra.mxu0 %v4375
        %v4487 = vpop.f32.mrf.mxu0
        %v4488 = vadd.f32 0.0, %v4487
        %4489 = vmatmul.f32.gmra.mxu0 %v4378
        %v4490 = vpop.f32.mrf.mxu0
        %v4491 = vadd.f32 0.0, %v4490
        %4492 = vmatmul.f32.gmra.mxu0 %v4381
        %v4493 = vpop.f32.mrf.mxu0
        %v4494 = vadd.f32 0.0, %v4493
        %4495 = vmatmul.f32.gmra.mxu0 %v4384
        %v4496 = vpop.f32.mrf.mxu0
        %v4497 = vadd.f32 0.0, %v4496
        %4498 = vmatmul.f32.gmra.mxu0 %v4387
        %v4499 = vpop.f32.mrf.mxu0
        %v4500 = vadd.f32 0.0, %v4499
        %4501 = vmatmul.f32.gmra.mxu0 %v4390
        %v4502 = vpop.f32.mrf.mxu0
        %v4503 = vadd.f32 0.0, %v4502
        %4504 = vmatmul.f32.gmra.mxu0 %v4393
        %v4505 = vpop.f32.mrf.mxu0
        %v4506 = vadd.f32 0.0, %v4505
        %4507 = vmatmul.f32.gmra.mxu0 %v4396
        %v4508 = vpop.f32.mrf.mxu0
        %v4509 = vadd.f32 0.0, %v4508
        %4510 = vmatmul.f32.gmra.mxu0 %v4399
        %v4511 = vpop.f32.mrf.mxu0
        %v4512 = vadd.f32 0.0, %v4511
        %4513 = vmatmul.f32.gmra.mxu0 %v4402
        %v4514 = vpop.f32.mrf.mxu0
        %v4515 = vadd.f32 0.0, %v4514
        %4516 = vmatmul.f32.gmra.mxu0 %v4405
        %v4517 = vpop.f32.mrf.mxu0
        %v4518 = vadd.f32 0.0, %v4517
        %4519 = vmatmul.f32.gmra.mxu0 %v4408
        %v4520 = vpop.f32.mrf.mxu0
        %v4521 = vadd.f32 0.0, %v4520
        %4522 = vmatmul.f32.gmra.mxu0 %v4411
        %v4523 = vpop.f32.mrf.mxu0
        %v4524 = vadd.f32 0.0, %v4523
        %4525 = vmatmul.f32.gmra.mxu0 %v4414
        %v4526 = vpop.f32.mrf.mxu0
        %v4527 = vadd.f32 0.0, %v4526
        %4528 = vmatmul.f32.gmra.mxu0 %v4417
        %v4529 = vpop.f32.mrf.mxu0
        %v4530 = vadd.f32 0.0, %v4529
        %4531 = vmatmul.f32.gmra.mxu0 %v4420
        %v4532 = vpop.f32.mrf.mxu0
        %v4533 = vadd.f32 0.0, %v4532
        %4534 = vmatmul.f32.gmra.mxu0 %v4423
        %v4535 = vpop.f32.mrf.mxu0
        %v4536 = vadd.f32 0.0, %v4535
        %4537 = vmatmul.f32.gmra.mxu0 %v4426
        %v4538 = vpop.f32.mrf.mxu0
        %v4539 = vadd.f32 0.0, %v4538
        %4540 = vmatmul.f32.gmra.mxu0 %v4429
        %v4541 = vpop.f32.mrf.mxu0
        %v4542 = vadd.f32 0.0, %v4541
        %4543 = vmatmul.f32.gmra.mxu0 %v4432
        %v4544 = vpop.f32.mrf.mxu0
        %v4545 = vadd.f32 0.0, %v4544
        %4546 = vmatmul.f32.gmra.mxu0 %v4435
        %v4547 = vpop.f32.mrf.mxu0
        %v4548 = vadd.f32 0.0, %v4547
        %4549 = vmatmul.f32.gmra.mxu0 %v4438
        %v4550 = vpop.f32.mrf.mxu0
        %v4551 = vadd.f32 0.0, %v4550
        %4552 = vmatmul.f32.gmra.mxu0 %v4441
        %v4553 = vpop.f32.mrf.mxu0
        %v4554 = vadd.f32 0.0, %v4553
        %4555 = vmatmul.f32.gmra.mxu0 %v4444
        %v4556 = vpop.f32.mrf.mxu0
        %v4557 = vadd.f32 0.0, %v4556
        %4558 = vmatmul.f32.gmra.mxu0 %v4447
        %v4559 = vpop.f32.mrf.mxu0
        %v4560 = vadd.f32 0.0, %v4559
        %4561 = vdwg.mxu0
        %4562 = vmatpush.msra.mxu0 0.0
        %4563 = vmatpush.msra.mxu0 0.0
        %4564 = vmatpush.msra.mxu0 0.0
        %4565 = vmatpush.msra.mxu0 0.0
        %4566 = vmatpush.msra.mxu0 0.0
        %4567 = vmatpush.msra.mxu0 0.0
        %4568 = vmatpush.msra.mxu0 0.0
        %4569 = vmatpush.msra.mxu0 0.0
        %4570 = vmatpush.msra.mxu0 %v4352
        %4571 = vmatpush.msra.mxu0 %v4350
        %4572 = vmatpush.msra.mxu0 %v4348
        %4573 = vmatpush.msra.mxu0 %v4346
        %4574 = vmatpush.msra.mxu0 %v4344
        %4575 = vmatpush.msra.mxu0 %v4342
        %4576 = vmatpush.msra.mxu0 %v4340
        %4577 = vmatpush.msra.mxu0 %v4338
        %4578 = vmatmul.f32.gmra.mxu0 %v4354
        %v4579 = vpop.f32.mrf.mxu0
        %v4580 = vadd.f32 0.0, %v4579
        %4581 = vmatmul.f32.gmra.mxu0 %v4357
        %v4582 = vpop.f32.mrf.mxu0
        %v4583 = vadd.f32 0.0, %v4582
        %4584 = vmatmul.f32.gmra.mxu0 %v4360
        %v4585 = vpop.f32.mrf.mxu0
        %v4586 = vadd.f32 0.0, %v4585
        %4587 = vmatmul.f32.gmra.mxu0 %v4363
        %v4588 = vpop.f32.mrf.mxu0
        %v4589 = vadd.f32 0.0, %v4588
        %4590 = vmatmul.f32.gmra.mxu0 %v4366
        %v4591 = vpop.f32.mrf.mxu0
        %v4592 = vadd.f32 0.0, %v4591
        %4593 = vmatmul.f32.gmra.mxu0 %v4369
        %v4594 = vpop.f32.mrf.mxu0
        %v4595 = vadd.f32 0.0, %v4594
        %4596 = vmatmul.f32.gmra.mxu0 %v4372
        %v4597 = vpop.f32.mrf.mxu0
        %v4598 = vadd.f32 0.0, %v4597
        %4599 = vmatmul.f32.gmra.mxu0 %v4375
        %v4600 = vpop.f32.mrf.mxu0
        %v4601 = vadd.f32 0.0, %v4600
        %4602 = vmatmul.f32.gmra.mxu0 %v4378
        %v4603 = vpop.f32.mrf.mxu0
        %v4604 = vadd.f32 0.0, %v4603
        %4605 = vmatmul.f32.gmra.mxu0 %v4381
        %v4606 = vpop.f32.mrf.mxu0
        %v4607 = vadd.f32 0.0, %v4606
        %4608 = vmatmul.f32.gmra.mxu0 %v4384
        %v4609 = vpop.f32.mrf.mxu0
        %v4610 = vadd.f32 0.0, %v4609
        %4611 = vmatmul.f32.gmra.mxu0 %v4387
        %v4612 = vpop.f32.mrf.mxu0
        %v4613 = vadd.f32 0.0, %v4612
        %4614 = vmatmul.f32.gmra.mxu0 %v4390
        %v4615 = vpop.f32.mrf.mxu0
        %v4616 = vadd.f32 0.0, %v4615
        %4617 = vmatmul.f32.gmra.mxu0 %v4393
        %v4618 = vpop.f32.mrf.mxu0
        %v4619 = vadd.f32 0.0, %v4618
        %4620 = vmatmul.f32.gmra.mxu0 %v4396
        %v4621 = vpop.f32.mrf.mxu0
        %v4622 = vadd.f32 0.0, %v4621
        %4623 = vmatmul.f32.gmra.mxu0 %v4399
        %v4624 = vpop.f32.mrf.mxu0
        %v4625 = vadd.f32 0.0, %v4624
        %4626 = vmatmul.f32.gmra.mxu0 %v4402
        %v4627 = vpop.f32.mrf.mxu0
        %v4628 = vadd.f32 0.0, %v4627
        %4629 = vmatmul.f32.gmra.mxu0 %v4405
        %v4630 = vpop.f32.mrf.mxu0
        %v4631 = vadd.f32 0.0, %v4630
        %4632 = vmatmul.f32.gmra.mxu0 %v4408
        %v4633 = vpop.f32.mrf.mxu0
        %v4634 = vadd.f32 0.0, %v4633
        %4635 = vmatmul.f32.gmra.mxu0 %v4411
        %v4636 = vpop.f32.mrf.mxu0
        %v4637 = vadd.f32 0.0, %v4636
        %4638 = vmatmul.f32.gmra.mxu0 %v4414
        %v4639 = vpop.f32.mrf.mxu0
        %v4640 = vadd.f32 0.0, %v4639
        %4641 = vmatmul.f32.gmra.mxu0 %v4417
        %v4642 = vpop.f32.mrf.mxu0
        %v4643 = vadd.f32 0.0, %v4642
        %4644 = vmatmul.f32.gmra.mxu0 %v4420
        %v4645 = vpop.f32.mrf.mxu0
        %v4646 = vadd.f32 0.0, %v4645
        %4647 = vmatmul.f32.gmra.mxu0 %v4423
        %v4648 = vpop.f32.mrf.mxu0
        %v4649 = vadd.f32 0.0, %v4648
        %4650 = vmatmul.f32.gmra.mxu0 %v4426
        %v4651 = vpop.f32.mrf.mxu0
        %v4652 = vadd.f32 0.0, %v4651
        %4653 = vmatmul.f32.gmra.mxu0 %v4429
        %v4654 = vpop.f32.mrf.mxu0
        %v4655 = vadd.f32 0.0, %v4654
        %4656 = vmatmul.f32.gmra.mxu0 %v4432
        %v4657 = vpop.f32.mrf.mxu0
        %v4658 = vadd.f32 0.0, %v4657
        %4659 = vmatmul.f32.gmra.mxu0 %v4435
        %v4660 = vpop.f32.mrf.mxu0
        %v4661 = vadd.f32 0.0, %v4660
        %4662 = vmatmul.f32.gmra.mxu0 %v4438
        %v4663 = vpop.f32.mrf.mxu0
        %v4664 = vadd.f32 0.0, %v4663
        %4665 = vmatmul.f32.gmra.mxu0 %v4441
        %v4666 = vpop.f32.mrf.mxu0
        %v4667 = vadd.f32 0.0, %v4666
        %4668 = vmatmul.f32.gmra.mxu0 %v4444
        %v4669 = vpop.f32.mrf.mxu0
        %v4670 = vadd.f32 0.0, %v4669
        %4671 = vmatmul.f32.gmra.mxu0 %v4447
        %v4672 = vpop.f32.mrf.mxu0
        %v4673 = vadd.f32 0.0, %v4672
        %4674 = vdwg.mxu0
        %v4675 = vadd.f32 %v4240, %v4467
        %v4676 = vadd.f32 %v4241, %v4580
        %v4677 = vadd.f32 %v4242, %v4470
        %v4678 = vadd.f32 %v4243, %v4583
        %v4679 = vadd.f32 %v4244, %v4473
        %v4680 = vadd.f32 %v4245, %v4586
        %v4681 = vadd.f32 %v4246, %v4476
        %v4682 = vadd.f32 %v4247, %v4589
        %v4683 = vadd.f32 %v4248, %v4479
        %v4684 = vadd.f32 %v4249, %v4592
        %v4685 = vadd.f32 %v4250, %v4482
        %v4686 = vadd.f32 %v4251, %v4595
        %v4687 = vadd.f32 %v4252, %v4485
        %v4688 = vadd.f32 %v4253, %v4598
        %v4689 = vadd.f32 %v4254, %v4488
        %v4690 = vadd.f32 %v4255, %v4601
        %v4691 = vadd.f32 %v4256, %v4491
        %v4692 = vadd.f32 %v4257, %v4604
        %v4693 = vadd.f32 %v4258, %v4494
        %v4694 = vadd.f32 %v4259, %v4607
        %v4695 = vadd.f32 %v4260, %v4497
        %v4696 = vadd.f32 %v4261, %v4610
        %v4697 = vadd.f32 %v4262, %v4500
        %v4698 = vadd.f32 %v4263, %v4613
        %v4699 = vadd.f32 %v4264, %v4503
        %v4700 = vadd.f32 %v4265, %v4616
        %v4701 = vadd.f32 %v4266, %v4506
        %v4702 = vadd.f32 %v4267, %v4619
        %v4703 = vadd.f32 %v4268, %v4509
        %v4704 = vadd.f32 %v4269, %v4622
        %v4705 = vadd.f32 %v4270, %v4512
        %v4706 = vadd.f32 %v4271, %v4625
        %v4707 = vadd.f32 %v4272, %v4515
        %v4708 = vadd.f32 %v4273, %v4628
        %v4709 = vadd.f32 %v4274, %v4518
        %v4710 = vadd.f32 %v4275, %v4631
        %v4711 = vadd.f32 %v4276, %v4521
        %v4712 = vadd.f32 %v4277, %v4634
        %v4713 = vadd.f32 %v4278, %v4524
        %v4714 = vadd.f32 %v4279, %v4637
        %v4715 = vadd.f32 %v4280, %v4527
        %v4716 = vadd.f32 %v4281, %v4640
        %v4717 = vadd.f32 %v4282, %v4530
        %v4718 = vadd.f32 %v4283, %v4643
        %v4719 = vadd.f32 %v4284, %v4533
        %v4720 = vadd.f32 %v4285, %v4646
        %v4721 = vadd.f32 %v4286, %v4536
        %v4722 = vadd.f32 %v4287, %v4649
        %v4723 = vadd.f32 %v4288, %v4539
        %v4724 = vadd.f32 %v4289, %v4652
        %v4725 = vadd.f32 %v4290, %v4542
        %v4726 = vadd.f32 %v4291, %v4655
        %v4727 = vadd.f32 %v4292, %v4545
        %v4728 = vadd.f32 %v4293, %v4658
        %v4729 = vadd.f32 %v4294, %v4548
        %v4730 = vadd.f32 %v4295, %v4661
        %v4731 = vadd.f32 %v4296, %v4551
        %v4732 = vadd.f32 %v4297, %v4664
        %v4733 = vadd.f32 %v4298, %v4554
        %v4734 = vadd.f32 %v4299, %v4667
        %v4735 = vadd.f32 %v4300, %v4557
        %v4736 = vadd.f32 %v4301, %v4670
        %v4737 = vadd.f32 %v4302, %v4560
        %v4738 = vadd.f32 %v4303, %v4673
        %v4739 = vld [vmem:[#allocation2 + $0x15] sm:$0xff]
        %v4740 = vld [vmem:[#allocation2 + $0x1d] sm:$0xff]
        %v4741 = vld [vmem:[#allocation2 + $0x25] sm:$0xff]
        %v4742 = vld [vmem:[#allocation2 + $0x2d] sm:$0xff]
        %v4743 = vld [vmem:[#allocation2 + $0x35] sm:$0xff]
        %v4744 = vld [vmem:[#allocation2 + $0x3d] sm:$0xff]
        %v4745 = vld [vmem:[#allocation2 + $0x45] sm:$0xff]
        %v4746 = vld [vmem:[#allocation2 + $0x4d] sm:$0xff]
        %v4747 = vld [vmem:[#allocation2 + $0x55] sm:$0xff]
        %v4748 = vld [vmem:[#allocation2 + $0x5d] sm:$0xff]
        %v4749 = vld [vmem:[#allocation2 + $0x65] sm:$0xff]
        %v4750 = vld [vmem:[#allocation2 + $0x6d] sm:$0xff]
        %v4751 = vld [vmem:[#allocation2 + $0x75] sm:$0xff]
        %v4752 = vld [vmem:[#allocation2 + $0x7d] sm:$0xff]
        %v4753 = vld [vmem:[#allocation2 + $0x85] sm:$0xff]
        %v4754 = vld [vmem:[#allocation2 + $0x8d] sm:$0xff]
        %v4755 = vld [vmem:[#allocation2 + $0x95] sm:$0xff]
        %v4756 = vld [vmem:[#allocation2 + $0x9d] sm:$0xff]
        %v4757 = vld [vmem:[#allocation2 + $0xa5] sm:$0xff]
        %v4758 = vld [vmem:[#allocation2 + $0xad] sm:$0xff]
        %v4759 = vld [vmem:[#allocation2 + $0xb5] sm:$0xff]
        %v4760 = vld [vmem:[#allocation2 + $0xbd] sm:$0xff]
        %v4761 = vld [vmem:[#allocation2 + $0xc5] sm:$0xff]
        %v4762 = vld [vmem:[#allocation2 + $0xcd] sm:$0xff]
        %v4763 = vld [vmem:[#allocation2 + $0xd5] sm:$0xff]
        %v4764 = vld [vmem:[#allocation2 + $0xdd] sm:$0xff]
        %v4765 = vld [vmem:[#allocation2 + $0xe5] sm:$0xff]
        %v4766 = vld [vmem:[#allocation2 + $0xed] sm:$0xff]
        %v4767 = vld [vmem:[#allocation2 + $0xf5] sm:$0xff]
        %v4768 = vld [vmem:[#allocation2 + $0xfd] sm:$0xff]
        %v4769 = vld [vmem:[#allocation2 + $0x105] sm:$0xff]
        %v4770 = vld [vmem:[#allocation2 + $0x10d] sm:$0xff]
        %s4771 = scalar_lea.vmem %s424, 1280
        %v4772 = vld [vmem:[%s4771] sm:$0xff]
        %v4773 = vld [vmem:[%s4771 + $0x8] sm:$0xff]
        %v4774 = vld [vmem:[%s4771 + $0x10] sm:$0xff]
        %v4775 = vld [vmem:[%s4771 + $0x18] sm:$0xff]
        %v4776 = vld [vmem:[%s4771 + $0x20] sm:$0xff]
        %v4777 = vld [vmem:[%s4771 + $0x28] sm:$0xff]
        %v4778 = vld [vmem:[%s4771 + $0x30] sm:$0xff]
        %v4779 = vld [vmem:[%s4771 + $0x38] sm:$0xff]
        %v4780 = vld [vmem:[%s4771 + $0x40] sm:$0xff]
        %v4781 = vld [vmem:[%s4771 + $0x48] sm:$0xff]
        %v4782 = vld [vmem:[%s4771 + $0x50] sm:$0xff]
        %v4783 = vld [vmem:[%s4771 + $0x58] sm:$0xff]
        %v4784 = vld [vmem:[%s4771 + $0x60] sm:$0xff]
        %v4785 = vld [vmem:[%s4771 + $0x68] sm:$0xff]
        %v4786 = vld [vmem:[%s4771 + $0x70] sm:$0xff]
        %v4787 = vld [vmem:[%s4771 + $0x78] sm:$0xff]
        %v4789 = vsel %vm481, %v4739, 0
        %v4792 = vsel %vm481, %v4740, 0
        %v4795 = vsel %vm481, %v4741, 0
        %v4798 = vsel %vm481, %v4742, 0
        %v4801 = vsel %vm481, %v4743, 0
        %v4804 = vsel %vm481, %v4744, 0
        %v4807 = vsel %vm481, %v4745, 0
        %v4810 = vsel %vm481, %v4746, 0
        %v4813 = vsel %vm481, %v4747, 0
        %v4816 = vsel %vm481, %v4748, 0
        %v4819 = vsel %vm481, %v4749, 0
        %v4822 = vsel %vm481, %v4750, 0
        %v4825 = vsel %vm481, %v4751, 0
        %v4828 = vsel %vm481, %v4752, 0
        %v4831 = vsel %vm481, %v4753, 0
        %v4834 = vsel %vm481, %v4754, 0
        %v4837 = vsel %vm481, %v4755, 0
        %v4840 = vsel %vm481, %v4756, 0
        %v4843 = vsel %vm481, %v4757, 0
        %v4846 = vsel %vm481, %v4758, 0
        %v4849 = vsel %vm481, %v4759, 0
        %v4852 = vsel %vm481, %v4760, 0
        %v4855 = vsel %vm481, %v4761, 0
        %v4858 = vsel %vm481, %v4762, 0
        %v4861 = vsel %vm481, %v4763, 0
        %v4864 = vsel %vm481, %v4764, 0
        %v4867 = vsel %vm481, %v4765, 0
        %v4870 = vsel %vm481, %v4766, 0
        %v4873 = vsel %vm481, %v4767, 0
        %v4876 = vsel %vm481, %v4768, 0
        %v4879 = vsel %vm481, %v4769, 0
        %v4882 = vsel %vm481, %v4770, 0
        %4884 = vmatpush.msra.mxu0 0.0
        %4885 = vmatpush.msra.mxu0 0.0
        %4886 = vmatpush.msra.mxu0 0.0
        %4887 = vmatpush.msra.mxu0 0.0
        %4888 = vmatpush.msra.mxu0 0.0
        %4889 = vmatpush.msra.mxu0 0.0
        %4890 = vmatpush.msra.mxu0 0.0
        %4891 = vmatpush.msra.mxu0 0.0
        %4892 = vmatpush.msra.mxu0 %v4786
        %4893 = vmatpush.msra.mxu0 %v4784
        %4894 = vmatpush.msra.mxu0 %v4782
        %4895 = vmatpush.msra.mxu0 %v4780
        %4896 = vmatpush.msra.mxu0 %v4778
        %4897 = vmatpush.msra.mxu0 %v4776
        %4898 = vmatpush.msra.mxu0 %v4774
        %4899 = vmatpush.msra.mxu0 %v4772
        %4900 = vmatmul.f32.gmra.mxu0 %v4789
        %v4901 = vpop.f32.mrf.mxu0
        %v4902 = vadd.f32 0.0, %v4901
        %4903 = vmatmul.f32.gmra.mxu0 %v4792
        %v4904 = vpop.f32.mrf.mxu0
        %v4905 = vadd.f32 0.0, %v4904
        %4906 = vmatmul.f32.gmra.mxu0 %v4795
        %v4907 = vpop.f32.mrf.mxu0
        %v4908 = vadd.f32 0.0, %v4907
        %4909 = vmatmul.f32.gmra.mxu0 %v4798
        %v4910 = vpop.f32.mrf.mxu0
        %v4911 = vadd.f32 0.0, %v4910
        %4912 = vmatmul.f32.gmra.mxu0 %v4801
        %v4913 = vpop.f32.mrf.mxu0
        %v4914 = vadd.f32 0.0, %v4913
        %4915 = vmatmul.f32.gmra.mxu0 %v4804
        %v4916 = vpop.f32.mrf.mxu0
        %v4917 = vadd.f32 0.0, %v4916
        %4918 = vmatmul.f32.gmra.mxu0 %v4807
        %v4919 = vpop.f32.mrf.mxu0
        %v4920 = vadd.f32 0.0, %v4919
        %4921 = vmatmul.f32.gmra.mxu0 %v4810
        %v4922 = vpop.f32.mrf.mxu0
        %v4923 = vadd.f32 0.0, %v4922
        %4924 = vmatmul.f32.gmra.mxu0 %v4813
        %v4925 = vpop.f32.mrf.mxu0
        %v4926 = vadd.f32 0.0, %v4925
        %4927 = vmatmul.f32.gmra.mxu0 %v4816
        %v4928 = vpop.f32.mrf.mxu0
        %v4929 = vadd.f32 0.0, %v4928
        %4930 = vmatmul.f32.gmra.mxu0 %v4819
        %v4931 = vpop.f32.mrf.mxu0
        %v4932 = vadd.f32 0.0, %v4931
        %4933 = vmatmul.f32.gmra.mxu0 %v4822
        %v4934 = vpop.f32.mrf.mxu0
        %v4935 = vadd.f32 0.0, %v4934
        %4936 = vmatmul.f32.gmra.mxu0 %v4825
        %v4937 = vpop.f32.mrf.mxu0
        %v4938 = vadd.f32 0.0, %v4937
        %4939 = vmatmul.f32.gmra.mxu0 %v4828
        %v4940 = vpop.f32.mrf.mxu0
        %v4941 = vadd.f32 0.0, %v4940
        %4942 = vmatmul.f32.gmra.mxu0 %v4831
        %v4943 = vpop.f32.mrf.mxu0
        %v4944 = vadd.f32 0.0, %v4943
        %4945 = vmatmul.f32.gmra.mxu0 %v4834
        %v4946 = vpop.f32.mrf.mxu0
        %v4947 = vadd.f32 0.0, %v4946
        %4948 = vmatmul.f32.gmra.mxu0 %v4837
        %v4949 = vpop.f32.mrf.mxu0
        %v4950 = vadd.f32 0.0, %v4949
        %4951 = vmatmul.f32.gmra.mxu0 %v4840
        %v4952 = vpop.f32.mrf.mxu0
        %v4953 = vadd.f32 0.0, %v4952
        %4954 = vmatmul.f32.gmra.mxu0 %v4843
        %v4955 = vpop.f32.mrf.mxu0
        %v4956 = vadd.f32 0.0, %v4955
        %4957 = vmatmul.f32.gmra.mxu0 %v4846
        %v4958 = vpop.f32.mrf.mxu0
        %v4959 = vadd.f32 0.0, %v4958
        %4960 = vmatmul.f32.gmra.mxu0 %v4849
        %v4961 = vpop.f32.mrf.mxu0
        %v4962 = vadd.f32 0.0, %v4961
        %4963 = vmatmul.f32.gmra.mxu0 %v4852
        %v4964 = vpop.f32.mrf.mxu0
        %v4965 = vadd.f32 0.0, %v4964
        %4966 = vmatmul.f32.gmra.mxu0 %v4855
        %v4967 = vpop.f32.mrf.mxu0
        %v4968 = vadd.f32 0.0, %v4967
        %4969 = vmatmul.f32.gmra.mxu0 %v4858
        %v4970 = vpop.f32.mrf.mxu0
        %v4971 = vadd.f32 0.0, %v4970
        %4972 = vmatmul.f32.gmra.mxu0 %v4861
        %v4973 = vpop.f32.mrf.mxu0
        %v4974 = vadd.f32 0.0, %v4973
        %4975 = vmatmul.f32.gmra.mxu0 %v4864
        %v4976 = vpop.f32.mrf.mxu0
        %v4977 = vadd.f32 0.0, %v4976
        %4978 = vmatmul.f32.gmra.mxu0 %v4867
        %v4979 = vpop.f32.mrf.mxu0
        %v4980 = vadd.f32 0.0, %v4979
        %4981 = vmatmul.f32.gmra.mxu0 %v4870
        %v4982 = vpop.f32.mrf.mxu0
        %v4983 = vadd.f32 0.0, %v4982
        %4984 = vmatmul.f32.gmra.mxu0 %v4873
        %v4985 = vpop.f32.mrf.mxu0
        %v4986 = vadd.f32 0.0, %v4985
        %4987 = vmatmul.f32.gmra.mxu0 %v4876
        %v4988 = vpop.f32.mrf.mxu0
        %v4989 = vadd.f32 0.0, %v4988
        %4990 = vmatmul.f32.gmra.mxu0 %v4879
        %v4991 = vpop.f32.mrf.mxu0
        %v4992 = vadd.f32 0.0, %v4991
        %4993 = vmatmul.f32.gmra.mxu0 %v4882
        %v4994 = vpop.f32.mrf.mxu0
        %v4995 = vadd.f32 0.0, %v4994
        %4996 = vdwg.mxu0
        %4997 = vmatpush.msra.mxu0 0.0
        %4998 = vmatpush.msra.mxu0 0.0
        %4999 = vmatpush.msra.mxu0 0.0
        %5000 = vmatpush.msra.mxu0 0.0
        %5001 = vmatpush.msra.mxu0 0.0
        %5002 = vmatpush.msra.mxu0 0.0
        %5003 = vmatpush.msra.mxu0 0.0
        %5004 = vmatpush.msra.mxu0 0.0
        %5005 = vmatpush.msra.mxu0 %v4787
        %5006 = vmatpush.msra.mxu0 %v4785
        %5007 = vmatpush.msra.mxu0 %v4783
        %5008 = vmatpush.msra.mxu0 %v4781
        %5009 = vmatpush.msra.mxu0 %v4779
        %5010 = vmatpush.msra.mxu0 %v4777
        %5011 = vmatpush.msra.mxu0 %v4775
        %5012 = vmatpush.msra.mxu0 %v4773
        %5013 = vmatmul.f32.gmra.mxu0 %v4789
        %v5014 = vpop.f32.mrf.mxu0
        %v5015 = vadd.f32 0.0, %v5014
        %5016 = vmatmul.f32.gmra.mxu0 %v4792
        %v5017 = vpop.f32.mrf.mxu0
        %v5018 = vadd.f32 0.0, %v5017
        %5019 = vmatmul.f32.gmra.mxu0 %v4795
        %v5020 = vpop.f32.mrf.mxu0
        %v5021 = vadd.f32 0.0, %v5020
        %5022 = vmatmul.f32.gmra.mxu0 %v4798
        %v5023 = vpop.f32.mrf.mxu0
        %v5024 = vadd.f32 0.0, %v5023
        %5025 = vmatmul.f32.gmra.mxu0 %v4801
        %v5026 = vpop.f32.mrf.mxu0
        %v5027 = vadd.f32 0.0, %v5026
        %5028 = vmatmul.f32.gmra.mxu0 %v4804
        %v5029 = vpop.f32.mrf.mxu0
        %v5030 = vadd.f32 0.0, %v5029
        %5031 = vmatmul.f32.gmra.mxu0 %v4807
        %v5032 = vpop.f32.mrf.mxu0
        %v5033 = vadd.f32 0.0, %v5032
        %5034 = vmatmul.f32.gmra.mxu0 %v4810
        %v5035 = vpop.f32.mrf.mxu0
        %v5036 = vadd.f32 0.0, %v5035
        %5037 = vmatmul.f32.gmra.mxu0 %v4813
        %v5038 = vpop.f32.mrf.mxu0
        %v5039 = vadd.f32 0.0, %v5038
        %5040 = vmatmul.f32.gmra.mxu0 %v4816
        %v5041 = vpop.f32.mrf.mxu0
        %v5042 = vadd.f32 0.0, %v5041
        %5043 = vmatmul.f32.gmra.mxu0 %v4819
        %v5044 = vpop.f32.mrf.mxu0
        %v5045 = vadd.f32 0.0, %v5044
        %5046 = vmatmul.f32.gmra.mxu0 %v4822
        %v5047 = vpop.f32.mrf.mxu0
        %v5048 = vadd.f32 0.0, %v5047
        %5049 = vmatmul.f32.gmra.mxu0 %v4825
        %v5050 = vpop.f32.mrf.mxu0
        %v5051 = vadd.f32 0.0, %v5050
        %5052 = vmatmul.f32.gmra.mxu0 %v4828
        %v5053 = vpop.f32.mrf.mxu0
        %v5054 = vadd.f32 0.0, %v5053
        %5055 = vmatmul.f32.gmra.mxu0 %v4831
        %v5056 = vpop.f32.mrf.mxu0
        %v5057 = vadd.f32 0.0, %v5056
        %5058 = vmatmul.f32.gmra.mxu0 %v4834
        %v5059 = vpop.f32.mrf.mxu0
        %v5060 = vadd.f32 0.0, %v5059
        %5061 = vmatmul.f32.gmra.mxu0 %v4837
        %v5062 = vpop.f32.mrf.mxu0
        %v5063 = vadd.f32 0.0, %v5062
        %5064 = vmatmul.f32.gmra.mxu0 %v4840
        %v5065 = vpop.f32.mrf.mxu0
        %v5066 = vadd.f32 0.0, %v5065
        %5067 = vmatmul.f32.gmra.mxu0 %v4843
        %v5068 = vpop.f32.mrf.mxu0
        %v5069 = vadd.f32 0.0, %v5068
        %5070 = vmatmul.f32.gmra.mxu0 %v4846
        %v5071 = vpop.f32.mrf.mxu0
        %v5072 = vadd.f32 0.0, %v5071
        %5073 = vmatmul.f32.gmra.mxu0 %v4849
        %v5074 = vpop.f32.mrf.mxu0
        %v5075 = vadd.f32 0.0, %v5074
        %5076 = vmatmul.f32.gmra.mxu0 %v4852
        %v5077 = vpop.f32.mrf.mxu0
        %v5078 = vadd.f32 0.0, %v5077
        %5079 = vmatmul.f32.gmra.mxu0 %v4855
        %v5080 = vpop.f32.mrf.mxu0
        %v5081 = vadd.f32 0.0, %v5080
        %5082 = vmatmul.f32.gmra.mxu0 %v4858
        %v5083 = vpop.f32.mrf.mxu0
        %v5084 = vadd.f32 0.0, %v5083
        %5085 = vmatmul.f32.gmra.mxu0 %v4861
        %v5086 = vpop.f32.mrf.mxu0
        %v5087 = vadd.f32 0.0, %v5086
        %5088 = vmatmul.f32.gmra.mxu0 %v4864
        %v5089 = vpop.f32.mrf.mxu0
        %v5090 = vadd.f32 0.0, %v5089
        %5091 = vmatmul.f32.gmra.mxu0 %v4867
        %v5092 = vpop.f32.mrf.mxu0
        %v5093 = vadd.f32 0.0, %v5092
        %5094 = vmatmul.f32.gmra.mxu0 %v4870
        %v5095 = vpop.f32.mrf.mxu0
        %v5096 = vadd.f32 0.0, %v5095
        %5097 = vmatmul.f32.gmra.mxu0 %v4873
        %v5098 = vpop.f32.mrf.mxu0
        %v5099 = vadd.f32 0.0, %v5098
        %5100 = vmatmul.f32.gmra.mxu0 %v4876
        %v5101 = vpop.f32.mrf.mxu0
        %v5102 = vadd.f32 0.0, %v5101
        %5103 = vmatmul.f32.gmra.mxu0 %v4879
        %v5104 = vpop.f32.mrf.mxu0
        %v5105 = vadd.f32 0.0, %v5104
        %5106 = vmatmul.f32.gmra.mxu0 %v4882
        %v5107 = vpop.f32.mrf.mxu0
        %v5108 = vadd.f32 0.0, %v5107
        %5109 = vdwg.mxu0
        %v5110 = vadd.f32 %v4675, %v4902
        %v5111 = vadd.f32 %v4676, %v5015
        %v5112 = vadd.f32 %v4677, %v4905
        %v5113 = vadd.f32 %v4678, %v5018
        %v5114 = vadd.f32 %v4679, %v4908
        %v5115 = vadd.f32 %v4680, %v5021
        %v5116 = vadd.f32 %v4681, %v4911
        %v5117 = vadd.f32 %v4682, %v5024
        %v5118 = vadd.f32 %v4683, %v4914
        %v5119 = vadd.f32 %v4684, %v5027
        %v5120 = vadd.f32 %v4685, %v4917
        %v5121 = vadd.f32 %v4686, %v5030
        %v5122 = vadd.f32 %v4687, %v4920
        %v5123 = vadd.f32 %v4688, %v5033
        %v5124 = vadd.f32 %v4689, %v4923
        %v5125 = vadd.f32 %v4690, %v5036
        %v5126 = vadd.f32 %v4691, %v4926
        %v5127 = vadd.f32 %v4692, %v5039
        %v5128 = vadd.f32 %v4693, %v4929
        %v5129 = vadd.f32 %v4694, %v5042
        %v5130 = vadd.f32 %v4695, %v4932
        %v5131 = vadd.f32 %v4696, %v5045
        %v5132 = vadd.f32 %v4697, %v4935
        %v5133 = vadd.f32 %v4698, %v5048
        %v5134 = vadd.f32 %v4699, %v4938
        %v5135 = vadd.f32 %v4700, %v5051
        %v5136 = vadd.f32 %v4701, %v4941
        %v5137 = vadd.f32 %v4702, %v5054
        %v5138 = vadd.f32 %v4703, %v4944
        %v5139 = vadd.f32 %v4704, %v5057
        %v5140 = vadd.f32 %v4705, %v4947
        %v5141 = vadd.f32 %v4706, %v5060
        %v5142 = vadd.f32 %v4707, %v4950
        %v5143 = vadd.f32 %v4708, %v5063
        %v5144 = vadd.f32 %v4709, %v4953
        %v5145 = vadd.f32 %v4710, %v5066
        %v5146 = vadd.f32 %v4711, %v4956
        %v5147 = vadd.f32 %v4712, %v5069
        %v5148 = vadd.f32 %v4713, %v4959
        %v5149 = vadd.f32 %v4714, %v5072
        %v5150 = vadd.f32 %v4715, %v4962
        %v5151 = vadd.f32 %v4716, %v5075
        %v5152 = vadd.f32 %v4717, %v4965
        %v5153 = vadd.f32 %v4718, %v5078
        %v5154 = vadd.f32 %v4719, %v4968
        %v5155 = vadd.f32 %v4720, %v5081
        %v5156 = vadd.f32 %v4721, %v4971
        %v5157 = vadd.f32 %v4722, %v5084
        %v5158 = vadd.f32 %v4723, %v4974
        %v5159 = vadd.f32 %v4724, %v5087
        %v5160 = vadd.f32 %v4725, %v4977
        %v5161 = vadd.f32 %v4726, %v5090
        %v5162 = vadd.f32 %v4727, %v4980
        %v5163 = vadd.f32 %v4728, %v5093
        %v5164 = vadd.f32 %v4729, %v4983
        %v5165 = vadd.f32 %v4730, %v5096
        %v5166 = vadd.f32 %v4731, %v4986
        %v5167 = vadd.f32 %v4732, %v5099
        %v5168 = vadd.f32 %v4733, %v4989
        %v5169 = vadd.f32 %v4734, %v5102
        %v5170 = vadd.f32 %v4735, %v4992
        %v5171 = vadd.f32 %v4736, %v5105
        %v5172 = vadd.f32 %v4737, %v4995
        %v5173 = vadd.f32 %v4738, %v5108
        %v5174 = vld [vmem:[%s429] sm:$0x3]
        %v5176 = vperm.slane %v5174, 0
        %v5177 = vperm.slane %v5174, 1
        %v5180 = vadd.f32 %v5110, %v5176
        %v5181 = vadd.f32 %v5111, %v5177
        %v5182 = vadd.f32 %v5112, %v5176
        %v5183 = vadd.f32 %v5113, %v5177
        %v5184 = vadd.f32 %v5114, %v5176
        %v5185 = vadd.f32 %v5115, %v5177
        %v5186 = vadd.f32 %v5116, %v5176
        %v5187 = vadd.f32 %v5117, %v5177
        %v5188 = vadd.f32 %v5118, %v5176
        %v5189 = vadd.f32 %v5119, %v5177
        %v5190 = vadd.f32 %v5120, %v5176
        %v5191 = vadd.f32 %v5121, %v5177
        %v5192 = vadd.f32 %v5122, %v5176
        %v5193 = vadd.f32 %v5123, %v5177
        %v5194 = vadd.f32 %v5124, %v5176
        %v5195 = vadd.f32 %v5125, %v5177
        %v5196 = vadd.f32 %v5126, %v5176
        %v5197 = vadd.f32 %v5127, %v5177
        %v5198 = vadd.f32 %v5128, %v5176
        %v5199 = vadd.f32 %v5129, %v5177
        %v5200 = vadd.f32 %v5130, %v5176
        %v5201 = vadd.f32 %v5131, %v5177
        %v5202 = vadd.f32 %v5132, %v5176
        %v5203 = vadd.f32 %v5133, %v5177
        %v5204 = vadd.f32 %v5134, %v5176
        %v5205 = vadd.f32 %v5135, %v5177
        %v5206 = vadd.f32 %v5136, %v5176
        %v5207 = vadd.f32 %v5137, %v5177
        %v5208 = vadd.f32 %v5138, %v5176
        %v5209 = vadd.f32 %v5139, %v5177
        %v5210 = vadd.f32 %v5140, %v5176
        %v5211 = vadd.f32 %v5141, %v5177
        %v5212 = vadd.f32 %v5142, %v5176
        %v5213 = vadd.f32 %v5143, %v5177
        %v5214 = vadd.f32 %v5144, %v5176
        %v5215 = vadd.f32 %v5145, %v5177
        %v5216 = vadd.f32 %v5146, %v5176
        %v5217 = vadd.f32 %v5147, %v5177
        %v5218 = vadd.f32 %v5148, %v5176
        %v5219 = vadd.f32 %v5149, %v5177
        %v5220 = vadd.f32 %v5150, %v5176
        %v5221 = vadd.f32 %v5151, %v5177
        %v5222 = vadd.f32 %v5152, %v5176
        %v5223 = vadd.f32 %v5153, %v5177
        %v5224 = vadd.f32 %v5154, %v5176
        %v5225 = vadd.f32 %v5155, %v5177
        %v5226 = vadd.f32 %v5156, %v5176
        %v5227 = vadd.f32 %v5157, %v5177
        %v5228 = vadd.f32 %v5158, %v5176
        %v5229 = vadd.f32 %v5159, %v5177
        %v5230 = vadd.f32 %v5160, %v5176
        %v5231 = vadd.f32 %v5161, %v5177
        %v5232 = vadd.f32 %v5162, %v5176
        %v5233 = vadd.f32 %v5163, %v5177
        %v5234 = vadd.f32 %v5164, %v5176
        %v5235 = vadd.f32 %v5165, %v5177
        %v5236 = vadd.f32 %v5166, %v5176
        %v5237 = vadd.f32 %v5167, %v5177
        %v5238 = vadd.f32 %v5168, %v5176
        %v5239 = vadd.f32 %v5169, %v5177
        %v5240 = vadd.f32 %v5170, %v5176
        %v5241 = vadd.f32 %v5171, %v5177
        %v5242 = vadd.f32 %v5172, %v5176
        %v5243 = vadd.f32 %v5173, %v5177
        %v5244 = vmax.f32 %v5180, 0.0
        %v5245 = vmax.f32 %v5181, 0.0
        %v5246 = vmax.f32 %v5182, 0.0
        %v5247 = vmax.f32 %v5183, 0.0
        %v5248 = vmax.f32 %v5184, 0.0
        %v5249 = vmax.f32 %v5185, 0.0
        %v5250 = vmax.f32 %v5186, 0.0
        %v5251 = vmax.f32 %v5187, 0.0
        %v5252 = vmax.f32 %v5188, 0.0
        %v5253 = vmax.f32 %v5189, 0.0
        %v5254 = vmax.f32 %v5190, 0.0
        %v5255 = vmax.f32 %v5191, 0.0
        %v5256 = vmax.f32 %v5192, 0.0
        %v5257 = vmax.f32 %v5193, 0.0
        %v5258 = vmax.f32 %v5194, 0.0
        %v5259 = vmax.f32 %v5195, 0.0
        %v5260 = vmax.f32 %v5196, 0.0
        %v5261 = vmax.f32 %v5197, 0.0
        %v5262 = vmax.f32 %v5198, 0.0
        %v5263 = vmax.f32 %v5199, 0.0
        %v5264 = vmax.f32 %v5200, 0.0
        %v5265 = vmax.f32 %v5201, 0.0
        %v5266 = vmax.f32 %v5202, 0.0
        %v5267 = vmax.f32 %v5203, 0.0
        %v5268 = vmax.f32 %v5204, 0.0
        %v5269 = vmax.f32 %v5205, 0.0
        %v5270 = vmax.f32 %v5206, 0.0
        %v5271 = vmax.f32 %v5207, 0.0
        %v5272 = vmax.f32 %v5208, 0.0
        %v5273 = vmax.f32 %v5209, 0.0
        %v5274 = vmax.f32 %v5210, 0.0
        %v5275 = vmax.f32 %v5211, 0.0
        %v5276 = vmax.f32 %v5212, 0.0
        %v5277 = vmax.f32 %v5213, 0.0
        %v5278 = vmax.f32 %v5214, 0.0
        %v5279 = vmax.f32 %v5215, 0.0
        %v5280 = vmax.f32 %v5216, 0.0
        %v5281 = vmax.f32 %v5217, 0.0
        %v5282 = vmax.f32 %v5218, 0.0
        %v5283 = vmax.f32 %v5219, 0.0
        %v5284 = vmax.f32 %v5220, 0.0
        %v5285 = vmax.f32 %v5221, 0.0
        %v5286 = vmax.f32 %v5222, 0.0
        %v5287 = vmax.f32 %v5223, 0.0
        %v5288 = vmax.f32 %v5224, 0.0
        %v5289 = vmax.f32 %v5225, 0.0
        %v5290 = vmax.f32 %v5226, 0.0
        %v5291 = vmax.f32 %v5227, 0.0
        %v5292 = vmax.f32 %v5228, 0.0
        %v5293 = vmax.f32 %v5229, 0.0
        %v5294 = vmax.f32 %v5230, 0.0
        %v5295 = vmax.f32 %v5231, 0.0
        %v5296 = vmax.f32 %v5232, 0.0
        %v5297 = vmax.f32 %v5233, 0.0
        %v5298 = vmax.f32 %v5234, 0.0
        %v5299 = vmax.f32 %v5235, 0.0
        %v5300 = vmax.f32 %v5236, 0.0
        %v5301 = vmax.f32 %v5237, 0.0
        %v5302 = vmax.f32 %v5238, 0.0
        %v5303 = vmax.f32 %v5239, 0.0
        %v5304 = vmax.f32 %v5240, 0.0
        %v5305 = vmax.f32 %v5241, 0.0
        %v5306 = vmax.f32 %v5242, 0.0
        %v5307 = vmax.f32 %v5243, 0.0
        %v5308 = vmin.f32 %v5244, 20.0
        %v5309 = vmin.f32 %v5245, 20.0
        %v5310 = vmin.f32 %v5246, 20.0
        %v5311 = vmin.f32 %v5247, 20.0
        %v5312 = vmin.f32 %v5248, 20.0
        %v5313 = vmin.f32 %v5249, 20.0
        %v5314 = vmin.f32 %v5250, 20.0
        %v5315 = vmin.f32 %v5251, 20.0
        %v5316 = vmin.f32 %v5252, 20.0
        %v5317 = vmin.f32 %v5253, 20.0
        %v5318 = vmin.f32 %v5254, 20.0
        %v5319 = vmin.f32 %v5255, 20.0
        %v5320 = vmin.f32 %v5256, 20.0
        %v5321 = vmin.f32 %v5257, 20.0
        %v5322 = vmin.f32 %v5258, 20.0
        %v5323 = vmin.f32 %v5259, 20.0
        %v5324 = vmin.f32 %v5260, 20.0
        %v5325 = vmin.f32 %v5261, 20.0
        %v5326 = vmin.f32 %v5262, 20.0
        %v5327 = vmin.f32 %v5263, 20.0
        %v5328 = vmin.f32 %v5264, 20.0
        %v5329 = vmin.f32 %v5265, 20.0
        %v5330 = vmin.f32 %v5266, 20.0
        %v5331 = vmin.f32 %v5267, 20.0
        %v5332 = vmin.f32 %v5268, 20.0
        %v5333 = vmin.f32 %v5269, 20.0
        %v5334 = vmin.f32 %v5270, 20.0
        %v5335 = vmin.f32 %v5271, 20.0
        %v5336 = vmin.f32 %v5272, 20.0
        %v5337 = vmin.f32 %v5273, 20.0
        %v5338 = vmin.f32 %v5274, 20.0
        %v5339 = vmin.f32 %v5275, 20.0
        %v5340 = vmin.f32 %v5276, 20.0
        %v5341 = vmin.f32 %v5277, 20.0
        %v5342 = vmin.f32 %v5278, 20.0
        %v5343 = vmin.f32 %v5279, 20.0
        %v5344 = vmin.f32 %v5280, 20.0
        %v5345 = vmin.f32 %v5281, 20.0
        %v5346 = vmin.f32 %v5282, 20.0
        %v5347 = vmin.f32 %v5283, 20.0
        %v5348 = vmin.f32 %v5284, 20.0
        %v5349 = vmin.f32 %v5285, 20.0
        %v5350 = vmin.f32 %v5286, 20.0
        %v5351 = vmin.f32 %v5287, 20.0
        %v5352 = vmin.f32 %v5288, 20.0
        %v5353 = vmin.f32 %v5289, 20.0
        %v5354 = vmin.f32 %v5290, 20.0
        %v5355 = vmin.f32 %v5291, 20.0
        %v5356 = vmin.f32 %v5292, 20.0
        %v5357 = vmin.f32 %v5293, 20.0
        %v5358 = vmin.f32 %v5294, 20.0
        %v5359 = vmin.f32 %v5295, 20.0
        %v5360 = vmin.f32 %v5296, 20.0
        %v5361 = vmin.f32 %v5297, 20.0
        %v5362 = vmin.f32 %v5298, 20.0
        %v5363 = vmin.f32 %v5299, 20.0
        %v5364 = vmin.f32 %v5300, 20.0
        %v5365 = vmin.f32 %v5301, 20.0
        %v5366 = vmin.f32 %v5302, 20.0
        %v5367 = vmin.f32 %v5303, 20.0
        %v5368 = vmin.f32 %v5304, 20.0
        %v5369 = vmin.f32 %v5305, 20.0
        %v5370 = vmin.f32 %v5306, 20.0
        %v5371 = vmin.f32 %v5307, 20.0
        %5372 = vst [vmem:[%s373] sm:$0xff] %v5308
        %5373 = vst [vmem:[%s373 + $0x8] sm:$0xff] %v5309
        %5374 = vst [vmem:[%s373 + $0x10] sm:$0xff] %v5310
        %5375 = vst [vmem:[%s373 + $0x18] sm:$0xff] %v5311
        %5376 = vst [vmem:[%s373 + $0x20] sm:$0xff] %v5312
        %5377 = vst [vmem:[%s373 + $0x28] sm:$0xff] %v5313
        %5378 = vst [vmem:[%s373 + $0x30] sm:$0xff] %v5314
        %5379 = vst [vmem:[%s373 + $0x38] sm:$0xff] %v5315
        %5380 = vst [vmem:[%s373 + $0x40] sm:$0xff] %v5316
        %5381 = vst [vmem:[%s373 + $0x48] sm:$0xff] %v5317
        %5382 = vst [vmem:[%s373 + $0x50] sm:$0xff] %v5318
        %5383 = vst [vmem:[%s373 + $0x58] sm:$0xff] %v5319
        %5384 = vst [vmem:[%s373 + $0x60] sm:$0xff] %v5320
        %5385 = vst [vmem:[%s373 + $0x68] sm:$0xff] %v5321
        %5386 = vst [vmem:[%s373 + $0x70] sm:$0xff] %v5322
        %5387 = vst [vmem:[%s373 + $0x78] sm:$0xff] %v5323
        %5388 = vst [vmem:[%s373 + $0x80] sm:$0xff] %v5324
        %5389 = vst [vmem:[%s373 + $0x88] sm:$0xff] %v5325
        %5390 = vst [vmem:[%s373 + $0x90] sm:$0xff] %v5326
        %5391 = vst [vmem:[%s373 + $0x98] sm:$0xff] %v5327
        %5392 = vst [vmem:[%s373 + $0xa0] sm:$0xff] %v5328
        %5393 = vst [vmem:[%s373 + $0xa8] sm:$0xff] %v5329
        %5394 = vst [vmem:[%s373 + $0xb0] sm:$0xff] %v5330
        %5395 = vst [vmem:[%s373 + $0xb8] sm:$0xff] %v5331
        %5396 = vst [vmem:[%s373 + $0xc0] sm:$0xff] %v5332
        %5397 = vst [vmem:[%s373 + $0xc8] sm:$0xff] %v5333
        %5398 = vst [vmem:[%s373 + $0xd0] sm:$0xff] %v5334
        %5399 = vst [vmem:[%s373 + $0xd8] sm:$0xff] %v5335
        %5400 = vst [vmem:[%s373 + $0xe0] sm:$0xff] %v5336
        %5401 = vst [vmem:[%s373 + $0xe8] sm:$0xff] %v5337
        %5402 = vst [vmem:[%s373 + $0xf0] sm:$0xff] %v5338
        %5403 = vst [vmem:[%s373 + $0xf8] sm:$0xff] %v5339
        %5404 = vst [vmem:[%s373 + $0x100] sm:$0xff] %v5340
        %5405 = vst [vmem:[%s373 + $0x108] sm:$0xff] %v5341
        %5406 = vst [vmem:[%s373 + $0x110] sm:$0xff] %v5342
        %5407 = vst [vmem:[%s373 + $0x118] sm:$0xff] %v5343
        %5408 = vst [vmem:[%s373 + $0x120] sm:$0xff] %v5344
        %5409 = vst [vmem:[%s373 + $0x128] sm:$0xff] %v5345
        %5410 = vst [vmem:[%s373 + $0x130] sm:$0xff] %v5346
        %5411 = vst [vmem:[%s373 + $0x138] sm:$0xff] %v5347
        %5412 = vst [vmem:[%s373 + $0x140] sm:$0xff] %v5348
        %5413 = vst [vmem:[%s373 + $0x148] sm:$0xff] %v5349
        %5414 = vst [vmem:[%s373 + $0x150] sm:$0xff] %v5350
        %5415 = vst [vmem:[%s373 + $0x158] sm:$0xff] %v5351
        %5416 = vst [vmem:[%s373 + $0x160] sm:$0xff] %v5352
        %5417 = vst [vmem:[%s373 + $0x168] sm:$0xff] %v5353
        %5418 = vst [vmem:[%s373 + $0x170] sm:$0xff] %v5354
        %5419 = vst [vmem:[%s373 + $0x178] sm:$0xff] %v5355
        %5420 = vst [vmem:[%s373 + $0x180] sm:$0xff] %v5356
        %5421 = vst [vmem:[%s373 + $0x188] sm:$0xff] %v5357
        %5422 = vst [vmem:[%s373 + $0x190] sm:$0xff] %v5358
        %5423 = vst [vmem:[%s373 + $0x198] sm:$0xff] %v5359
        %5424 = vst [vmem:[%s373 + $0x1a0] sm:$0xff] %v5360
        %5425 = vst [vmem:[%s373 + $0x1a8] sm:$0xff] %v5361
        %5426 = vst [vmem:[%s373 + $0x1b0] sm:$0xff] %v5362
        %5427 = vst [vmem:[%s373 + $0x1b8] sm:$0xff] %v5363
        %5428 = vst [vmem:[%s373 + $0x1c0] sm:$0xff] %v5364
        %5429 = vst [vmem:[%s373 + $0x1c8] sm:$0xff] %v5365
        %5430 = vst [vmem:[%s373 + $0x1d0] sm:$0xff] %v5366
        %5431 = vst [vmem:[%s373 + $0x1d8] sm:$0xff] %v5367
        %5432 = vst [vmem:[%s373 + $0x1e0] sm:$0xff] %v5368
        %5433 = vst [vmem:[%s373 + $0x1e8] sm:$0xff] %v5369
        %5434 = vst [vmem:[%s373 + $0x1f0] sm:$0xff] %v5370
        %5435 = vst [vmem:[%s373 + $0x1f8] sm:$0xff] %v5371
        %s5436 = sand.u32 %s202, 1
        %s5437 = scalar_lea.sflag [#allocation4], %s5436
        %s5438 = sand.u32 %s202, 1
        %s5439 = smul.addr %s5438, 512
        %s5440 = scalar_lea.vmem [#allocation3], %s5439
        // Predicated region
        $region41: #{tpu_custom_call.1} parent=39 // pred_check
          %p5441 = pneg %p212
        $region42: #{tpu_custom_call.1} parent=39 // pred_check_branch
          %5443 = sbr.rel (%p5441) target = $region44
        $region43: #{tpu_custom_call.1} parent=39 // pred_region
          %s5444 = smul.u32 32, %s26
          %s5445 = smul.u32 2, %s25
          %5447 = vsyncadd %s5437, 0
          %s5448 = smul.addr %s5444, 2
          %s5449 = sadd.s32 %s5445, %s5448
          %s5450 = smul.addr %s24, 128
          %s5451 = sadd.s32 %s5449, %s5450
          %s5452 = smul.addr %s5451, 8
          %s5453 = scalar_lea.hbm %s5, %s5452
          %s5454 = sshll.u32 %s5440, 4
          %s5455 = int_to_ptr.vmem [resolvable:$true] %s5454
          %s5456 = sshll.u32 %s5453, 4
          %s5457 = int_to_ptr.hbm [resolvable:$true] %s5456
          %5462 = dma.vmem_to_hbm [thread:$0]  %s5455, 8192, %s5457, %s5437, 256, 256, 16
        $region44: #{tpu_custom_call.1} parent=39 // pred_fallthru
          _
      $region40: #{tpu_custom_call.1} parent=5 // pred_fallthru
        _
      %p5463 = scmp.le.s32.totalorder 2, %s14
      // Predicated region
      $region45: #{tpu_custom_call.1} parent=5 // pred_check
        %p5464 = pneg %p5463
      $region46: #{tpu_custom_call.1} parent=5 // pred_check_branch
        %5466 = sbr.rel (%p5464) target = $region48
      $region47: #{tpu_custom_call.1} parent=5 // pred_region
        %s5467 = ssub.s32 %s14, 2
        // Predicated region
        $region49: #{tpu_custom_call.1} parent=47 // pred_check
          %p5468 = pneg %p218
        $region50: #{tpu_custom_call.1} parent=47 // pred_check_branch
          %5470 = sbr.rel (%p5468) target = $region52
        $region51: #{tpu_custom_call.1} parent=47 // pred_region
          %s5471 = sand.u32 %s203, 1
          %s5472 = scalar_lea.sflag [#allocation4], %s5471
          %s5473 = sand.u32 %s203, 1
          %s5474 = smul.addr %s5473, 512
          %s5475 = scalar_lea.vmem [#allocation3], %s5474
          %5477 = dma.done %s5472, 8192
        $region52: #{tpu_custom_call.1} parent=47 // pred_fallthru
          _
      $region48: #{tpu_custom_call.1} parent=5 // pred_fallthru
        _
    $region6: #{tpu_custom_call.1} parent=1 // loop_footer
      %s18 = sadd.s32 1, %s14
    $region7: #{tpu_custom_call.1} parent=1 // loop_footer_branch
      %13 = sbr.rel target = $region3
    $region8: #{tpu_custom_call.1} parent=1 // loop_exit
      _
    %5478 = vsyncpa [#allocation4], 1
    %s5479 = scalar_lea.sflag [#allocation4], 1
    %5480 = vsyncpa %s5479, 1

</llo_original>
